<compile_context>
chip_gen: v7x
topology: tpu7x:2x2x1
jax: 0.10.0
libtpu: 0.0.40
codegen_flags: <defaults>
</compile_context>

<pallas_src>
import math
import functools

import jax
import jax.numpy as jnp
from jax.experimental import pallas as pl
from jax.experimental.pallas import tpu as pltpu  # noqa: F401  (TPU backend assumed)

# ----------------------------- model config ---------------------------------
B = 2          # batch
N = 8          # number of tokens (variates in iTransformer)
D = 32         # d_model
H = 4          # num heads
DH = D // H    # head dim
F = 64         # d_ff
NUM_LAYERS = 2
EPS = 1e-5     # nn.LayerNorm default

# Packed-slab geometry (per layer). All row offsets are multiples of 8 (sublane aligned),
# all column slices start at lane 0.
W_COLS = 3 * D                     # lane width of both slabs (= width of fused Wqkv)
W_ROWS = 3 * D + F                 # Wqkv rows [0,D) | Wo rows [D,2D) | W1 rows [2D,3D) | W2 rows [3D,3D+F)
B_ROWS_PER_LAYER = 8               # bqkv, bo, ln1g, ln1b, b1, b2, ln2g, ln2b


# ------------------------------ Pallas kernel --------------------------------
def fused_encoder_kernel(x_ref, w_ref, b_ref, o_ref, *,
                         num_layers, num_heads, head_dim, batch, tokens, d_ff):
    """Whole Encoder (all layers + final LayerNorm) in one kernel invocation.

    x_ref : [B*N, D]                      flattened activations (flatten done in wrapper)
    w_ref : [L, 3D+F, 3D]                 packed matmul weights (Wqkv already carries 1/sqrt(DH))
    b_ref : [L*8 + 2, 3D]                 packed biases / LayerNorm params + final-norm rows
    attn_mask / tau / delta are None in the iTransformer configuration and are not modeled.
    """
    d = num_heads * head_dim
    m = batch * tokens

    def layernorm(z, g, b):
        mu = jnp.mean(z, axis=-1, keepdims=True)
        var = jnp.mean((z - mu) ** 2, axis=-1, keepdims=True)
        return (z - mu) * jax.lax.rsqrt(var + EPS) * g + b

    x = x_ref[...].astype(jnp.float32)            # [M, D]
    biases = b_ref[...].astype(jnp.float32)       # [L*8 + 2, 3D]  (~7 KB, load once)

    for l in range(num_layers):                   # static unroll; weights stay in VMEM
        base = l * B_ROWS_PER_LAYER
        bqkv = biases[base + 0:base + 1, 0:3 * d]     # [1, 3D]
        bo   = biases[base + 1:base + 2, 0:d]
        ln1g = biases[base + 2:base + 3, 0:d]
        ln1b = biases[base + 3:base + 4, 0:d]
        b1   = biases[base + 4:base + 5, 0:d_ff]
        b2   = biases[base + 5:base + 6, 0:d]
        ln2g = biases[base + 6:base + 7, 0:d]
        ln2b = biases[base + 7:base + 8, 0:d]

        # static, sublane/lane-aligned windows into the packed weight slab
        wqkv = w_ref[l, 0:d, :]                       # [D, 3D]  (scale folded into Q columns)
        wo   = w_ref[l, d:2 * d, 0:d]                 # [D, D]
        w1   = w_ref[l, 2 * d:3 * d, 0:d_ff]          # [D, F]
        w2   = w_ref[l, 3 * d:3 * d + d_ff, 0:d]      # [F, D]

        # --- multi-head self attention: fused QKV projection -----------------
        qkv = jnp.dot(x, wqkv, preferred_element_type=jnp.float32) + bqkv     # [M, 3D]
        q = qkv[:, 0:d]
        k = qkv[:, d:2 * d]
        v = qkv[:, 2 * d:3 * d]

        # [M, D] -> [H*B, N, DH]: head-major batch axis so all heads and batches go
        # through two batched einsums (one MXU accumulation chain each).
        def split_heads(t):
            parts = [t[:, h * head_dim:(h + 1) * head_dim].reshape(batch, tokens, head_dim)
                     for h in range(num_heads)]
            return jnp.concatenate(parts, axis=0)     # [H*B, N, DH]

        qh = split_heads(q)
        kh = split_heads(k)
        vh = split_heads(v)

        s = jnp.einsum('bqd,bkd->bqk', qh, kh,
                       preferred_element_type=jnp.float32)                    # [H*B, N, N]
        s = s - jnp.max(s, axis=-1, keepdims=True)
        p = jnp.exp(s)
        p = p / jnp.sum(p, axis=-1, keepdims=True)    # exact softmax (PyTorch parity)
        ctx = jnp.einsum('bqk,bkd->bqd', p, vh,
                         preferred_element_type=jnp.float32)                  # [H*B, N, DH]

        # merge heads back to [M, D] with one lane-concat, then ONE output projection
        ctx = jnp.concatenate(
            [ctx[h * batch:(h + 1) * batch].reshape(m, head_dim)
             for h in range(num_heads)], axis=-1)                             # [M, D]
        attn_out = jnp.dot(ctx, wo, preferred_element_type=jnp.float32) + bo

        # residual + LayerNorm1
        x = layernorm(x + attn_out, ln1g, ln1b)

        # --- FFN: conv1d(k=1) == pointwise linear, ReLU ----------------------
        y = jnp.dot(x, w1, preferred_element_type=jnp.float32) + b1
        y = jnp.maximum(y, 0.0)
        y = jnp.dot(y, w2, preferred_element_type=jnp.float32) + b2

        # residual + LayerNorm2
        x = layernorm(x + y, ln2g, ln2b)

    # Final encoder LayerNorm (rows L*8, L*8+1 of the bias slab).
    fbase = num_layers * B_ROWS_PER_LAYER
    fng = biases[fbase:fbase + 1, 0:d]
    fnb = biases[fbase + 1:fbase + 2, 0:d]
    o_ref[...] = layernorm(x, fng, fnb).astype(o_ref.dtype)


# ------------------------------ packing / wrapper -----------------------------
def _pad_cols(a, width):
    return jnp.pad(a, ((0, 0), (0, width - a.shape[1])))


def pack_params(layer_params, norm_gamma, norm_beta):
    """Coalesce all per-layer weights into two slabs (static row offsets, lane-0 aligned)."""
    scale = 1.0 / math.sqrt(DH)            # FullAttention default scale, folded into Wq/bq
    w_layers, b_rows = [], []
    for p in layer_params:
        wqkv = jnp.concatenate([p["wq"] * scale, p["wk"], p["wv"]], axis=1)   # [D, 3D]
        w_layers.append(jnp.concatenate([
            wqkv,
            _pad_cols(p["wo"], W_COLS),
            _pad_cols(p["w1"], W_COLS),
            _pad_cols(p["w2"], W_COLS),
        ], axis=0))                                                           # [3D+F, 3D]
        b_rows += [
            jnp.concatenate([p["bq"] * scale, p["bk"], p["bv"]], axis=1),     # [1, 3D]
            _pad_cols(p["bo"], W_COLS),
            _pad_cols(p["ln1g"], W_COLS),
            _pad_cols(p["ln1b"], W_COLS),
            _pad_cols(p["b1"], W_COLS),
            _pad_cols(p["b2"], W_COLS),
            _pad_cols(p["ln2g"], W_COLS),
            _pad_cols(p["ln2b"], W_COLS),
        ]
    b_rows += [_pad_cols(norm_gamma, W_COLS), _pad_cols(norm_beta, W_COLS)]   # final norm
    w_slab = jnp.stack(w_layers, axis=0)          # [L, 3D+F, 3D]
    b_slab = jnp.concatenate(b_rows, axis=0)      # [L*8 + 2, 3D]
    return w_slab, b_slab


def encoder_forward(x, layer_params, norm_gamma, norm_beta):
    """Mirrors Encoder.forward with conv_layers=None, norm=LayerNorm.

    One pallas_call, no grid: the whole activation and both packed parameter slabs are
    resident in VMEM (~0.13 MiB, fits every generation incl. v7x's 64 MiB scoped limit).
    """
    Bsz, Ntok, Dm = x.shape
    num_layers = len(layer_params)
    w_slab, b_slab = pack_params(layer_params, norm_gamma, norm_beta)

    kernel = functools.partial(
        fused_encoder_kernel,
        num_layers=num_layers, num_heads=H, head_dim=Dm // H,
        batch=Bsz, tokens=Ntok, d_ff=F)

    # Flatten [B, N, D] -> [B*N, D] in XLA (free layout work) so the kernel never
    # merges the batch axis into sublanes itself.
    x_flat = x.reshape(Bsz * Ntok, Dm)

    out_flat = pl.pallas_call(
        kernel,
        out_shape=jax.ShapeDtypeStruct((Bsz * Ntok, Dm), x.dtype),
        # No grid / BlockSpecs: 3 coalesced input DMAs, single step, single TensorCore.
    )(x_flat, w_slab, b_slab)

    attns = [None] * num_layers     # FullAttention(output_attention=False) returns None
    return out_flat.reshape(Bsz, Ntok, Dm), attns


# ------------------------- reference (plain JAX) -----------------------------
def _layernorm_ref(x, g, b):
    mu = jnp.mean(x, axis=-1, keepdims=True)
    var = jnp.mean((x - mu) ** 2, axis=-1, keepdims=True)
    return (x - mu) * jax.lax.rsqrt(var + EPS) * g + b


def encoder_ref(x, layer_params, norm_gamma, norm_beta):
    for p in layer_params:
        q = x @ p["wq"] + p["bq"]
        k = x @ p["wk"] + p["bk"]
        v = x @ p["wv"] + p["bv"]
        qh = q.reshape(B, N, H, DH)
        kh = k.reshape(B, N, H, DH)
        vh = v.reshape(B, N, H, DH)
        s = jnp.einsum("blhe,bshe->bhls", qh, kh) / math.sqrt(DH)
        a = jax.nn.softmax(s, axis=-1)
        o = jnp.einsum("bhls,bshd->blhd", a, vh).reshape(B, N, D)
        o = o @ p["wo"] + p["bo"]
        x = _layernorm_ref(x + o, p["ln1g"], p["ln1b"])
        y = jnp.maximum(x @ p["w1"] + p["b1"], 0.0) @ p["w2"] + p["b2"]
        x = _layernorm_ref(x + y, p["ln2g"], p["ln2b"])
    return _layernorm_ref(x, norm_gamma, norm_beta)


# --------------------------------- main ---------------------------------------
def make_params(key):
    layer_params = []
    for _ in range(NUM_LAYERS):
        keys = jax.random.split(key, 9)
        key = keys[-1]
        p = {
            "wq": jax.random.normal(keys[0], (D, D), jnp.float32) * 0.05,
            "wk": jax.random.normal(keys[1], (D, D), jnp.float32) * 0.05,
            "wv": jax.random.normal(keys[2], (D, D), jnp.float32) * 0.05,
            "wo": jax.random.normal(keys[3], (D, D), jnp.float32) * 0.05,
            "bq": jax.random.normal(keys[4], (1, D), jnp.float32) * 0.01,
            "bk": jax.random.normal(keys[5], (1, D), jnp.float32) * 0.01,
            "bv": jax.random.normal(keys[6], (1, D), jnp.float32) * 0.01,
            "bo": jnp.zeros((1, D), jnp.float32),
            "ln1g": jnp.ones((1, D), jnp.float32),
            "ln1b": jnp.zeros((1, D), jnp.float32),
            "w1": jax.random.normal(keys[7], (D, F), jnp.float32) * 0.05,
            "b1": jnp.zeros((1, F), jnp.float32),
            "w2": jax.random.normal(keys[8], (F, D), jnp.float32) * 0.05,
            "b2": jnp.zeros((1, D), jnp.float32),
            "ln2g": jnp.ones((1, D), jnp.float32),
            "ln2b": jnp.zeros((1, D), jnp.float32),
        }
        layer_params.append(p)
    return layer_params, key


if __name__ == "__main__":
    key = jax.random.PRNGKey(0)
    key, xkey = jax.random.split(key)
    x = jax.random.normal(xkey, (B, N, D), jnp.float32)

    layer_params, key = make_params(key)
    norm_gamma = jnp.ones((1, D), jnp.float32)
    norm_beta = jnp.zeros((1, D), jnp.float32)

    out, attns = encoder_forward(x, layer_params, norm_gamma, norm_beta)
    out = jax.block_until_ready(out)

    # f32 reference (highest matmul precision so the comparison is not polluted by
    # XLA's default bf16 matmul passes on TPU).
    with jax.default_matmul_precision("highest"):
        ref = jax.block_until_ready(encoder_ref(x, layer_params, norm_gamma, norm_beta))

    assert out.shape == (B, N, D)
    assert jnp.allclose(out, ref, atol=5e-3, rtol=5e-3), "mismatch vs reference"
    assert all(a is None for a in attns)

    print("KERNEL_OK")
</pallas_src>

<mosaic_0001>
module attributes {stable_mosaic.version = 11 : i64} {
  func.func @fused_encoder_kernel(%arg0: memref<16x32xf32, #tpu.memory_space<vmem>>, %arg1: memref<2x160x96xf32, #tpu.memory_space<vmem>>, %arg2: memref<18x96xf32, #tpu.memory_space<vmem>>, %arg3: memref<16x32xf32, #tpu.memory_space<vmem>>) attributes {dimension_semantics = [], scalar_prefetch = 0 : i64, scratch_operands = 0 : i64, tpu.core_type = #tpu.core_type<tc>} {
    %c0 = arith.constant 0 : index
    %c0_0 = arith.constant 0 : index
    %0 = vector.load %arg0[%c0, %c0_0] : memref<16x32xf32, #tpu.memory_space<vmem>>, vector<16x32xf32>
    %c0_1 = arith.constant 0 : index
    %c0_2 = arith.constant 0 : index
    %1 = vector.load %arg2[%c0_1, %c0_2] : memref<18x96xf32, #tpu.memory_space<vmem>>, vector<18x96xf32>
    %2 = vector.extract_strided_slice %1 {offsets = [0, 0], sizes = [1, 96], strides = [1, 1]} : vector<18x96xf32> to vector<1x96xf32>
    %3 = vector.extract_strided_slice %1 {offsets = [1, 0], sizes = [1, 32], strides = [1, 1]} : vector<18x96xf32> to vector<1x32xf32>
    %4 = vector.extract_strided_slice %1 {offsets = [2, 0], sizes = [1, 32], strides = [1, 1]} : vector<18x96xf32> to vector<1x32xf32>
    %5 = vector.extract_strided_slice %1 {offsets = [3, 0], sizes = [1, 32], strides = [1, 1]} : vector<18x96xf32> to vector<1x32xf32>
    %6 = vector.extract_strided_slice %1 {offsets = [4, 0], sizes = [1, 64], strides = [1, 1]} : vector<18x96xf32> to vector<1x64xf32>
    %7 = vector.extract_strided_slice %1 {offsets = [5, 0], sizes = [1, 32], strides = [1, 1]} : vector<18x96xf32> to vector<1x32xf32>
    %8 = vector.extract_strided_slice %1 {offsets = [6, 0], sizes = [1, 32], strides = [1, 1]} : vector<18x96xf32> to vector<1x32xf32>
    %9 = vector.extract_strided_slice %1 {offsets = [7, 0], sizes = [1, 32], strides = [1, 1]} : vector<18x96xf32> to vector<1x32xf32>
    %c0_3 = arith.constant 0 : index
    %c0_4 = arith.constant 0 : index
    %c0_5 = arith.constant 0 : index
    %10 = vector.load %arg1[%c0_3, %c0_4, %c0_5] : memref<2x160x96xf32, #tpu.memory_space<vmem>>, vector<1x32x96xf32>
    %11 = vector.shape_cast %10 : vector<1x32x96xf32> to vector<32x96xf32>
    %c0_6 = arith.constant 0 : index
    %c32 = arith.constant 32 : index
    %c0_7 = arith.constant 0 : index
    %12 = vector.load %arg1[%c0_6, %c32, %c0_7] : memref<2x160x96xf32, #tpu.memory_space<vmem>>, vector<1x32x32xf32>
    %13 = vector.shape_cast %12 : vector<1x32x32xf32> to vector<32x32xf32>
    %c0_8 = arith.constant 0 : index
    %c64 = arith.constant 64 : index
    %c0_9 = arith.constant 0 : index
    %14 = vector.load %arg1[%c0_8, %c64, %c0_9] : memref<2x160x96xf32, #tpu.memory_space<vmem>>, vector<1x32x64xf32>
    %15 = vector.shape_cast %14 : vector<1x32x64xf32> to vector<32x64xf32>
    %c0_10 = arith.constant 0 : index
    %c96 = arith.constant 96 : index
    %c0_11 = arith.constant 0 : index
    %16 = vector.load %arg1[%c0_10, %c96, %c0_11] : memref<2x160x96xf32, #tpu.memory_space<vmem>>, vector<1x64x32xf32>
    %17 = vector.shape_cast %16 : vector<1x64x32xf32> to vector<64x32xf32>
    %cst = arith.constant dense<0.000000e+00> : vector<16x96xf32>
    %18 = tpu.matmul %0, %11, %cst {dimension_numbers = #tpu.dot_dimension_numbers<[1], [0], [0], [1], [0, 0, 1, 1], [], []>} : vector<16x32xf32>, vector<32x96xf32>, vector<16x96xf32> -> vector<16x96xf32>
    %19 = vector.broadcast %2 : vector<1x96xf32> to vector<16x96xf32>
    %20 = arith.addf %18, %19 : vector<16x96xf32>
    %21 = vector.extract_strided_slice %20 {offsets = [0, 0], sizes = [16, 32], strides = [1, 1]} : vector<16x96xf32> to vector<16x32xf32>
    %22 = vector.extract_strided_slice %20 {offsets = [0, 32], sizes = [16, 32], strides = [1, 1]} : vector<16x96xf32> to vector<16x32xf32>
    %23 = vector.extract_strided_slice %20 {offsets = [0, 64], sizes = [16, 32], strides = [1, 1]} : vector<16x96xf32> to vector<16x32xf32>
    %24 = vector.extract_strided_slice %21 {offsets = [0, 0], sizes = [16, 8], strides = [1, 1]} : vector<16x32xf32> to vector<16x8xf32>
    %25 = vector.shape_cast %24 : vector<16x8xf32> to vector<2x8x8xf32>
    %26 = vector.extract_strided_slice %21 {offsets = [0, 8], sizes = [16, 8], strides = [1, 1]} : vector<16x32xf32> to vector<16x8xf32>
    %27 = vector.shape_cast %26 : vector<16x8xf32> to vector<2x8x8xf32>
    %28 = vector.extract_strided_slice %21 {offsets = [0, 16], sizes = [16, 8], strides = [1, 1]} : vector<16x32xf32> to vector<16x8xf32>
    %29 = vector.shape_cast %28 : vector<16x8xf32> to vector<2x8x8xf32>
    %30 = vector.extract_strided_slice %21 {offsets = [0, 24], sizes = [16, 8], strides = [1, 1]} : vector<16x32xf32> to vector<16x8xf32>
    %31 = vector.shape_cast %30 : vector<16x8xf32> to vector<2x8x8xf32>
    %32 = tpu.concatenate %25, %27, %29, %31 in 0 : vector<2x8x8xf32>, vector<2x8x8xf32>, vector<2x8x8xf32>, vector<2x8x8xf32> -> vector<8x8x8xf32>
    %33 = vector.extract_strided_slice %22 {offsets = [0, 0], sizes = [16, 8], strides = [1, 1]} : vector<16x32xf32> to vector<16x8xf32>
    %34 = vector.shape_cast %33 : vector<16x8xf32> to vector<2x8x8xf32>
    %35 = vector.extract_strided_slice %22 {offsets = [0, 8], sizes = [16, 8], strides = [1, 1]} : vector<16x32xf32> to vector<16x8xf32>
    %36 = vector.shape_cast %35 : vector<16x8xf32> to vector<2x8x8xf32>
    %37 = vector.extract_strided_slice %22 {offsets = [0, 16], sizes = [16, 8], strides = [1, 1]} : vector<16x32xf32> to vector<16x8xf32>
    %38 = vector.shape_cast %37 : vector<16x8xf32> to vector<2x8x8xf32>
    %39 = vector.extract_strided_slice %22 {offsets = [0, 24], sizes = [16, 8], strides = [1, 1]} : vector<16x32xf32> to vector<16x8xf32>
    %40 = vector.shape_cast %39 : vector<16x8xf32> to vector<2x8x8xf32>
    %41 = tpu.concatenate %34, %36, %38, %40 in 0 : vector<2x8x8xf32>, vector<2x8x8xf32>, vector<2x8x8xf32>, vector<2x8x8xf32> -> vector<8x8x8xf32>
    %42 = vector.extract_strided_slice %23 {offsets = [0, 0], sizes = [16, 8], strides = [1, 1]} : vector<16x32xf32> to vector<16x8xf32>
    %43 = vector.shape_cast %42 : vector<16x8xf32> to vector<2x8x8xf32>
    %44 = vector.extract_strided_slice %23 {offsets = [0, 8], sizes = [16, 8], strides = [1, 1]} : vector<16x32xf32> to vector<16x8xf32>
    %45 = vector.shape_cast %44 : vector<16x8xf32> to vector<2x8x8xf32>
    %46 = vector.extract_strided_slice %23 {offsets = [0, 16], sizes = [16, 8], strides = [1, 1]} : vector<16x32xf32> to vector<16x8xf32>
    %47 = vector.shape_cast %46 : vector<16x8xf32> to vector<2x8x8xf32>
    %48 = vector.extract_strided_slice %23 {offsets = [0, 24], sizes = [16, 8], strides = [1, 1]} : vector<16x32xf32> to vector<16x8xf32>
    %49 = vector.shape_cast %48 : vector<16x8xf32> to vector<2x8x8xf32>
    %50 = tpu.concatenate %43, %45, %47, %49 in 0 : vector<2x8x8xf32>, vector<2x8x8xf32>, vector<2x8x8xf32>, vector<2x8x8xf32> -> vector<8x8x8xf32>
    "tpu.trace_start"() <{level = 10 : i32, message = "bqd,bkd->bqk"}> : () -> ()
    %cst_12 = arith.constant dense<0.000000e+00> : vector<8x8x8xf32>
    %51 = tpu.matmul %32, %41, %cst_12 {dimension_numbers = #tpu.dot_dimension_numbers<[2], [2], [1], [1], [0, 0, 0, 1, 1, 1], [0], [0]>} : vector<8x8x8xf32>, vector<8x8x8xf32>, vector<8x8x8xf32> -> vector<8x8x8xf32>
    "tpu.trace_stop"() : () -> ()
    %cst_13 = arith.constant dense<0xFF800000> : vector<8x8xf32>
    %52 = vector.multi_reduction <maximumf>, %51, %cst_13 [2] : vector<8x8x8xf32> to vector<8x8xf32>
    %53 = vector.shape_cast %52 : vector<8x8xf32> to vector<8x8x1xf32>
    %54 = vector.broadcast %53 : vector<8x8x1xf32> to vector<8x8x8xf32>
    %55 = arith.subf %51, %54 : vector<8x8x8xf32>
    %56 = math.exp %55 : vector<8x8x8xf32>
    %cst_14 = arith.constant dense<0.000000e+00> : vector<8x8xf32>
    %57 = vector.multi_reduction <add>, %56, %cst_14 [2] : vector<8x8x8xf32> to vector<8x8xf32>
    %58 = vector.shape_cast %57 : vector<8x8xf32> to vector<8x8x1xf32>
    %59 = vector.broadcast %58 : vector<8x8x1xf32> to vector<8x8x8xf32>
    %60 = arith.divf %56, %59 : vector<8x8x8xf32>
    "tpu.trace_start"() <{level = 10 : i32, message = "bqk,bkd->bqd"}> : () -> ()
    %cst_15 = arith.constant dense<0.000000e+00> : vector<8x8x8xf32>
    %61 = tpu.matmul %60, %50, %cst_15 {dimension_numbers = #tpu.dot_dimension_numbers<[2], [1], [1], [2], [0, 0, 0, 1, 1, 2], [0], [0]>} : vector<8x8x8xf32>, vector<8x8x8xf32>, vector<8x8x8xf32> -> vector<8x8x8xf32>
    "tpu.trace_stop"() : () -> ()
    %62 = vector.extract_strided_slice %61 {offsets = [0, 0, 0], sizes = [2, 8, 8], strides = [1, 1, 1]} : vector<8x8x8xf32> to vector<2x8x8xf32>
    %63 = vector.shape_cast %62 : vector<2x8x8xf32> to vector<16x8xf32>
    %64 = vector.extract_strided_slice %61 {offsets = [2, 0, 0], sizes = [2, 8, 8], strides = [1, 1, 1]} : vector<8x8x8xf32> to vector<2x8x8xf32>
    %65 = vector.shape_cast %64 : vector<2x8x8xf32> to vector<16x8xf32>
    %66 = vector.extract_strided_slice %61 {offsets = [4, 0, 0], sizes = [2, 8, 8], strides = [1, 1, 1]} : vector<8x8x8xf32> to vector<2x8x8xf32>
    %67 = vector.shape_cast %66 : vector<2x8x8xf32> to vector<16x8xf32>
    %68 = vector.extract_strided_slice %61 {offsets = [6, 0, 0], sizes = [2, 8, 8], strides = [1, 1, 1]} : vector<8x8x8xf32> to vector<2x8x8xf32>
    %69 = vector.shape_cast %68 : vector<2x8x8xf32> to vector<16x8xf32>
    %70 = tpu.concatenate %63, %65, %67, %69 in 1 : vector<16x8xf32>, vector<16x8xf32>, vector<16x8xf32>, vector<16x8xf32> -> vector<16x32xf32>
    %cst_16 = arith.constant dense<0.000000e+00> : vector<16x32xf32>
    %71 = tpu.matmul %70, %13, %cst_16 {dimension_numbers = #tpu.dot_dimension_numbers<[1], [0], [0], [1], [0, 0, 1, 1], [], []>} : vector<16x32xf32>, vector<32x32xf32>, vector<16x32xf32> -> vector<16x32xf32>
    %72 = vector.broadcast %3 : vector<1x32xf32> to vector<16x32xf32>
    %73 = arith.addf %71, %72 : vector<16x32xf32>
    %74 = arith.addf %0, %73 : vector<16x32xf32>
    %cst_17 = arith.constant dense<0.000000e+00> : vector<16xf32>
    %75 = vector.multi_reduction <add>, %74, %cst_17 [1] : vector<16x32xf32> to vector<16xf32>
    %76 = vector.shape_cast %75 : vector<16xf32> to vector<16x1xf32>
    %cst_18 = arith.constant 3.200000e+01 : f32
    %77 = vector.broadcast %cst_18 : f32 to vector<16x1xf32>
    %78 = arith.divf %76, %77 : vector<16x1xf32>
    %79 = vector.broadcast %78 : vector<16x1xf32> to vector<16x32xf32>
    %80 = arith.subf %74, %79 : vector<16x32xf32>
    %81 = arith.mulf %80, %80 : vector<16x32xf32>
    %cst_19 = arith.constant dense<0.000000e+00> : vector<16xf32>
    %82 = vector.multi_reduction <add>, %81, %cst_19 [1] : vector<16x32xf32> to vector<16xf32>
    %83 = vector.shape_cast %82 : vector<16xf32> to vector<16x1xf32>
    %cst_20 = arith.constant 3.200000e+01 : f32
    %84 = vector.broadcast %cst_20 : f32 to vector<16x1xf32>
    %85 = arith.divf %83, %84 : vector<16x1xf32>
    %86 = vector.broadcast %78 : vector<16x1xf32> to vector<16x32xf32>
    %87 = arith.subf %74, %86 : vector<16x32xf32>
    %cst_21 = arith.constant 9.99999974E-6 : f32
    %88 = vector.broadcast %cst_21 : f32 to vector<16x1xf32>
    %89 = arith.addf %85, %88 : vector<16x1xf32>
    %90 = math.rsqrt %89 : vector<16x1xf32>
    %91 = vector.broadcast %90 : vector<16x1xf32> to vector<16x32xf32>
    %92 = arith.mulf %87, %91 : vector<16x32xf32>
    %93 = vector.broadcast %4 : vector<1x32xf32> to vector<16x32xf32>
    %94 = arith.mulf %92, %93 : vector<16x32xf32>
    %95 = vector.broadcast %5 : vector<1x32xf32> to vector<16x32xf32>
    %96 = arith.addf %94, %95 : vector<16x32xf32>
    %cst_22 = arith.constant dense<0.000000e+00> : vector<16x64xf32>
    %97 = tpu.matmul %96, %15, %cst_22 {dimension_numbers = #tpu.dot_dimension_numbers<[1], [0], [0], [1], [0, 0, 1, 1], [], []>} : vector<16x32xf32>, vector<32x64xf32>, vector<16x64xf32> -> vector<16x64xf32>
    %98 = vector.broadcast %6 : vector<1x64xf32> to vector<16x64xf32>
    %99 = arith.addf %97, %98 : vector<16x64xf32>
    %cst_23 = arith.constant 0.000000e+00 : f32
    %100 = vector.broadcast %cst_23 : f32 to vector<16x64xf32>
    %101 = arith.maximumf %99, %100 : vector<16x64xf32>
    %cst_24 = arith.constant dense<0.000000e+00> : vector<16x32xf32>
    %102 = tpu.matmul %101, %17, %cst_24 {dimension_numbers = #tpu.dot_dimension_numbers<[1], [0], [0], [1], [0, 0, 1, 1], [], []>} : vector<16x64xf32>, vector<64x32xf32>, vector<16x32xf32> -> vector<16x32xf32>
    %103 = vector.broadcast %7 : vector<1x32xf32> to vector<16x32xf32>
    %104 = arith.addf %102, %103 : vector<16x32xf32>
    %105 = arith.addf %96, %104 : vector<16x32xf32>
    %cst_25 = arith.constant dense<0.000000e+00> : vector<16xf32>
    %106 = vector.multi_reduction <add>, %105, %cst_25 [1] : vector<16x32xf32> to vector<16xf32>
    %107 = vector.shape_cast %106 : vector<16xf32> to vector<16x1xf32>
    %cst_26 = arith.constant 3.200000e+01 : f32
    %108 = vector.broadcast %cst_26 : f32 to vector<16x1xf32>
    %109 = arith.divf %107, %108 : vector<16x1xf32>
    %110 = vector.broadcast %109 : vector<16x1xf32> to vector<16x32xf32>
    %111 = arith.subf %105, %110 : vector<16x32xf32>
    %112 = arith.mulf %111, %111 : vector<16x32xf32>
    %cst_27 = arith.constant dense<0.000000e+00> : vector<16xf32>
    %113 = vector.multi_reduction <add>, %112, %cst_27 [1] : vector<16x32xf32> to vector<16xf32>
    %114 = vector.shape_cast %113 : vector<16xf32> to vector<16x1xf32>
    %cst_28 = arith.constant 3.200000e+01 : f32
    %115 = vector.broadcast %cst_28 : f32 to vector<16x1xf32>
    %116 = arith.divf %114, %115 : vector<16x1xf32>
    %117 = vector.broadcast %109 : vector<16x1xf32> to vector<16x32xf32>
    %118 = arith.subf %105, %117 : vector<16x32xf32>
    %cst_29 = arith.constant 9.99999974E-6 : f32
    %119 = vector.broadcast %cst_29 : f32 to vector<16x1xf32>
    %120 = arith.addf %116, %119 : vector<16x1xf32>
    %121 = math.rsqrt %120 : vector<16x1xf32>
    %122 = vector.broadcast %121 : vector<16x1xf32> to vector<16x32xf32>
    %123 = arith.mulf %118, %122 : vector<16x32xf32>
    %124 = vector.broadcast %8 : vector<1x32xf32> to vector<16x32xf32>
    %125 = arith.mulf %123, %124 : vector<16x32xf32>
    %126 = vector.broadcast %9 : vector<1x32xf32> to vector<16x32xf32>
    %127 = arith.addf %125, %126 : vector<16x32xf32>
    %128 = vector.extract_strided_slice %1 {offsets = [8, 0], sizes = [1, 96], strides = [1, 1]} : vector<18x96xf32> to vector<1x96xf32>
    %129 = vector.extract_strided_slice %1 {offsets = [9, 0], sizes = [1, 32], strides = [1, 1]} : vector<18x96xf32> to vector<1x32xf32>
    %130 = vector.extract_strided_slice %1 {offsets = [10, 0], sizes = [1, 32], strides = [1, 1]} : vector<18x96xf32> to vector<1x32xf32>
    %131 = vector.extract_strided_slice %1 {offsets = [11, 0], sizes = [1, 32], strides = [1, 1]} : vector<18x96xf32> to vector<1x32xf32>
    %132 = vector.extract_strided_slice %1 {offsets = [12, 0], sizes = [1, 64], strides = [1, 1]} : vector<18x96xf32> to vector<1x64xf32>
    %133 = vector.extract_strided_slice %1 {offsets = [13, 0], sizes = [1, 32], strides = [1, 1]} : vector<18x96xf32> to vector<1x32xf32>
    %134 = vector.extract_strided_slice %1 {offsets = [14, 0], sizes = [1, 32], strides = [1, 1]} : vector<18x96xf32> to vector<1x32xf32>
    %135 = vector.extract_strided_slice %1 {offsets = [15, 0], sizes = [1, 32], strides = [1, 1]} : vector<18x96xf32> to vector<1x32xf32>
    %c1 = arith.constant 1 : index
    %c0_30 = arith.constant 0 : index
    %c0_31 = arith.constant 0 : index
    %136 = vector.load %arg1[%c1, %c0_30, %c0_31] : memref<2x160x96xf32, #tpu.memory_space<vmem>>, vector<1x32x96xf32>
    %137 = vector.shape_cast %136 : vector<1x32x96xf32> to vector<32x96xf32>
    %c1_32 = arith.constant 1 : index
    %c32_33 = arith.constant 32 : index
    %c0_34 = arith.constant 0 : index
    %138 = vector.load %arg1[%c1_32, %c32_33, %c0_34] : memref<2x160x96xf32, #tpu.memory_space<vmem>>, vector<1x32x32xf32>
    %139 = vector.shape_cast %138 : vector<1x32x32xf32> to vector<32x32xf32>
    %c1_35 = arith.constant 1 : index
    %c64_36 = arith.constant 64 : index
    %c0_37 = arith.constant 0 : index
    %140 = vector.load %arg1[%c1_35, %c64_36, %c0_37] : memref<2x160x96xf32, #tpu.memory_space<vmem>>, vector<1x32x64xf32>
    %141 = vector.shape_cast %140 : vector<1x32x64xf32> to vector<32x64xf32>
    %c1_38 = arith.constant 1 : index
    %c96_39 = arith.constant 96 : index
    %c0_40 = arith.constant 0 : index
    %142 = vector.load %arg1[%c1_38, %c96_39, %c0_40] : memref<2x160x96xf32, #tpu.memory_space<vmem>>, vector<1x64x32xf32>
    %143 = vector.shape_cast %142 : vector<1x64x32xf32> to vector<64x32xf32>
    %cst_41 = arith.constant dense<0.000000e+00> : vector<16x96xf32>
    %144 = tpu.matmul %127, %137, %cst_41 {dimension_numbers = #tpu.dot_dimension_numbers<[1], [0], [0], [1], [0, 0, 1, 1], [], []>} : vector<16x32xf32>, vector<32x96xf32>, vector<16x96xf32> -> vector<16x96xf32>
    %145 = vector.broadcast %128 : vector<1x96xf32> to vector<16x96xf32>
    %146 = arith.addf %144, %145 : vector<16x96xf32>
    %147 = vector.extract_strided_slice %146 {offsets = [0, 0], sizes = [16, 32], strides = [1, 1]} : vector<16x96xf32> to vector<16x32xf32>
    %148 = vector.extract_strided_slice %146 {offsets = [0, 32], sizes = [16, 32], strides = [1, 1]} : vector<16x96xf32> to vector<16x32xf32>
    %149 = vector.extract_strided_slice %146 {offsets = [0, 64], sizes = [16, 32], strides = [1, 1]} : vector<16x96xf32> to vector<16x32xf32>
    %150 = vector.extract_strided_slice %147 {offsets = [0, 0], sizes = [16, 8], strides = [1, 1]} : vector<16x32xf32> to vector<16x8xf32>
    %151 = vector.shape_cast %150 : vector<16x8xf32> to vector<2x8x8xf32>
    %152 = vector.extract_strided_slice %147 {offsets = [0, 8], sizes = [16, 8], strides = [1, 1]} : vector<16x32xf32> to vector<16x8xf32>
    %153 = vector.shape_cast %152 : vector<16x8xf32> to vector<2x8x8xf32>
    %154 = vector.extract_strided_slice %147 {offsets = [0, 16], sizes = [16, 8], strides = [1, 1]} : vector<16x32xf32> to vector<16x8xf32>
    %155 = vector.shape_cast %154 : vector<16x8xf32> to vector<2x8x8xf32>
    %156 = vector.extract_strided_slice %147 {offsets = [0, 24], sizes = [16, 8], strides = [1, 1]} : vector<16x32xf32> to vector<16x8xf32>
    %157 = vector.shape_cast %156 : vector<16x8xf32> to vector<2x8x8xf32>
    %158 = tpu.concatenate %151, %153, %155, %157 in 0 : vector<2x8x8xf32>, vector<2x8x8xf32>, vector<2x8x8xf32>, vector<2x8x8xf32> -> vector<8x8x8xf32>
    %159 = vector.extract_strided_slice %148 {offsets = [0, 0], sizes = [16, 8], strides = [1, 1]} : vector<16x32xf32> to vector<16x8xf32>
    %160 = vector.shape_cast %159 : vector<16x8xf32> to vector<2x8x8xf32>
    %161 = vector.extract_strided_slice %148 {offsets = [0, 8], sizes = [16, 8], strides = [1, 1]} : vector<16x32xf32> to vector<16x8xf32>
    %162 = vector.shape_cast %161 : vector<16x8xf32> to vector<2x8x8xf32>
    %163 = vector.extract_strided_slice %148 {offsets = [0, 16], sizes = [16, 8], strides = [1, 1]} : vector<16x32xf32> to vector<16x8xf32>
    %164 = vector.shape_cast %163 : vector<16x8xf32> to vector<2x8x8xf32>
    %165 = vector.extract_strided_slice %148 {offsets = [0, 24], sizes = [16, 8], strides = [1, 1]} : vector<16x32xf32> to vector<16x8xf32>
    %166 = vector.shape_cast %165 : vector<16x8xf32> to vector<2x8x8xf32>
    %167 = tpu.concatenate %160, %162, %164, %166 in 0 : vector<2x8x8xf32>, vector<2x8x8xf32>, vector<2x8x8xf32>, vector<2x8x8xf32> -> vector<8x8x8xf32>
    %168 = vector.extract_strided_slice %149 {offsets = [0, 0], sizes = [16, 8], strides = [1, 1]} : vector<16x32xf32> to vector<16x8xf32>
    %169 = vector.shape_cast %168 : vector<16x8xf32> to vector<2x8x8xf32>
    %170 = vector.extract_strided_slice %149 {offsets = [0, 8], sizes = [16, 8], strides = [1, 1]} : vector<16x32xf32> to vector<16x8xf32>
    %171 = vector.shape_cast %170 : vector<16x8xf32> to vector<2x8x8xf32>
    %172 = vector.extract_strided_slice %149 {offsets = [0, 16], sizes = [16, 8], strides = [1, 1]} : vector<16x32xf32> to vector<16x8xf32>
    %173 = vector.shape_cast %172 : vector<16x8xf32> to vector<2x8x8xf32>
    %174 = vector.extract_strided_slice %149 {offsets = [0, 24], sizes = [16, 8], strides = [1, 1]} : vector<16x32xf32> to vector<16x8xf32>
    %175 = vector.shape_cast %174 : vector<16x8xf32> to vector<2x8x8xf32>
    %176 = tpu.concatenate %169, %171, %173, %175 in 0 : vector<2x8x8xf32>, vector<2x8x8xf32>, vector<2x8x8xf32>, vector<2x8x8xf32> -> vector<8x8x8xf32>
    "tpu.trace_start"() <{level = 10 : i32, message = "bqd,bkd->bqk"}> : () -> ()
    %cst_42 = arith.constant dense<0.000000e+00> : vector<8x8x8xf32>
    %177 = tpu.matmul %158, %167, %cst_42 {dimension_numbers = #tpu.dot_dimension_numbers<[2], [2], [1], [1], [0, 0, 0, 1, 1, 1], [0], [0]>} : vector<8x8x8xf32>, vector<8x8x8xf32>, vector<8x8x8xf32> -> vector<8x8x8xf32>
    "tpu.trace_stop"() : () -> ()
    %cst_43 = arith.constant dense<0xFF800000> : vector<8x8xf32>
    %178 = vector.multi_reduction <maximumf>, %177, %cst_43 [2] : vector<8x8x8xf32> to vector<8x8xf32>
    %179 = vector.shape_cast %178 : vector<8x8xf32> to vector<8x8x1xf32>
    %180 = vector.broadcast %179 : vector<8x8x1xf32> to vector<8x8x8xf32>
    %181 = arith.subf %177, %180 : vector<8x8x8xf32>
    %182 = math.exp %181 : vector<8x8x8xf32>
    %cst_44 = arith.constant dense<0.000000e+00> : vector<8x8xf32>
    %183 = vector.multi_reduction <add>, %182, %cst_44 [2] : vector<8x8x8xf32> to vector<8x8xf32>
    %184 = vector.shape_cast %183 : vector<8x8xf32> to vector<8x8x1xf32>
    %185 = vector.broadcast %184 : vector<8x8x1xf32> to vector<8x8x8xf32>
    %186 = arith.divf %182, %185 : vector<8x8x8xf32>
    "tpu.trace_start"() <{level = 10 : i32, message = "bqk,bkd->bqd"}> : () -> ()
    %cst_45 = arith.constant dense<0.000000e+00> : vector<8x8x8xf32>
    %187 = tpu.matmul %186, %176, %cst_45 {dimension_numbers = #tpu.dot_dimension_numbers<[2], [1], [1], [2], [0, 0, 0, 1, 1, 2], [0], [0]>} : vector<8x8x8xf32>, vector<8x8x8xf32>, vector<8x8x8xf32> -> vector<8x8x8xf32>
    "tpu.trace_stop"() : () -> ()
    %188 = vector.extract_strided_slice %187 {offsets = [0, 0, 0], sizes = [2, 8, 8], strides = [1, 1, 1]} : vector<8x8x8xf32> to vector<2x8x8xf32>
    %189 = vector.shape_cast %188 : vector<2x8x8xf32> to vector<16x8xf32>
    %190 = vector.extract_strided_slice %187 {offsets = [2, 0, 0], sizes = [2, 8, 8], strides = [1, 1, 1]} : vector<8x8x8xf32> to vector<2x8x8xf32>
    %191 = vector.shape_cast %190 : vector<2x8x8xf32> to vector<16x8xf32>
    %192 = vector.extract_strided_slice %187 {offsets = [4, 0, 0], sizes = [2, 8, 8], strides = [1, 1, 1]} : vector<8x8x8xf32> to vector<2x8x8xf32>
    %193 = vector.shape_cast %192 : vector<2x8x8xf32> to vector<16x8xf32>
    %194 = vector.extract_strided_slice %187 {offsets = [6, 0, 0], sizes = [2, 8, 8], strides = [1, 1, 1]} : vector<8x8x8xf32> to vector<2x8x8xf32>
    %195 = vector.shape_cast %194 : vector<2x8x8xf32> to vector<16x8xf32>
    %196 = tpu.concatenate %189, %191, %193, %195 in 1 : vector<16x8xf32>, vector<16x8xf32>, vector<16x8xf32>, vector<16x8xf32> -> vector<16x32xf32>
    %cst_46 = arith.constant dense<0.000000e+00> : vector<16x32xf32>
    %197 = tpu.matmul %196, %139, %cst_46 {dimension_numbers = #tpu.dot_dimension_numbers<[1], [0], [0], [1], [0, 0, 1, 1], [], []>} : vector<16x32xf32>, vector<32x32xf32>, vector<16x32xf32> -> vector<16x32xf32>
    %198 = vector.broadcast %129 : vector<1x32xf32> to vector<16x32xf32>
    %199 = arith.addf %197, %198 : vector<16x32xf32>
    %200 = arith.addf %127, %199 : vector<16x32xf32>
    %cst_47 = arith.constant dense<0.000000e+00> : vector<16xf32>
    %201 = vector.multi_reduction <add>, %200, %cst_47 [1] : vector<16x32xf32> to vector<16xf32>
    %202 = vector.shape_cast %201 : vector<16xf32> to vector<16x1xf32>
    %cst_48 = arith.constant 3.200000e+01 : f32
    %203 = vector.broadcast %cst_48 : f32 to vector<16x1xf32>
    %204 = arith.divf %202, %203 : vector<16x1xf32>
    %205 = vector.broadcast %204 : vector<16x1xf32> to vector<16x32xf32>
    %206 = arith.subf %200, %205 : vector<16x32xf32>
    %207 = arith.mulf %206, %206 : vector<16x32xf32>
    %cst_49 = arith.constant dense<0.000000e+00> : vector<16xf32>
    %208 = vector.multi_reduction <add>, %207, %cst_49 [1] : vector<16x32xf32> to vector<16xf32>
    %209 = vector.shape_cast %208 : vector<16xf32> to vector<16x1xf32>
    %cst_50 = arith.constant 3.200000e+01 : f32
    %210 = vector.broadcast %cst_50 : f32 to vector<16x1xf32>
    %211 = arith.divf %209, %210 : vector<16x1xf32>
    %212 = vector.broadcast %204 : vector<16x1xf32> to vector<16x32xf32>
    %213 = arith.subf %200, %212 : vector<16x32xf32>
    %cst_51 = arith.constant 9.99999974E-6 : f32
    %214 = vector.broadcast %cst_51 : f32 to vector<16x1xf32>
    %215 = arith.addf %211, %214 : vector<16x1xf32>
    %216 = math.rsqrt %215 : vector<16x1xf32>
    %217 = vector.broadcast %216 : vector<16x1xf32> to vector<16x32xf32>
    %218 = arith.mulf %213, %217 : vector<16x32xf32>
    %219 = vector.broadcast %130 : vector<1x32xf32> to vector<16x32xf32>
    %220 = arith.mulf %218, %219 : vector<16x32xf32>
    %221 = vector.broadcast %131 : vector<1x32xf32> to vector<16x32xf32>
    %222 = arith.addf %220, %221 : vector<16x32xf32>
    %cst_52 = arith.constant dense<0.000000e+00> : vector<16x64xf32>
    %223 = tpu.matmul %222, %141, %cst_52 {dimension_numbers = #tpu.dot_dimension_numbers<[1], [0], [0], [1], [0, 0, 1, 1], [], []>} : vector<16x32xf32>, vector<32x64xf32>, vector<16x64xf32> -> vector<16x64xf32>
    %224 = vector.broadcast %132 : vector<1x64xf32> to vector<16x64xf32>
    %225 = arith.addf %223, %224 : vector<16x64xf32>
    %cst_53 = arith.constant 0.000000e+00 : f32
    %226 = vector.broadcast %cst_53 : f32 to vector<16x64xf32>
    %227 = arith.maximumf %225, %226 : vector<16x64xf32>
    %cst_54 = arith.constant dense<0.000000e+00> : vector<16x32xf32>
    %228 = tpu.matmul %227, %143, %cst_54 {dimension_numbers = #tpu.dot_dimension_numbers<[1], [0], [0], [1], [0, 0, 1, 1], [], []>} : vector<16x64xf32>, vector<64x32xf32>, vector<16x32xf32> -> vector<16x32xf32>
    %229 = vector.broadcast %133 : vector<1x32xf32> to vector<16x32xf32>
    %230 = arith.addf %228, %229 : vector<16x32xf32>
    %231 = arith.addf %222, %230 : vector<16x32xf32>
    %cst_55 = arith.constant dense<0.000000e+00> : vector<16xf32>
    %232 = vector.multi_reduction <add>, %231, %cst_55 [1] : vector<16x32xf32> to vector<16xf32>
    %233 = vector.shape_cast %232 : vector<16xf32> to vector<16x1xf32>
    %cst_56 = arith.constant 3.200000e+01 : f32
    %234 = vector.broadcast %cst_56 : f32 to vector<16x1xf32>
    %235 = arith.divf %233, %234 : vector<16x1xf32>
    %236 = vector.broadcast %235 : vector<16x1xf32> to vector<16x32xf32>
    %237 = arith.subf %231, %236 : vector<16x32xf32>
    %238 = arith.mulf %237, %237 : vector<16x32xf32>
    %cst_57 = arith.constant dense<0.000000e+00> : vector<16xf32>
    %239 = vector.multi_reduction <add>, %238, %cst_57 [1] : vector<16x32xf32> to vector<16xf32>
    %240 = vector.shape_cast %239 : vector<16xf32> to vector<16x1xf32>
    %cst_58 = arith.constant 3.200000e+01 : f32
    %241 = vector.broadcast %cst_58 : f32 to vector<16x1xf32>
    %242 = arith.divf %240, %241 : vector<16x1xf32>
    %243 = vector.broadcast %235 : vector<16x1xf32> to vector<16x32xf32>
    %244 = arith.subf %231, %243 : vector<16x32xf32>
    %cst_59 = arith.constant 9.99999974E-6 : f32
    %245 = vector.broadcast %cst_59 : f32 to vector<16x1xf32>
    %246 = arith.addf %242, %245 : vector<16x1xf32>
    %247 = math.rsqrt %246 : vector<16x1xf32>
    %248 = vector.broadcast %247 : vector<16x1xf32> to vector<16x32xf32>
    %249 = arith.mulf %244, %248 : vector<16x32xf32>
    %250 = vector.broadcast %134 : vector<1x32xf32> to vector<16x32xf32>
    %251 = arith.mulf %249, %250 : vector<16x32xf32>
    %252 = vector.broadcast %135 : vector<1x32xf32> to vector<16x32xf32>
    %253 = arith.addf %251, %252 : vector<16x32xf32>
    %254 = vector.extract_strided_slice %1 {offsets = [16, 0], sizes = [1, 32], strides = [1, 1]} : vector<18x96xf32> to vector<1x32xf32>
    %255 = vector.extract_strided_slice %1 {offsets = [17, 0], sizes = [1, 32], strides = [1, 1]} : vector<18x96xf32> to vector<1x32xf32>
    %cst_60 = arith.constant dense<0.000000e+00> : vector<16xf32>
    %256 = vector.multi_reduction <add>, %253, %cst_60 [1] : vector<16x32xf32> to vector<16xf32>
    %257 = vector.shape_cast %256 : vector<16xf32> to vector<16x1xf32>
    %cst_61 = arith.constant 3.200000e+01 : f32
    %258 = vector.broadcast %cst_61 : f32 to vector<16x1xf32>
    %259 = arith.divf %257, %258 : vector<16x1xf32>
    %260 = vector.broadcast %259 : vector<16x1xf32> to vector<16x32xf32>
    %261 = arith.subf %253, %260 : vector<16x32xf32>
    %262 = arith.mulf %261, %261 : vector<16x32xf32>
    %cst_62 = arith.constant dense<0.000000e+00> : vector<16xf32>
    %263 = vector.multi_reduction <add>, %262, %cst_62 [1] : vector<16x32xf32> to vector<16xf32>
    %264 = vector.shape_cast %263 : vector<16xf32> to vector<16x1xf32>
    %cst_63 = arith.constant 3.200000e+01 : f32
    %265 = vector.broadcast %cst_63 : f32 to vector<16x1xf32>
    %266 = arith.divf %264, %265 : vector<16x1xf32>
    %267 = vector.broadcast %259 : vector<16x1xf32> to vector<16x32xf32>
    %268 = arith.subf %253, %267 : vector<16x32xf32>
    %cst_64 = arith.constant 9.99999974E-6 : f32
    %269 = vector.broadcast %cst_64 : f32 to vector<16x1xf32>
    %270 = arith.addf %266, %269 : vector<16x1xf32>
    %271 = math.rsqrt %270 : vector<16x1xf32>
    %272 = vector.broadcast %271 : vector<16x1xf32> to vector<16x32xf32>
    %273 = arith.mulf %268, %272 : vector<16x32xf32>
    %274 = vector.broadcast %254 : vector<1x32xf32> to vector<16x32xf32>
    %275 = arith.mulf %273, %274 : vector<16x32xf32>
    %276 = vector.broadcast %255 : vector<1x32xf32> to vector<16x32xf32>
    %277 = arith.addf %275, %276 : vector<16x32xf32>
    %c0_65 = arith.constant 0 : index
    %c0_66 = arith.constant 0 : index
    %278 = vector.load %arg3[%c0_65, %c0_66] : memref<16x32xf32, #tpu.memory_space<vmem>>, vector<16x32xf32>
    tpu.vector_store %arg3[%c0_65, %c0_66], %277 {strides = array<i32>} : memref<16x32xf32, #tpu.memory_space<vmem>>, vector<16x32xf32>,
    return
  }
}

</mosaic_0001>

<llo_original>
// kernel: tpu_custom_call.1
$region0: #{tpu_custom_call.1}
  #allocation0 [shape = 'u32[]', space=smem, size = 0x4, offset = 0x4, fixed_abs, tag = 'smem constant byte address 0x4 - core index']
  #allocation1 [shape = 'u32[144,128]{1,0:T(1,128)}', space=vmem, size = 0x12000, scoped, tag = 'internal scratch']
  %s0 = inlined_call_operand.hbm [shape: f32[16,32], index: 0, kind: input, shape index: {}]
  %s1 = inlined_call_operand.hbm [shape: f32[2,160,96], index: 1, kind: input, shape index: {}]
  %s2 = inlined_call_operand.hbm [shape: f32[18,96], index: 2, kind: input, shape index: {}]
  %s3 = inlined_call_operand.hbm [shape: f32[16,32], index: 3, kind: output, shape index: {}]
  %s4 = sld [smem:[#allocation0]]
  $region34: #{tpu_custom_call.1} parent=0
    _
  %s6 = ssub.s32 1, %s4
  %s7 = scalar_select 0, %s6, %s4
  $region1: #{tpu_custom_call.1} parent=0
    #allocation2 [shape = 'u8[8192]{0}', space=vmem, size = 0x2000, scoped, tag = 'input window, operand 0, single buffered']
    #allocation3 [shape = 's32[1]{0}', space=sflag, size = 0x4, scoped, tag = 'scoped memory for tpu_custom_call.1']
    #allocation4 [shape = 's32[1]{0}', space=sflag, size = 0x4, scoped, tag = 'scoped memory for tpu_custom_call.1']
    #allocation5 [shape = 'u8[163840]{0}', space=vmem, size = 0x28000, scoped, tag = 'input window, operand 1, single buffered']
    #allocation6 [shape = 's32[1]{0}', space=sflag, size = 0x4, scoped, tag = 'scoped memory for tpu_custom_call.1']
    #allocation7 [shape = 'u8[12288]{0}', space=vmem, size = 0x3000, scoped, tag = 'input window, operand 2, single buffered']
    #allocation8 [shape = 'u8[8192]{0}', space=vmem, size = 0x2000, scoped, tag = 'output window, operand 0, single buffered']
    %8 = vsyncpa [#allocation3], 0
    %9 = vsyncpa [#allocation6], 0
    %10 = vsyncpa [#allocation4], 0
    // Predicated region
    $region2: #{tpu_custom_call.1} parent=1 // pred_check
      _
    $region3: #{tpu_custom_call.1} parent=1 // pred_check_branch
      %12 = sbr.rel (0) target = $region5
    $region4: #{tpu_custom_call.1} parent=1 // pred_region
      %s14 = ssub.s32 256, 256
      %15 = vsyncadd [#allocation3], %s14
      %s16 = sshll.u32 [#allocation2], 4
      %s17 = int_to_ptr.vmem [resolvable:$true] %s16
      %22 = dma.hbm_to_vmem [thread:$0]  %s0, 256, %s17, [#allocation3], 128, 128, 8
    $region5: #{tpu_custom_call.1} parent=1 // pred_fallthru
      _
    // Predicated region
    $region6: #{tpu_custom_call.1} parent=1 // pred_check
      _
    $region7: #{tpu_custom_call.1} parent=1 // pred_check_branch
      %24 = sbr.rel (0) target = $region9
    $region8: #{tpu_custom_call.1} parent=1 // pred_region
      %s26 = ssub.s32 5120, 5120
      %27 = vsyncadd [#allocation6], %s26
      %s28 = sshll.u32 [#allocation5], 4
      %s29 = int_to_ptr.vmem [resolvable:$true] %s28
      %34 = dma.hbm_to_vmem [thread:$0]  %s1, 5120, %s29, [#allocation6], 128, 128, 8
    $region9: #{tpu_custom_call.1} parent=1 // pred_fallthru
      _
    // Predicated region
    $region10: #{tpu_custom_call.1} parent=1 // pred_check
      _
    $region11: #{tpu_custom_call.1} parent=1 // pred_check_branch
      %36 = sbr.rel (0) target = $region13
    $region12: #{tpu_custom_call.1} parent=1 // pred_region
      %s38 = ssub.s32 384, 384
      %39 = vsyncadd [#allocation6], %s38
      %s40 = sshll.u32 [#allocation7], 4
      %s41 = int_to_ptr.vmem [resolvable:$true] %s40
      %46 = dma.hbm_to_vmem [thread:$0]  %s2, 384, %s41, [#allocation6], 128, 128, 8
    $region13: #{tpu_custom_call.1} parent=1 // pred_fallthru
      _
    // Predicated region
    $region14: #{tpu_custom_call.1} parent=1 // pred_check
      _
    $region15: #{tpu_custom_call.1} parent=1 // pred_check_branch
      %48 = sbr.rel (0) target = $region17
    $region16: #{tpu_custom_call.1} parent=1 // pred_region
      %49 = dma.done [#allocation3], 256
    $region17: #{tpu_custom_call.1} parent=1 // pred_fallthru
      _
    // Predicated region
    $region18: #{tpu_custom_call.1} parent=1 // pred_check
      _
    $region19: #{tpu_custom_call.1} parent=1 // pred_check_branch
      %51 = sbr.rel (0) target = $region21
    $region20: #{tpu_custom_call.1} parent=1 // pred_region
      %52 = dma.done [#allocation6], 5120
    $region21: #{tpu_custom_call.1} parent=1 // pred_fallthru
      _
    // Predicated region
    $region22: #{tpu_custom_call.1} parent=1 // pred_check
      _
    $region23: #{tpu_custom_call.1} parent=1 // pred_check_branch
      %54 = sbr.rel (0) target = $region25
    $region24: #{tpu_custom_call.1} parent=1 // pred_region
      %55 = dma.done [#allocation6], 384
    $region25: #{tpu_custom_call.1} parent=1 // pred_fallthru
      _
    %v56 = vld [vmem:[#allocation2] sm:$0xff]
    %v57 = vld [vmem:[#allocation2 + $0x8] sm:$0xff]
    %v58 = vld [vmem:[#allocation7] sm:$0xff]
    %v59 = vld [vmem:[#allocation7 + $0x8] sm:$0xff]
    %v60 = vld [vmem:[#allocation7 + $0x10] sm:$0x3]
    %v61 = vld [vmem:[#allocation5] sm:$0xff]
    %v62 = vld [vmem:[#allocation5 + $0x8] sm:$0xff]
    %v63 = vld [vmem:[#allocation5 + $0x10] sm:$0xff]
    %v64 = vld [vmem:[#allocation5 + $0x18] sm:$0xff]
    %v65 = vld [vmem:[#allocation5 + $0x20] sm:$0xff]
    %v66 = vld [vmem:[#allocation5 + $0x28] sm:$0xff]
    %v67 = vld [vmem:[#allocation5 + $0x30] sm:$0xff]
    %v68 = vld [vmem:[#allocation5 + $0x38] sm:$0xff]
    %v69 = vld [vmem:[#allocation5 + $0x40] sm:$0xff]
    %v70 = vld [vmem:[#allocation5 + $0x48] sm:$0xff]
    %v71 = vld [vmem:[#allocation5 + $0x50] sm:$0xff]
    %v72 = vld [vmem:[#allocation5 + $0x58] sm:$0xff]
    %v73 = vld [vmem:[#allocation5 + $0x60] sm:$0xff]
    %v74 = vld [vmem:[#allocation5 + $0x68] sm:$0xff]
    %v75 = vld [vmem:[#allocation5 + $0x70] sm:$0xff]
    %v76 = vld [vmem:[#allocation5 + $0x78] sm:$0xff]
    %v77 = vld [vmem:[#allocation5 + $0x80] sm:$0xff]
    %v78 = vld [vmem:[#allocation5 + $0x88] sm:$0xff]
    %v79 = vld [vmem:[#allocation5 + $0x90] sm:$0xff]
    %v80 = vld [vmem:[#allocation5 + $0x98] sm:$0xff]
    %v81 = vlaneseq
    %v82 = vshrl.u32 %v81, 7
    %v83 = vsub.s32 0, %v82
    %v84 = vrot.slane %v58, %v83
    %vm85 = vcmask 261120
    %v87 = vsel %vm85, %v56, 0
    %v90 = vsel %vm85, %v57, 0
    %92 = vmatprep.subr.mxu0 0.0
    %93 = vmatpush1.msra.mxu0 %v61
    %94 = vmatprep.subr.mxu0 0.0
    %95 = vmatpush1.msra.mxu0 %v62
    %96 = vmatprep.subr.mxu0 0.0
    %97 = vmatpush1.msra.mxu0 %v63
    %98 = vmatprep.subr.mxu0 0.0
    %99 = vmatpush1.msra.mxu0 %v64
    %100 = vmatprep.subr.mxu0 0.0
    %101 = vmatpush1.msra.mxu0 0.0
    %102 = vmatprep.subr.mxu0 0.0
    %103 = vmatpush1.msra.mxu0 0.0
    %104 = vmatprep.subr.mxu0 0.0
    %105 = vmatpush1.msra.mxu0 0.0
    %106 = vmatprep.subr.mxu0 0.0
    %107 = vmatpush1.msra.mxu0 0.0
    %108 = vmatprep.subr.mxu0 0.0
    %109 = vmatpush1.msra.mxu0 0.0
    %110 = vmatprep.subr.mxu0 0.0
    %111 = vmatpush1.msra.mxu0 0.0
    %112 = vmatprep.subr.mxu0 0.0
    %113 = vmatpush1.msra.mxu0 0.0
    %114 = vmatprep.subr.mxu0 0.0
    %115 = vmatpush1.msra.mxu0 0.0
    %116 = vmatprep.subr.mxu0 0.0
    %117 = vmatpush1.msra.mxu0 0.0
    %118 = vmatprep.subr.mxu0 0.0
    %119 = vmatpush1.msra.mxu0 0.0
    %120 = vmatprep.subr.mxu0 0.0
    %121 = vmatpush1.msra.mxu0 0.0
    %122 = vmatprep.subr.mxu0 0.0
    %123 = vmatpush1.msra.mxu0 0.0
    %124 = vmatprep.subr.mxu0 0.0
    %125 = vmatpush1.msra.mxu0 0.0
    %126 = vmatprep.subr.mxu0 0.0
    %127 = vmatpush1.msra.mxu0 0.0
    %128 = vmatprep.subr.mxu0 0.0
    %129 = vmatpush1.msra.mxu0 0.0
    %130 = vmatprep.subr.mxu0 0.0
    %131 = vmatpush1.msra.mxu0 0.0
    %132 = vmatprep.subr.mxu0 0.0
    %133 = vmatpush1.msra.mxu0 0.0
    %134 = vmatprep.subr.mxu0 0.0
    %135 = vmatpush1.msra.mxu0 0.0
    %136 = vmatprep.subr.mxu0 0.0
    %137 = vmatpush1.msra.mxu0 0.0
    %138 = vmatprep.subr.mxu0 0.0
    %139 = vmatpush1.msra.mxu0 0.0
    %140 = vmatprep.subr.mxu0 0.0
    %141 = vmatpush1.msra.mxu0 0.0
    %142 = vmatprep.subr.mxu0 0.0
    %143 = vmatpush1.msra.mxu0 0.0
    %144 = vmatprep.subr.mxu0 0.0
    %145 = vmatpush1.msra.mxu0 0.0
    %146 = vmatprep.subr.mxu0 0.0
    %147 = vmatpush1.msra.mxu0 0.0
    %148 = vmatprep.subr.mxu0 0.0
    %149 = vmatpush1.msra.mxu0 0.0
    %150 = vmatprep.subr.mxu0 0.0
    %151 = vmatpush1.msra.mxu0 0.0
    %152 = vmatprep.subr.mxu0 0.0
    %153 = vmatpush1.msra.mxu0 0.0
    %154 = vmatprep.subr.mxu0 0.0
    %155 = vmatpush1.msra.mxu0 0.0
    %156 = vmatprep.mubr.f32.mxu0 0.0
    %157 = vmatmul.mubr.f32.gmra.mrb[0].mxu0 %v87
    %v158 = vpop.f32.mrb[0].mxu0
    %v159 = vadd.f32 %v84, %v158
    %v160 = vpop.f32.mrb[0].mxu0
    %161 = vmatprep.mubr.f32.mxu0 0.0
    %162 = vmatmul.mubr.f32.gmra.mrb[0].mxu0 %v90
    %v163 = vpop.f32.mrb[0].mxu0
    %v164 = vadd.f32 %v84, %v163
    %v165 = vpop.f32.mrb[0].mxu0
    %166 = vdwg.mxu0
    %169 = vrot.lane.b32.xlu0 %v159, 120
    %v170 = vpop.permute.xlu0 %169
    %171 = vrot.lane.b32.xlu0 %v164, 120
    %v172 = vpop.permute.xlu0 %171
    %173 = vrot.lane.b32.xlu0 %v159, 112
    %v174 = vpop.permute.xlu0 %173
    %175 = vrot.lane.b32.xlu0 %v164, 112
    %v176 = vpop.permute.xlu0 %175
    %177 = vrot.lane.b32.xlu0 %v159, 104
    %v178 = vpop.permute.xlu0 %177
    %179 = vrot.lane.b32.xlu0 %v164, 104
    %v180 = vpop.permute.xlu0 %179
    %181 = vrot.lane.b32.xlu0 %v159, 96
    %v182 = vpop.permute.xlu0 %181
    %vm183 = vcmask 64512
    %v184 = vsel %vm183, %v159, 0
    %v186 = vsel %vm183, %v182, 0
    %188 = vmatprep.subr.mxu0 0.0
    %189 = vmatpush1.xpose.msra.mxu0 %v186
    %190 = vmatprep.subr.mxu0 0.0
    %191 = vmatpush1.xpose.msra.mxu0 0.0
    %192 = vmatprep.subr.mxu0 0.0
    %193 = vmatpush1.xpose.msra.mxu0 0.0
    %194 = vmatprep.subr.mxu0 0.0
    %195 = vmatpush1.xpose.msra.mxu0 0.0
    %196 = vmatprep.subr.mxu0 0.0
    %197 = vmatpush1.xpose.msra.mxu0 0.0
    %198 = vmatprep.subr.mxu0 0.0
    %199 = vmatpush1.xpose.msra.mxu0 0.0
    %200 = vmatprep.subr.mxu0 0.0
    %201 = vmatpush1.xpose.msra.mxu0 0.0
    %202 = vmatprep.subr.mxu0 0.0
    %203 = vmatpush1.xpose.msra.mxu0 0.0
    %204 = vmatprep.subr.mxu0 0.0
    %205 = vmatpush1.xpose.msra.mxu0 0.0
    %206 = vmatprep.subr.mxu0 0.0
    %207 = vmatpush1.xpose.msra.mxu0 0.0
    %208 = vmatprep.subr.mxu0 0.0
    %209 = vmatpush1.xpose.msra.mxu0 0.0
    %210 = vmatprep.subr.mxu0 0.0
    %211 = vmatpush1.xpose.msra.mxu0 0.0
    %212 = vmatprep.subr.mxu0 0.0
    %213 = vmatpush1.xpose.msra.mxu0 0.0
    %214 = vmatprep.subr.mxu0 0.0
    %215 = vmatpush1.xpose.msra.mxu0 0.0
    %216 = vmatprep.subr.mxu0 0.0
    %217 = vmatpush1.xpose.msra.mxu0 0.0
    %218 = vmatprep.subr.mxu0 0.0
    %219 = vmatpush1.xpose.msra.mxu0 0.0
    %220 = vmatprep.subr.mxu0 0.0
    %221 = vmatpush1.xpose.msra.mxu0 0.0
    %222 = vmatprep.subr.mxu0 0.0
    %223 = vmatpush1.xpose.msra.mxu0 0.0
    %224 = vmatprep.subr.mxu0 0.0
    %225 = vmatpush1.xpose.msra.mxu0 0.0
    %226 = vmatprep.subr.mxu0 0.0
    %227 = vmatpush1.xpose.msra.mxu0 0.0
    %228 = vmatprep.subr.mxu0 0.0
    %229 = vmatpush1.xpose.msra.mxu0 0.0
    %230 = vmatprep.subr.mxu0 0.0
    %231 = vmatpush1.xpose.msra.mxu0 0.0
    %232 = vmatprep.subr.mxu0 0.0
    %233 = vmatpush1.xpose.msra.mxu0 0.0
    %234 = vmatprep.subr.mxu0 0.0
    %235 = vmatpush1.xpose.msra.mxu0 0.0
    %236 = vmatprep.subr.mxu0 0.0
    %237 = vmatpush1.xpose.msra.mxu0 0.0
    %238 = vmatprep.subr.mxu0 0.0
    %239 = vmatpush1.xpose.msra.mxu0 0.0
    %240 = vmatprep.subr.mxu0 0.0
    %241 = vmatpush1.xpose.msra.mxu0 0.0
    %242 = vmatprep.subr.mxu0 0.0
    %243 = vmatpush1.xpose.msra.mxu0 0.0
    %244 = vmatprep.subr.mxu0 0.0
    %245 = vmatpush1.xpose.msra.mxu0 0.0
    %246 = vmatprep.subr.mxu0 0.0
    %247 = vmatpush1.xpose.msra.mxu0 0.0
    %248 = vmatprep.subr.mxu0 0.0
    %249 = vmatpush1.xpose.msra.mxu0 0.0
    %250 = vmatprep.subr.mxu0 0.0
    %251 = vmatpush1.xpose.msra.mxu0 0.0
    %252 = vmatprep.mubr.f32.mxu0 0.0
    %253 = vmatmul.mubr.f32.gmra.mrb[0].mxu0 %v184
    %v254 = vpop.f32.mrb[0].mxu0
    %v255 = vadd.f32 0.0, %v254
    %v256 = vpop.f32.mrb[0].mxu0
    %257 = vdwg.mxu0
    %258 = vrot.lane.b32.xlu0 %v164, 96
    %v259 = vpop.permute.xlu0 %258
    %v260 = vsel %vm183, %v164, 0
    %v262 = vsel %vm183, %v259, 0
    %264 = vmatprep.subr.mxu0 0.0
    %265 = vmatpush1.xpose.msra.mxu0 %v262
    %266 = vmatprep.subr.mxu0 0.0
    %267 = vmatpush1.xpose.msra.mxu0 0.0
    %268 = vmatprep.subr.mxu0 0.0
    %269 = vmatpush1.xpose.msra.mxu0 0.0
    %270 = vmatprep.subr.mxu0 0.0
    %271 = vmatpush1.xpose.msra.mxu0 0.0
    %272 = vmatprep.subr.mxu0 0.0
    %273 = vmatpush1.xpose.msra.mxu0 0.0
    %274 = vmatprep.subr.mxu0 0.0
    %275 = vmatpush1.xpose.msra.mxu0 0.0
    %276 = vmatprep.subr.mxu0 0.0
    %277 = vmatpush1.xpose.msra.mxu0 0.0
    %278 = vmatprep.subr.mxu0 0.0
    %279 = vmatpush1.xpose.msra.mxu0 0.0
    %280 = vmatprep.subr.mxu0 0.0
    %281 = vmatpush1.xpose.msra.mxu0 0.0
    %282 = vmatprep.subr.mxu0 0.0
    %283 = vmatpush1.xpose.msra.mxu0 0.0
    %284 = vmatprep.subr.mxu0 0.0
    %285 = vmatpush1.xpose.msra.mxu0 0.0
    %286 = vmatprep.subr.mxu0 0.0
    %287 = vmatpush1.xpose.msra.mxu0 0.0
    %288 = vmatprep.subr.mxu0 0.0
    %289 = vmatpush1.xpose.msra.mxu0 0.0
    %290 = vmatprep.subr.mxu0 0.0
    %291 = vmatpush1.xpose.msra.mxu0 0.0
    %292 = vmatprep.subr.mxu0 0.0
    %293 = vmatpush1.xpose.msra.mxu0 0.0
    %294 = vmatprep.subr.mxu0 0.0
    %295 = vmatpush1.xpose.msra.mxu0 0.0
    %296 = vmatprep.subr.mxu0 0.0
    %297 = vmatpush1.xpose.msra.mxu0 0.0
    %298 = vmatprep.subr.mxu0 0.0
    %299 = vmatpush1.xpose.msra.mxu0 0.0
    %300 = vmatprep.subr.mxu0 0.0
    %301 = vmatpush1.xpose.msra.mxu0 0.0
    %302 = vmatprep.subr.mxu0 0.0
    %303 = vmatpush1.xpose.msra.mxu0 0.0
    %304 = vmatprep.subr.mxu0 0.0
    %305 = vmatpush1.xpose.msra.mxu0 0.0
    %306 = vmatprep.subr.mxu0 0.0
    %307 = vmatpush1.xpose.msra.mxu0 0.0
    %308 = vmatprep.subr.mxu0 0.0
    %309 = vmatpush1.xpose.msra.mxu0 0.0
    %310 = vmatprep.subr.mxu0 0.0
    %311 = vmatpush1.xpose.msra.mxu0 0.0
    %312 = vmatprep.subr.mxu0 0.0
    %313 = vmatpush1.xpose.msra.mxu0 0.0
    %314 = vmatprep.subr.mxu0 0.0
    %315 = vmatpush1.xpose.msra.mxu0 0.0
    %316 = vmatprep.subr.mxu0 0.0
    %317 = vmatpush1.xpose.msra.mxu0 0.0
    %318 = vmatprep.subr.mxu0 0.0
    %319 = vmatpush1.xpose.msra.mxu0 0.0
    %320 = vmatprep.subr.mxu0 0.0
    %321 = vmatpush1.xpose.msra.mxu0 0.0
    %322 = vmatprep.subr.mxu0 0.0
    %323 = vmatpush1.xpose.msra.mxu0 0.0
    %324 = vmatprep.subr.mxu0 0.0
    %325 = vmatpush1.xpose.msra.mxu0 0.0
    %326 = vmatprep.subr.mxu0 0.0
    %327 = vmatpush1.xpose.msra.mxu0 0.0
    %328 = vmatprep.mubr.f32.mxu0 0.0
    %329 = vmatmul.mubr.f32.gmra.mrb[0].mxu0 %v260
    %v330 = vpop.f32.mrb[0].mxu0
    %v331 = vadd.f32 0.0, %v330
    %v332 = vpop.f32.mrb[0].mxu0
    %333 = vdwg.mxu0
    %334 = vrot.lane.b32.xlu0 %v170, 96
    %v335 = vpop.permute.xlu0 %334
    %v336 = vsel %vm183, %v170, 0
    %v338 = vsel %vm183, %v335, 0
    %340 = vmatprep.subr.mxu0 0.0
    %341 = vmatpush1.xpose.msra.mxu0 %v338
    %342 = vmatprep.subr.mxu0 0.0
    %343 = vmatpush1.xpose.msra.mxu0 0.0
    %344 = vmatprep.subr.mxu0 0.0
    %345 = vmatpush1.xpose.msra.mxu0 0.0
    %346 = vmatprep.subr.mxu0 0.0
    %347 = vmatpush1.xpose.msra.mxu0 0.0
    %348 = vmatprep.subr.mxu0 0.0
    %349 = vmatpush1.xpose.msra.mxu0 0.0
    %350 = vmatprep.subr.mxu0 0.0
    %351 = vmatpush1.xpose.msra.mxu0 0.0
    %352 = vmatprep.subr.mxu0 0.0
    %353 = vmatpush1.xpose.msra.mxu0 0.0
    %354 = vmatprep.subr.mxu0 0.0
    %355 = vmatpush1.xpose.msra.mxu0 0.0
    %356 = vmatprep.subr.mxu0 0.0
    %357 = vmatpush1.xpose.msra.mxu0 0.0
    %358 = vmatprep.subr.mxu0 0.0
    %359 = vmatpush1.xpose.msra.mxu0 0.0
    %360 = vmatprep.subr.mxu0 0.0
    %361 = vmatpush1.xpose.msra.mxu0 0.0
    %362 = vmatprep.subr.mxu0 0.0
    %363 = vmatpush1.xpose.msra.mxu0 0.0
    %364 = vmatprep.subr.mxu0 0.0
    %365 = vmatpush1.xpose.msra.mxu0 0.0
    %366 = vmatprep.subr.mxu0 0.0
    %367 = vmatpush1.xpose.msra.mxu0 0.0
    %368 = vmatprep.subr.mxu0 0.0
    %369 = vmatpush1.xpose.msra.mxu0 0.0
    %370 = vmatprep.subr.mxu0 0.0
    %371 = vmatpush1.xpose.msra.mxu0 0.0
    %372 = vmatprep.subr.mxu0 0.0
    %373 = vmatpush1.xpose.msra.mxu0 0.0
    %374 = vmatprep.subr.mxu0 0.0
    %375 = vmatpush1.xpose.msra.mxu0 0.0
    %376 = vmatprep.subr.mxu0 0.0
    %377 = vmatpush1.xpose.msra.mxu0 0.0
    %378 = vmatprep.subr.mxu0 0.0
    %379 = vmatpush1.xpose.msra.mxu0 0.0
    %380 = vmatprep.subr.mxu0 0.0
    %381 = vmatpush1.xpose.msra.mxu0 0.0
    %382 = vmatprep.subr.mxu0 0.0
    %383 = vmatpush1.xpose.msra.mxu0 0.0
    %384 = vmatprep.subr.mxu0 0.0
    %385 = vmatpush1.xpose.msra.mxu0 0.0
    %386 = vmatprep.subr.mxu0 0.0
    %387 = vmatpush1.xpose.msra.mxu0 0.0
    %388 = vmatprep.subr.mxu0 0.0
    %389 = vmatpush1.xpose.msra.mxu0 0.0
    %390 = vmatprep.subr.mxu0 0.0
    %391 = vmatpush1.xpose.msra.mxu0 0.0
    %392 = vmatprep.subr.mxu0 0.0
    %393 = vmatpush1.xpose.msra.mxu0 0.0
    %394 = vmatprep.subr.mxu0 0.0
    %395 = vmatpush1.xpose.msra.mxu0 0.0
    %396 = vmatprep.subr.mxu0 0.0
    %397 = vmatpush1.xpose.msra.mxu0 0.0
    %398 = vmatprep.subr.mxu0 0.0
    %399 = vmatpush1.xpose.msra.mxu0 0.0
    %400 = vmatprep.subr.mxu0 0.0
    %401 = vmatpush1.xpose.msra.mxu0 0.0
    %402 = vmatprep.subr.mxu0 0.0
    %403 = vmatpush1.xpose.msra.mxu0 0.0
    %404 = vmatprep.mubr.f32.mxu0 0.0
    %405 = vmatmul.mubr.f32.gmra.mrb[0].mxu0 %v336
    %v406 = vpop.f32.mrb[0].mxu0
    %v407 = vadd.f32 0.0, %v406
    %v408 = vpop.f32.mrb[0].mxu0
    %409 = vdwg.mxu0
    %410 = vrot.lane.b32.xlu0 %v172, 96
    %v411 = vpop.permute.xlu0 %410
    %v412 = vsel %vm183, %v172, 0
    %v414 = vsel %vm183, %v411, 0
    %416 = vmatprep.subr.mxu0 0.0
    %417 = vmatpush1.xpose.msra.mxu0 %v414
    %418 = vmatprep.subr.mxu0 0.0
    %419 = vmatpush1.xpose.msra.mxu0 0.0
    %420 = vmatprep.subr.mxu0 0.0
    %421 = vmatpush1.xpose.msra.mxu0 0.0
    %422 = vmatprep.subr.mxu0 0.0
    %423 = vmatpush1.xpose.msra.mxu0 0.0
    %424 = vmatprep.subr.mxu0 0.0
    %425 = vmatpush1.xpose.msra.mxu0 0.0
    %426 = vmatprep.subr.mxu0 0.0
    %427 = vmatpush1.xpose.msra.mxu0 0.0
    %428 = vmatprep.subr.mxu0 0.0
    %429 = vmatpush1.xpose.msra.mxu0 0.0
    %430 = vmatprep.subr.mxu0 0.0
    %431 = vmatpush1.xpose.msra.mxu0 0.0
    %432 = vmatprep.subr.mxu0 0.0
    %433 = vmatpush1.xpose.msra.mxu0 0.0
    %434 = vmatprep.subr.mxu0 0.0
    %435 = vmatpush1.xpose.msra.mxu0 0.0
    %436 = vmatprep.subr.mxu0 0.0
    %437 = vmatpush1.xpose.msra.mxu0 0.0
    %438 = vmatprep.subr.mxu0 0.0
    %439 = vmatpush1.xpose.msra.mxu0 0.0
    %440 = vmatprep.subr.mxu0 0.0
    %441 = vmatpush1.xpose.msra.mxu0 0.0
    %442 = vmatprep.subr.mxu0 0.0
    %443 = vmatpush1.xpose.msra.mxu0 0.0
    %444 = vmatprep.subr.mxu0 0.0
    %445 = vmatpush1.xpose.msra.mxu0 0.0
    %446 = vmatprep.subr.mxu0 0.0
    %447 = vmatpush1.xpose.msra.mxu0 0.0
    %448 = vmatprep.subr.mxu0 0.0
    %449 = vmatpush1.xpose.msra.mxu0 0.0
    %450 = vmatprep.subr.mxu0 0.0
    %451 = vmatpush1.xpose.msra.mxu0 0.0
    %452 = vmatprep.subr.mxu0 0.0
    %453 = vmatpush1.xpose.msra.mxu0 0.0
    %454 = vmatprep.subr.mxu0 0.0
    %455 = vmatpush1.xpose.msra.mxu0 0.0
    %456 = vmatprep.subr.mxu0 0.0
    %457 = vmatpush1.xpose.msra.mxu0 0.0
    %458 = vmatprep.subr.mxu0 0.0
    %459 = vmatpush1.xpose.msra.mxu0 0.0
    %460 = vmatprep.subr.mxu0 0.0
    %461 = vmatpush1.xpose.msra.mxu0 0.0
    %462 = vmatprep.subr.mxu0 0.0
    %463 = vmatpush1.xpose.msra.mxu0 0.0
    %464 = vmatprep.subr.mxu0 0.0
    %465 = vmatpush1.xpose.msra.mxu0 0.0
    %466 = vmatprep.subr.mxu0 0.0
    %467 = vmatpush1.xpose.msra.mxu0 0.0
    %468 = vmatprep.subr.mxu0 0.0
    %469 = vmatpush1.xpose.msra.mxu0 0.0
    %470 = vmatprep.subr.mxu0 0.0
    %471 = vmatpush1.xpose.msra.mxu0 0.0
    %472 = vmatprep.subr.mxu0 0.0
    %473 = vmatpush1.xpose.msra.mxu0 0.0
    %474 = vmatprep.subr.mxu0 0.0
    %475 = vmatpush1.xpose.msra.mxu0 0.0
    %476 = vmatprep.subr.mxu0 0.0
    %477 = vmatpush1.xpose.msra.mxu0 0.0
    %478 = vmatprep.subr.mxu0 0.0
    %479 = vmatpush1.xpose.msra.mxu0 0.0
    %480 = vmatprep.mubr.f32.mxu0 0.0
    %481 = vmatmul.mubr.f32.gmra.mrb[0].mxu0 %v412
    %v482 = vpop.f32.mrb[0].mxu0
    %v483 = vadd.f32 0.0, %v482
    %v484 = vpop.f32.mrb[0].mxu0
    %485 = vdwg.mxu0
    %486 = vrot.lane.b32.xlu0 %v174, 96
    %v487 = vpop.permute.xlu0 %486
    %v488 = vsel %vm183, %v174, 0
    %v490 = vsel %vm183, %v487, 0
    %492 = vmatprep.subr.mxu0 0.0
    %493 = vmatpush1.xpose.msra.mxu0 %v490
    %494 = vmatprep.subr.mxu0 0.0
    %495 = vmatpush1.xpose.msra.mxu0 0.0
    %496 = vmatprep.subr.mxu0 0.0
    %497 = vmatpush1.xpose.msra.mxu0 0.0
    %498 = vmatprep.subr.mxu0 0.0
    %499 = vmatpush1.xpose.msra.mxu0 0.0
    %500 = vmatprep.subr.mxu0 0.0
    %501 = vmatpush1.xpose.msra.mxu0 0.0
    %502 = vmatprep.subr.mxu0 0.0
    %503 = vmatpush1.xpose.msra.mxu0 0.0
    %504 = vmatprep.subr.mxu0 0.0
    %505 = vmatpush1.xpose.msra.mxu0 0.0
    %506 = vmatprep.subr.mxu0 0.0
    %507 = vmatpush1.xpose.msra.mxu0 0.0
    %508 = vmatprep.subr.mxu0 0.0
    %509 = vmatpush1.xpose.msra.mxu0 0.0
    %510 = vmatprep.subr.mxu0 0.0
    %511 = vmatpush1.xpose.msra.mxu0 0.0
    %512 = vmatprep.subr.mxu0 0.0
    %513 = vmatpush1.xpose.msra.mxu0 0.0
    %514 = vmatprep.subr.mxu0 0.0
    %515 = vmatpush1.xpose.msra.mxu0 0.0
    %516 = vmatprep.subr.mxu0 0.0
    %517 = vmatpush1.xpose.msra.mxu0 0.0
    %518 = vmatprep.subr.mxu0 0.0
    %519 = vmatpush1.xpose.msra.mxu0 0.0
    %520 = vmatprep.subr.mxu0 0.0
    %521 = vmatpush1.xpose.msra.mxu0 0.0
    %522 = vmatprep.subr.mxu0 0.0
    %523 = vmatpush1.xpose.msra.mxu0 0.0
    %524 = vmatprep.subr.mxu0 0.0
    %525 = vmatpush1.xpose.msra.mxu0 0.0
    %526 = vmatprep.subr.mxu0 0.0
    %527 = vmatpush1.xpose.msra.mxu0 0.0
    %528 = vmatprep.subr.mxu0 0.0
    %529 = vmatpush1.xpose.msra.mxu0 0.0
    %530 = vmatprep.subr.mxu0 0.0
    %531 = vmatpush1.xpose.msra.mxu0 0.0
    %532 = vmatprep.subr.mxu0 0.0
    %533 = vmatpush1.xpose.msra.mxu0 0.0
    %534 = vmatprep.subr.mxu0 0.0
    %535 = vmatpush1.xpose.msra.mxu0 0.0
    %536 = vmatprep.subr.mxu0 0.0
    %537 = vmatpush1.xpose.msra.mxu0 0.0
    %538 = vmatprep.subr.mxu0 0.0
    %539 = vmatpush1.xpose.msra.mxu0 0.0
    %540 = vmatprep.subr.mxu0 0.0
    %541 = vmatpush1.xpose.msra.mxu0 0.0
    %542 = vmatprep.subr.mxu0 0.0
    %543 = vmatpush1.xpose.msra.mxu0 0.0
    %544 = vmatprep.subr.mxu0 0.0
    %545 = vmatpush1.xpose.msra.mxu0 0.0
    %546 = vmatprep.subr.mxu0 0.0
    %547 = vmatpush1.xpose.msra.mxu0 0.0
    %548 = vmatprep.subr.mxu0 0.0
    %549 = vmatpush1.xpose.msra.mxu0 0.0
    %550 = vmatprep.subr.mxu0 0.0
    %551 = vmatpush1.xpose.msra.mxu0 0.0
    %552 = vmatprep.subr.mxu0 0.0
    %553 = vmatpush1.xpose.msra.mxu0 0.0
    %554 = vmatprep.subr.mxu0 0.0
    %555 = vmatpush1.xpose.msra.mxu0 0.0
    %556 = vmatprep.mubr.f32.mxu0 0.0
    %557 = vmatmul.mubr.f32.gmra.mrb[0].mxu0 %v488
    %v558 = vpop.f32.mrb[0].mxu0
    %v559 = vadd.f32 0.0, %v558
    %v560 = vpop.f32.mrb[0].mxu0
    %561 = vdwg.mxu0
    %562 = vrot.lane.b32.xlu0 %v176, 96
    %v563 = vpop.permute.xlu0 %562
    %v564 = vsel %vm183, %v176, 0
    %v566 = vsel %vm183, %v563, 0
    %568 = vmatprep.subr.mxu0 0.0
    %569 = vmatpush1.xpose.msra.mxu0 %v566
    %570 = vmatprep.subr.mxu0 0.0
    %571 = vmatpush1.xpose.msra.mxu0 0.0
    %572 = vmatprep.subr.mxu0 0.0
    %573 = vmatpush1.xpose.msra.mxu0 0.0
    %574 = vmatprep.subr.mxu0 0.0
    %575 = vmatpush1.xpose.msra.mxu0 0.0
    %576 = vmatprep.subr.mxu0 0.0
    %577 = vmatpush1.xpose.msra.mxu0 0.0
    %578 = vmatprep.subr.mxu0 0.0
    %579 = vmatpush1.xpose.msra.mxu0 0.0
    %580 = vmatprep.subr.mxu0 0.0
    %581 = vmatpush1.xpose.msra.mxu0 0.0
    %582 = vmatprep.subr.mxu0 0.0
    %583 = vmatpush1.xpose.msra.mxu0 0.0
    %584 = vmatprep.subr.mxu0 0.0
    %585 = vmatpush1.xpose.msra.mxu0 0.0
    %586 = vmatprep.subr.mxu0 0.0
    %587 = vmatpush1.xpose.msra.mxu0 0.0
    %588 = vmatprep.subr.mxu0 0.0
    %589 = vmatpush1.xpose.msra.mxu0 0.0
    %590 = vmatprep.subr.mxu0 0.0
    %591 = vmatpush1.xpose.msra.mxu0 0.0
    %592 = vmatprep.subr.mxu0 0.0
    %593 = vmatpush1.xpose.msra.mxu0 0.0
    %594 = vmatprep.subr.mxu0 0.0
    %595 = vmatpush1.xpose.msra.mxu0 0.0
    %596 = vmatprep.subr.mxu0 0.0
    %597 = vmatpush1.xpose.msra.mxu0 0.0
    %598 = vmatprep.subr.mxu0 0.0
    %599 = vmatpush1.xpose.msra.mxu0 0.0
    %600 = vmatprep.subr.mxu0 0.0
    %601 = vmatpush1.xpose.msra.mxu0 0.0
    %602 = vmatprep.subr.mxu0 0.0
    %603 = vmatpush1.xpose.msra.mxu0 0.0
    %604 = vmatprep.subr.mxu0 0.0
    %605 = vmatpush1.xpose.msra.mxu0 0.0
    %606 = vmatprep.subr.mxu0 0.0
    %607 = vmatpush1.xpose.msra.mxu0 0.0
    %608 = vmatprep.subr.mxu0 0.0
    %609 = vmatpush1.xpose.msra.mxu0 0.0
    %610 = vmatprep.subr.mxu0 0.0
    %611 = vmatpush1.xpose.msra.mxu0 0.0
    %612 = vmatprep.subr.mxu0 0.0
    %613 = vmatpush1.xpose.msra.mxu0 0.0
    %614 = vmatprep.subr.mxu0 0.0
    %615 = vmatpush1.xpose.msra.mxu0 0.0
    %616 = vmatprep.subr.mxu0 0.0
    %617 = vmatpush1.xpose.msra.mxu0 0.0
    %618 = vmatprep.subr.mxu0 0.0
    %619 = vmatpush1.xpose.msra.mxu0 0.0
    %620 = vmatprep.subr.mxu0 0.0
    %621 = vmatpush1.xpose.msra.mxu0 0.0
    %622 = vmatprep.subr.mxu0 0.0
    %623 = vmatpush1.xpose.msra.mxu0 0.0
    %624 = vmatprep.subr.mxu0 0.0
    %625 = vmatpush1.xpose.msra.mxu0 0.0
    %626 = vmatprep.subr.mxu0 0.0
    %627 = vmatpush1.xpose.msra.mxu0 0.0
    %628 = vmatprep.subr.mxu0 0.0
    %629 = vmatpush1.xpose.msra.mxu0 0.0
    %630 = vmatprep.subr.mxu0 0.0
    %631 = vmatpush1.xpose.msra.mxu0 0.0
    %632 = vmatprep.mubr.f32.mxu0 0.0
    %633 = vmatmul.mubr.f32.gmra.mrb[0].mxu0 %v564
    %v634 = vpop.f32.mrb[0].mxu0
    %v635 = vadd.f32 0.0, %v634
    %v636 = vpop.f32.mrb[0].mxu0
    %637 = vdwg.mxu0
    %638 = vrot.lane.b32.xlu0 %v178, 96
    %v639 = vpop.permute.xlu0 %638
    %v640 = vsel %vm183, %v178, 0
    %v642 = vsel %vm183, %v639, 0
    %644 = vmatprep.subr.mxu0 0.0
    %645 = vmatpush1.xpose.msra.mxu0 %v642
    %646 = vmatprep.subr.mxu0 0.0
    %647 = vmatpush1.xpose.msra.mxu0 0.0
    %648 = vmatprep.subr.mxu0 0.0
    %649 = vmatpush1.xpose.msra.mxu0 0.0
    %650 = vmatprep.subr.mxu0 0.0
    %651 = vmatpush1.xpose.msra.mxu0 0.0
    %652 = vmatprep.subr.mxu0 0.0
    %653 = vmatpush1.xpose.msra.mxu0 0.0
    %654 = vmatprep.subr.mxu0 0.0
    %655 = vmatpush1.xpose.msra.mxu0 0.0
    %656 = vmatprep.subr.mxu0 0.0
    %657 = vmatpush1.xpose.msra.mxu0 0.0
    %658 = vmatprep.subr.mxu0 0.0
    %659 = vmatpush1.xpose.msra.mxu0 0.0
    %660 = vmatprep.subr.mxu0 0.0
    %661 = vmatpush1.xpose.msra.mxu0 0.0
    %662 = vmatprep.subr.mxu0 0.0
    %663 = vmatpush1.xpose.msra.mxu0 0.0
    %664 = vmatprep.subr.mxu0 0.0
    %665 = vmatpush1.xpose.msra.mxu0 0.0
    %666 = vmatprep.subr.mxu0 0.0
    %667 = vmatpush1.xpose.msra.mxu0 0.0
    %668 = vmatprep.subr.mxu0 0.0
    %669 = vmatpush1.xpose.msra.mxu0 0.0
    %670 = vmatprep.subr.mxu0 0.0
    %671 = vmatpush1.xpose.msra.mxu0 0.0
    %672 = vmatprep.subr.mxu0 0.0
    %673 = vmatpush1.xpose.msra.mxu0 0.0
    %674 = vmatprep.subr.mxu0 0.0
    %675 = vmatpush1.xpose.msra.mxu0 0.0
    %676 = vmatprep.subr.mxu0 0.0
    %677 = vmatpush1.xpose.msra.mxu0 0.0
    %678 = vmatprep.subr.mxu0 0.0
    %679 = vmatpush1.xpose.msra.mxu0 0.0
    %680 = vmatprep.subr.mxu0 0.0
    %681 = vmatpush1.xpose.msra.mxu0 0.0
    %682 = vmatprep.subr.mxu0 0.0
    %683 = vmatpush1.xpose.msra.mxu0 0.0
    %684 = vmatprep.subr.mxu0 0.0
    %685 = vmatpush1.xpose.msra.mxu0 0.0
    %686 = vmatprep.subr.mxu0 0.0
    %687 = vmatpush1.xpose.msra.mxu0 0.0
    %688 = vmatprep.subr.mxu0 0.0
    %689 = vmatpush1.xpose.msra.mxu0 0.0
    %690 = vmatprep.subr.mxu0 0.0
    %691 = vmatpush1.xpose.msra.mxu0 0.0
    %692 = vmatprep.subr.mxu0 0.0
    %693 = vmatpush1.xpose.msra.mxu0 0.0
    %694 = vmatprep.subr.mxu0 0.0
    %695 = vmatpush1.xpose.msra.mxu0 0.0
    %696 = vmatprep.subr.mxu0 0.0
    %697 = vmatpush1.xpose.msra.mxu0 0.0
    %698 = vmatprep.subr.mxu0 0.0
    %699 = vmatpush1.xpose.msra.mxu0 0.0
    %700 = vmatprep.subr.mxu0 0.0
    %701 = vmatpush1.xpose.msra.mxu0 0.0
    %702 = vmatprep.subr.mxu0 0.0
    %703 = vmatpush1.xpose.msra.mxu0 0.0
    %704 = vmatprep.subr.mxu0 0.0
    %705 = vmatpush1.xpose.msra.mxu0 0.0
    %706 = vmatprep.subr.mxu0 0.0
    %707 = vmatpush1.xpose.msra.mxu0 0.0
    %708 = vmatprep.mubr.f32.mxu0 0.0
    %709 = vmatmul.mubr.f32.gmra.mrb[0].mxu0 %v640
    %v710 = vpop.f32.mrb[0].mxu0
    %v711 = vadd.f32 0.0, %v710
    %v712 = vpop.f32.mrb[0].mxu0
    %713 = vdwg.mxu0
    %714 = vrot.lane.b32.xlu0 %v180, 96
    %v715 = vpop.permute.xlu0 %714
    %v716 = vsel %vm183, %v180, 0
    %v718 = vsel %vm183, %v715, 0
    %720 = vmatprep.subr.mxu0 0.0
    %721 = vmatpush1.xpose.msra.mxu0 %v718
    %722 = vmatprep.subr.mxu0 0.0
    %723 = vmatpush1.xpose.msra.mxu0 0.0
    %724 = vmatprep.subr.mxu0 0.0
    %725 = vmatpush1.xpose.msra.mxu0 0.0
    %726 = vmatprep.subr.mxu0 0.0
    %727 = vmatpush1.xpose.msra.mxu0 0.0
    %728 = vmatprep.subr.mxu0 0.0
    %729 = vmatpush1.xpose.msra.mxu0 0.0
    %730 = vmatprep.subr.mxu0 0.0
    %731 = vmatpush1.xpose.msra.mxu0 0.0
    %732 = vmatprep.subr.mxu0 0.0
    %733 = vmatpush1.xpose.msra.mxu0 0.0
    %734 = vmatprep.subr.mxu0 0.0
    %735 = vmatpush1.xpose.msra.mxu0 0.0
    %736 = vmatprep.subr.mxu0 0.0
    %737 = vmatpush1.xpose.msra.mxu0 0.0
    %738 = vmatprep.subr.mxu0 0.0
    %739 = vmatpush1.xpose.msra.mxu0 0.0
    %740 = vmatprep.subr.mxu0 0.0
    %741 = vmatpush1.xpose.msra.mxu0 0.0
    %742 = vmatprep.subr.mxu0 0.0
    %743 = vmatpush1.xpose.msra.mxu0 0.0
    %744 = vmatprep.subr.mxu0 0.0
    %745 = vmatpush1.xpose.msra.mxu0 0.0
    %746 = vmatprep.subr.mxu0 0.0
    %747 = vmatpush1.xpose.msra.mxu0 0.0
    %748 = vmatprep.subr.mxu0 0.0
    %749 = vmatpush1.xpose.msra.mxu0 0.0
    %750 = vmatprep.subr.mxu0 0.0
    %751 = vmatpush1.xpose.msra.mxu0 0.0
    %752 = vmatprep.subr.mxu0 0.0
    %753 = vmatpush1.xpose.msra.mxu0 0.0
    %754 = vmatprep.subr.mxu0 0.0
    %755 = vmatpush1.xpose.msra.mxu0 0.0
    %756 = vmatprep.subr.mxu0 0.0
    %757 = vmatpush1.xpose.msra.mxu0 0.0
    %758 = vmatprep.subr.mxu0 0.0
    %759 = vmatpush1.xpose.msra.mxu0 0.0
    %760 = vmatprep.subr.mxu0 0.0
    %761 = vmatpush1.xpose.msra.mxu0 0.0
    %762 = vmatprep.subr.mxu0 0.0
    %763 = vmatpush1.xpose.msra.mxu0 0.0
    %764 = vmatprep.subr.mxu0 0.0
    %765 = vmatpush1.xpose.msra.mxu0 0.0
    %766 = vmatprep.subr.mxu0 0.0
    %767 = vmatpush1.xpose.msra.mxu0 0.0
    %768 = vmatprep.subr.mxu0 0.0
    %769 = vmatpush1.xpose.msra.mxu0 0.0
    %770 = vmatprep.subr.mxu0 0.0
    %771 = vmatpush1.xpose.msra.mxu0 0.0
    %772 = vmatprep.subr.mxu0 0.0
    %773 = vmatpush1.xpose.msra.mxu0 0.0
    %774 = vmatprep.subr.mxu0 0.0
    %775 = vmatpush1.xpose.msra.mxu0 0.0
    %776 = vmatprep.subr.mxu0 0.0
    %777 = vmatpush1.xpose.msra.mxu0 0.0
    %778 = vmatprep.subr.mxu0 0.0
    %779 = vmatpush1.xpose.msra.mxu0 0.0
    %780 = vmatprep.subr.mxu0 0.0
    %781 = vmatpush1.xpose.msra.mxu0 0.0
    %782 = vmatprep.subr.mxu0 0.0
    %783 = vmatpush1.xpose.msra.mxu0 0.0
    %784 = vmatprep.mubr.f32.mxu0 0.0
    %785 = vmatmul.mubr.f32.gmra.mrb[0].mxu0 %v716
    %v786 = vpop.f32.mrb[0].mxu0
    %v787 = vadd.f32 0.0, %v786
    %v788 = vpop.f32.mrb[0].mxu0
    %789 = vdwg.mxu0
    %v790 = vsel %vm183, %v255, -inf
    %791 = vmax.xlane.f32.xlu0 %v790
    %v792 = vpop.xlane.xlu0 %791
    %v793 = vsel %vm183, %v331, -inf
    %794 = vmax.xlane.f32.xlu0 %v793
    %v795 = vpop.xlane.xlu0 %794
    %v796 = vsel %vm183, %v407, -inf
    %797 = vmax.xlane.f32.xlu0 %v796
    %v798 = vpop.xlane.xlu0 %797
    %v799 = vsel %vm183, %v483, -inf
    %800 = vmax.xlane.f32.xlu0 %v799
    %v801 = vpop.xlane.xlu0 %800
    %v802 = vsel %vm183, %v559, -inf
    %803 = vmax.xlane.f32.xlu0 %v802
    %v804 = vpop.xlane.xlu0 %803
    %v805 = vsel %vm183, %v635, -inf
    %806 = vmax.xlane.f32.xlu0 %v805
    %v807 = vpop.xlane.xlu0 %806
    %v808 = vsel %vm183, %v711, -inf
    %809 = vmax.xlane.f32.xlu0 %v808
    %v810 = vpop.xlane.xlu0 %809
    %v811 = vsel %vm183, %v787, -inf
    %812 = vmax.xlane.f32.xlu0 %v811
    %v813 = vpop.xlane.xlu0 %812
    %v814 = vsub.f32 %v255, %v792
    %v815 = vsub.f32 %v331, %v795
    %v816 = vsub.f32 %v407, %v798
    %v817 = vsub.f32 %v483, %v801
    %v818 = vsub.f32 %v559, %v804
    %v819 = vsub.f32 %v635, %v807
    %v820 = vsub.f32 %v711, %v810
    %v821 = vsub.f32 %v787, %v813
    %v822 = vmul.f32 %v814, 1.442695
    %v823 = vpow.pop %v822
    %v824 = vmul.f32 %v815, 1.442695
    %v825 = vpow.pop %v824
    %v826 = vmul.f32 %v816, 1.442695
    %v827 = vpow.pop %v826
    %v828 = vmul.f32 %v817, 1.442695
    %v829 = vpow.pop %v828
    %v830 = vmul.f32 %v818, 1.442695
    %v831 = vpow.pop %v830
    %v832 = vmul.f32 %v819, 1.442695
    %v833 = vpow.pop %v832
    %v834 = vmul.f32 %v820, 1.442695
    %v835 = vpow.pop %v834
    %v836 = vmul.f32 %v821, 1.442695
    %v837 = vpow.pop %v836
    %v838 = vsel %vm183, %v823, 0.0
    %839 = vadd.xlane.f32.xlu0 %v838
    %v840 = vpop.xlane.xlu0 %839
    %v841 = vsel %vm183, %v825, 0.0
    %842 = vadd.xlane.f32.xlu0 %v841
    %v843 = vpop.xlane.xlu0 %842
    %v844 = vsel %vm183, %v827, 0.0
    %845 = vadd.xlane.f32.xlu0 %v844
    %v846 = vpop.xlane.xlu0 %845
    %v847 = vsel %vm183, %v829, 0.0
    %848 = vadd.xlane.f32.xlu0 %v847
    %v849 = vpop.xlane.xlu0 %848
    %v850 = vsel %vm183, %v831, 0.0
    %851 = vadd.xlane.f32.xlu0 %v850
    %v852 = vpop.xlane.xlu0 %851
    %v853 = vsel %vm183, %v833, 0.0
    %854 = vadd.xlane.f32.xlu0 %v853
    %v855 = vpop.xlane.xlu0 %854
    %v856 = vsel %vm183, %v835, 0.0
    %857 = vadd.xlane.f32.xlu0 %v856
    %v858 = vpop.xlane.xlu0 %857
    %v859 = vsel %vm183, %v837, 0.0
    %860 = vadd.xlane.f32.xlu0 %v859
    %v861 = vpop.xlane.xlu0 %860
    %v862 = vrcp.pop %v840
    %v863 = vmul.f32 %v823, %v862
    %v864 = vrcp.pop %v843
    %v865 = vmul.f32 %v825, %v864
    %v866 = vrcp.pop %v846
    %v867 = vmul.f32 %v827, %v866
    %v868 = vrcp.pop %v849
    %v869 = vmul.f32 %v829, %v868
    %v870 = vrcp.pop %v852
    %v871 = vmul.f32 %v831, %v870
    %v872 = vrcp.pop %v855
    %v873 = vmul.f32 %v833, %v872
    %v874 = vrcp.pop %v858
    %v875 = vmul.f32 %v835, %v874
    %v876 = vrcp.pop %v861
    %v877 = vmul.f32 %v837, %v876
    %878 = vrot.lane.b32.xlu0 %v159, 64
    %v879 = vpop.permute.xlu0 %878
    %v882 = vsel %vm183, %v863, 0
    %884 = vmatprep.subr.mxu0 0.0
    %885 = vmatpush1.msra.mxu0 %v879
    %886 = vmatprep.subr.mxu0 0.0
    %887 = vmatpush1.msra.mxu0 0.0
    %888 = vmatprep.subr.mxu0 0.0
    %889 = vmatpush1.msra.mxu0 0.0
    %890 = vmatprep.subr.mxu0 0.0
    %891 = vmatpush1.msra.mxu0 0.0
    %892 = vmatprep.subr.mxu0 0.0
    %893 = vmatpush1.msra.mxu0 0.0
    %894 = vmatprep.subr.mxu0 0.0
    %895 = vmatpush1.msra.mxu0 0.0
    %896 = vmatprep.subr.mxu0 0.0
    %897 = vmatpush1.msra.mxu0 0.0
    %898 = vmatprep.subr.mxu0 0.0
    %899 = vmatpush1.msra.mxu0 0.0
    %900 = vmatprep.subr.mxu0 0.0
    %901 = vmatpush1.msra.mxu0 0.0
    %902 = vmatprep.subr.mxu0 0.0
    %903 = vmatpush1.msra.mxu0 0.0
    %904 = vmatprep.subr.mxu0 0.0
    %905 = vmatpush1.msra.mxu0 0.0
    %906 = vmatprep.subr.mxu0 0.0
    %907 = vmatpush1.msra.mxu0 0.0
    %908 = vmatprep.subr.mxu0 0.0
    %909 = vmatpush1.msra.mxu0 0.0
    %910 = vmatprep.subr.mxu0 0.0
    %911 = vmatpush1.msra.mxu0 0.0
    %912 = vmatprep.subr.mxu0 0.0
    %913 = vmatpush1.msra.mxu0 0.0
    %914 = vmatprep.subr.mxu0 0.0
    %915 = vmatpush1.msra.mxu0 0.0
    %916 = vmatprep.subr.mxu0 0.0
    %917 = vmatpush1.msra.mxu0 0.0
    %918 = vmatprep.subr.mxu0 0.0
    %919 = vmatpush1.msra.mxu0 0.0
    %920 = vmatprep.subr.mxu0 0.0
    %921 = vmatpush1.msra.mxu0 0.0
    %922 = vmatprep.subr.mxu0 0.0
    %923 = vmatpush1.msra.mxu0 0.0
    %924 = vmatprep.subr.mxu0 0.0
    %925 = vmatpush1.msra.mxu0 0.0
    %926 = vmatprep.subr.mxu0 0.0
    %927 = vmatpush1.msra.mxu0 0.0
    %928 = vmatprep.subr.mxu0 0.0
    %929 = vmatpush1.msra.mxu0 0.0
    %930 = vmatprep.subr.mxu0 0.0
    %931 = vmatpush1.msra.mxu0 0.0
    %932 = vmatprep.subr.mxu0 0.0
    %933 = vmatpush1.msra.mxu0 0.0
    %934 = vmatprep.subr.mxu0 0.0
    %935 = vmatpush1.msra.mxu0 0.0
    %936 = vmatprep.subr.mxu0 0.0
    %937 = vmatpush1.msra.mxu0 0.0
    %938 = vmatprep.subr.mxu0 0.0
    %939 = vmatpush1.msra.mxu0 0.0
    %940 = vmatprep.subr.mxu0 0.0
    %941 = vmatpush1.msra.mxu0 0.0
    %942 = vmatprep.subr.mxu0 0.0
    %943 = vmatpush1.msra.mxu0 0.0
    %944 = vmatprep.subr.mxu0 0.0
    %945 = vmatpush1.msra.mxu0 0.0
    %946 = vmatprep.subr.mxu0 0.0
    %947 = vmatpush1.msra.mxu0 0.0
    %948 = vmatprep.mubr.f32.mxu0 0.0
    %949 = vmatmul.mubr.f32.gmra.mrb[0].mxu0 %v882
    %v950 = vpop.f32.mrb[0].mxu0
    %v951 = vadd.f32 0.0, %v950
    %v952 = vpop.f32.mrb[0].mxu0
    %953 = vdwg.mxu0
    %954 = vrot.lane.b32.xlu0 %v164, 64
    %v955 = vpop.permute.xlu0 %954
    %v958 = vsel %vm183, %v865, 0
    %960 = vmatprep.subr.mxu0 0.0
    %961 = vmatpush1.msra.mxu0 %v955
    %962 = vmatprep.subr.mxu0 0.0
    %963 = vmatpush1.msra.mxu0 0.0
    %964 = vmatprep.subr.mxu0 0.0
    %965 = vmatpush1.msra.mxu0 0.0
    %966 = vmatprep.subr.mxu0 0.0
    %967 = vmatpush1.msra.mxu0 0.0
    %968 = vmatprep.subr.mxu0 0.0
    %969 = vmatpush1.msra.mxu0 0.0
    %970 = vmatprep.subr.mxu0 0.0
    %971 = vmatpush1.msra.mxu0 0.0
    %972 = vmatprep.subr.mxu0 0.0
    %973 = vmatpush1.msra.mxu0 0.0
    %974 = vmatprep.subr.mxu0 0.0
    %975 = vmatpush1.msra.mxu0 0.0
    %976 = vmatprep.subr.mxu0 0.0
    %977 = vmatpush1.msra.mxu0 0.0
    %978 = vmatprep.subr.mxu0 0.0
    %979 = vmatpush1.msra.mxu0 0.0
    %980 = vmatprep.subr.mxu0 0.0
    %981 = vmatpush1.msra.mxu0 0.0
    %982 = vmatprep.subr.mxu0 0.0
    %983 = vmatpush1.msra.mxu0 0.0
    %984 = vmatprep.subr.mxu0 0.0
    %985 = vmatpush1.msra.mxu0 0.0
    %986 = vmatprep.subr.mxu0 0.0
    %987 = vmatpush1.msra.mxu0 0.0
    %988 = vmatprep.subr.mxu0 0.0
    %989 = vmatpush1.msra.mxu0 0.0
    %990 = vmatprep.subr.mxu0 0.0
    %991 = vmatpush1.msra.mxu0 0.0
    %992 = vmatprep.subr.mxu0 0.0
    %993 = vmatpush1.msra.mxu0 0.0
    %994 = vmatprep.subr.mxu0 0.0
    %995 = vmatpush1.msra.mxu0 0.0
    %996 = vmatprep.subr.mxu0 0.0
    %997 = vmatpush1.msra.mxu0 0.0
    %998 = vmatprep.subr.mxu0 0.0
    %999 = vmatpush1.msra.mxu0 0.0
    %1000 = vmatprep.subr.mxu0 0.0
    %1001 = vmatpush1.msra.mxu0 0.0
    %1002 = vmatprep.subr.mxu0 0.0
    %1003 = vmatpush1.msra.mxu0 0.0
    %1004 = vmatprep.subr.mxu0 0.0
    %1005 = vmatpush1.msra.mxu0 0.0
    %1006 = vmatprep.subr.mxu0 0.0
    %1007 = vmatpush1.msra.mxu0 0.0
    %1008 = vmatprep.subr.mxu0 0.0
    %1009 = vmatpush1.msra.mxu0 0.0
    %1010 = vmatprep.subr.mxu0 0.0
    %1011 = vmatpush1.msra.mxu0 0.0
    %1012 = vmatprep.subr.mxu0 0.0
    %1013 = vmatpush1.msra.mxu0 0.0
    %1014 = vmatprep.subr.mxu0 0.0
    %1015 = vmatpush1.msra.mxu0 0.0
    %1016 = vmatprep.subr.mxu0 0.0
    %1017 = vmatpush1.msra.mxu0 0.0
    %1018 = vmatprep.subr.mxu0 0.0
    %1019 = vmatpush1.msra.mxu0 0.0
    %1020 = vmatprep.subr.mxu0 0.0
    %1021 = vmatpush1.msra.mxu0 0.0
    %1022 = vmatprep.subr.mxu0 0.0
    %1023 = vmatpush1.msra.mxu0 0.0
    %1024 = vmatprep.mubr.f32.mxu0 0.0
    %1025 = vmatmul.mubr.f32.gmra.mrb[0].mxu0 %v958
    %v1026 = vpop.f32.mrb[0].mxu0
    %v1027 = vadd.f32 0.0, %v1026
    %v1028 = vpop.f32.mrb[0].mxu0
    %1029 = vdwg.mxu0
    %1030 = vrot.lane.b32.xlu0 %v170, 64
    %v1031 = vpop.permute.xlu0 %1030
    %v1034 = vsel %vm183, %v867, 0
    %1036 = vmatprep.subr.mxu0 0.0
    %1037 = vmatpush1.msra.mxu0 %v1031
    %1038 = vmatprep.subr.mxu0 0.0
    %1039 = vmatpush1.msra.mxu0 0.0
    %1040 = vmatprep.subr.mxu0 0.0
    %1041 = vmatpush1.msra.mxu0 0.0
    %1042 = vmatprep.subr.mxu0 0.0
    %1043 = vmatpush1.msra.mxu0 0.0
    %1044 = vmatprep.subr.mxu0 0.0
    %1045 = vmatpush1.msra.mxu0 0.0
    %1046 = vmatprep.subr.mxu0 0.0
    %1047 = vmatpush1.msra.mxu0 0.0
    %1048 = vmatprep.subr.mxu0 0.0
    %1049 = vmatpush1.msra.mxu0 0.0
    %1050 = vmatprep.subr.mxu0 0.0
    %1051 = vmatpush1.msra.mxu0 0.0
    %1052 = vmatprep.subr.mxu0 0.0
    %1053 = vmatpush1.msra.mxu0 0.0
    %1054 = vmatprep.subr.mxu0 0.0
    %1055 = vmatpush1.msra.mxu0 0.0
    %1056 = vmatprep.subr.mxu0 0.0
    %1057 = vmatpush1.msra.mxu0 0.0
    %1058 = vmatprep.subr.mxu0 0.0
    %1059 = vmatpush1.msra.mxu0 0.0
    %1060 = vmatprep.subr.mxu0 0.0
    %1061 = vmatpush1.msra.mxu0 0.0
    %1062 = vmatprep.subr.mxu0 0.0
    %1063 = vmatpush1.msra.mxu0 0.0
    %1064 = vmatprep.subr.mxu0 0.0
    %1065 = vmatpush1.msra.mxu0 0.0
    %1066 = vmatprep.subr.mxu0 0.0
    %1067 = vmatpush1.msra.mxu0 0.0
    %1068 = vmatprep.subr.mxu0 0.0
    %1069 = vmatpush1.msra.mxu0 0.0
    %1070 = vmatprep.subr.mxu0 0.0
    %1071 = vmatpush1.msra.mxu0 0.0
    %1072 = vmatprep.subr.mxu0 0.0
    %1073 = vmatpush1.msra.mxu0 0.0
    %1074 = vmatprep.subr.mxu0 0.0
    %1075 = vmatpush1.msra.mxu0 0.0
    %1076 = vmatprep.subr.mxu0 0.0
    %1077 = vmatpush1.msra.mxu0 0.0
    %1078 = vmatprep.subr.mxu0 0.0
    %1079 = vmatpush1.msra.mxu0 0.0
    %1080 = vmatprep.subr.mxu0 0.0
    %1081 = vmatpush1.msra.mxu0 0.0
    %1082 = vmatprep.subr.mxu0 0.0
    %1083 = vmatpush1.msra.mxu0 0.0
    %1084 = vmatprep.subr.mxu0 0.0
    %1085 = vmatpush1.msra.mxu0 0.0
    %1086 = vmatprep.subr.mxu0 0.0
    %1087 = vmatpush1.msra.mxu0 0.0
    %1088 = vmatprep.subr.mxu0 0.0
    %1089 = vmatpush1.msra.mxu0 0.0
    %1090 = vmatprep.subr.mxu0 0.0
    %1091 = vmatpush1.msra.mxu0 0.0
    %1092 = vmatprep.subr.mxu0 0.0
    %1093 = vmatpush1.msra.mxu0 0.0
    %1094 = vmatprep.subr.mxu0 0.0
    %1095 = vmatpush1.msra.mxu0 0.0
    %1096 = vmatprep.subr.mxu0 0.0
    %1097 = vmatpush1.msra.mxu0 0.0
    %1098 = vmatprep.subr.mxu0 0.0
    %1099 = vmatpush1.msra.mxu0 0.0
    %1100 = vmatprep.mubr.f32.mxu0 0.0
    %1101 = vmatmul.mubr.f32.gmra.mrb[0].mxu0 %v1034
    %v1102 = vpop.f32.mrb[0].mxu0
    %v1103 = vadd.f32 0.0, %v1102
    %v1104 = vpop.f32.mrb[0].mxu0
    %1105 = vdwg.mxu0
    %1106 = vrot.lane.b32.xlu0 %v172, 64
    %v1107 = vpop.permute.xlu0 %1106
    %v1110 = vsel %vm183, %v869, 0
    %1112 = vmatprep.subr.mxu0 0.0
    %1113 = vmatpush1.msra.mxu0 %v1107
    %1114 = vmatprep.subr.mxu0 0.0
    %1115 = vmatpush1.msra.mxu0 0.0
    %1116 = vmatprep.subr.mxu0 0.0
    %1117 = vmatpush1.msra.mxu0 0.0
    %1118 = vmatprep.subr.mxu0 0.0
    %1119 = vmatpush1.msra.mxu0 0.0
    %1120 = vmatprep.subr.mxu0 0.0
    %1121 = vmatpush1.msra.mxu0 0.0
    %1122 = vmatprep.subr.mxu0 0.0
    %1123 = vmatpush1.msra.mxu0 0.0
    %1124 = vmatprep.subr.mxu0 0.0
    %1125 = vmatpush1.msra.mxu0 0.0
    %1126 = vmatprep.subr.mxu0 0.0
    %1127 = vmatpush1.msra.mxu0 0.0
    %1128 = vmatprep.subr.mxu0 0.0
    %1129 = vmatpush1.msra.mxu0 0.0
    %1130 = vmatprep.subr.mxu0 0.0
    %1131 = vmatpush1.msra.mxu0 0.0
    %1132 = vmatprep.subr.mxu0 0.0
    %1133 = vmatpush1.msra.mxu0 0.0
    %1134 = vmatprep.subr.mxu0 0.0
    %1135 = vmatpush1.msra.mxu0 0.0
    %1136 = vmatprep.subr.mxu0 0.0
    %1137 = vmatpush1.msra.mxu0 0.0
    %1138 = vmatprep.subr.mxu0 0.0
    %1139 = vmatpush1.msra.mxu0 0.0
    %1140 = vmatprep.subr.mxu0 0.0
    %1141 = vmatpush1.msra.mxu0 0.0
    %1142 = vmatprep.subr.mxu0 0.0
    %1143 = vmatpush1.msra.mxu0 0.0
    %1144 = vmatprep.subr.mxu0 0.0
    %1145 = vmatpush1.msra.mxu0 0.0
    %1146 = vmatprep.subr.mxu0 0.0
    %1147 = vmatpush1.msra.mxu0 0.0
    %1148 = vmatprep.subr.mxu0 0.0
    %1149 = vmatpush1.msra.mxu0 0.0
    %1150 = vmatprep.subr.mxu0 0.0
    %1151 = vmatpush1.msra.mxu0 0.0
    %1152 = vmatprep.subr.mxu0 0.0
    %1153 = vmatpush1.msra.mxu0 0.0
    %1154 = vmatprep.subr.mxu0 0.0
    %1155 = vmatpush1.msra.mxu0 0.0
    %1156 = vmatprep.subr.mxu0 0.0
    %1157 = vmatpush1.msra.mxu0 0.0
    %1158 = vmatprep.subr.mxu0 0.0
    %1159 = vmatpush1.msra.mxu0 0.0
    %1160 = vmatprep.subr.mxu0 0.0
    %1161 = vmatpush1.msra.mxu0 0.0
    %1162 = vmatprep.subr.mxu0 0.0
    %1163 = vmatpush1.msra.mxu0 0.0
    %1164 = vmatprep.subr.mxu0 0.0
    %1165 = vmatpush1.msra.mxu0 0.0
    %1166 = vmatprep.subr.mxu0 0.0
    %1167 = vmatpush1.msra.mxu0 0.0
    %1168 = vmatprep.subr.mxu0 0.0
    %1169 = vmatpush1.msra.mxu0 0.0
    %1170 = vmatprep.subr.mxu0 0.0
    %1171 = vmatpush1.msra.mxu0 0.0
    %1172 = vmatprep.subr.mxu0 0.0
    %1173 = vmatpush1.msra.mxu0 0.0
    %1174 = vmatprep.subr.mxu0 0.0
    %1175 = vmatpush1.msra.mxu0 0.0
    %1176 = vmatprep.mubr.f32.mxu0 0.0
    %1177 = vmatmul.mubr.f32.gmra.mrb[0].mxu0 %v1110
    %v1178 = vpop.f32.mrb[0].mxu0
    %v1179 = vadd.f32 0.0, %v1178
    %v1180 = vpop.f32.mrb[0].mxu0
    %1181 = vdwg.mxu0
    %1182 = vrot.lane.b32.xlu0 %v174, 64
    %v1183 = vpop.permute.xlu0 %1182
    %v1186 = vsel %vm183, %v871, 0
    %1188 = vmatprep.subr.mxu0 0.0
    %1189 = vmatpush1.msra.mxu0 %v1183
    %1190 = vmatprep.subr.mxu0 0.0
    %1191 = vmatpush1.msra.mxu0 0.0
    %1192 = vmatprep.subr.mxu0 0.0
    %1193 = vmatpush1.msra.mxu0 0.0
    %1194 = vmatprep.subr.mxu0 0.0
    %1195 = vmatpush1.msra.mxu0 0.0
    %1196 = vmatprep.subr.mxu0 0.0
    %1197 = vmatpush1.msra.mxu0 0.0
    %1198 = vmatprep.subr.mxu0 0.0
    %1199 = vmatpush1.msra.mxu0 0.0
    %1200 = vmatprep.subr.mxu0 0.0
    %1201 = vmatpush1.msra.mxu0 0.0
    %1202 = vmatprep.subr.mxu0 0.0
    %1203 = vmatpush1.msra.mxu0 0.0
    %1204 = vmatprep.subr.mxu0 0.0
    %1205 = vmatpush1.msra.mxu0 0.0
    %1206 = vmatprep.subr.mxu0 0.0
    %1207 = vmatpush1.msra.mxu0 0.0
    %1208 = vmatprep.subr.mxu0 0.0
    %1209 = vmatpush1.msra.mxu0 0.0
    %1210 = vmatprep.subr.mxu0 0.0
    %1211 = vmatpush1.msra.mxu0 0.0
    %1212 = vmatprep.subr.mxu0 0.0
    %1213 = vmatpush1.msra.mxu0 0.0
    %1214 = vmatprep.subr.mxu0 0.0
    %1215 = vmatpush1.msra.mxu0 0.0
    %1216 = vmatprep.subr.mxu0 0.0
    %1217 = vmatpush1.msra.mxu0 0.0
    %1218 = vmatprep.subr.mxu0 0.0
    %1219 = vmatpush1.msra.mxu0 0.0
    %1220 = vmatprep.subr.mxu0 0.0
    %1221 = vmatpush1.msra.mxu0 0.0
    %1222 = vmatprep.subr.mxu0 0.0
    %1223 = vmatpush1.msra.mxu0 0.0
    %1224 = vmatprep.subr.mxu0 0.0
    %1225 = vmatpush1.msra.mxu0 0.0
    %1226 = vmatprep.subr.mxu0 0.0
    %1227 = vmatpush1.msra.mxu0 0.0
    %1228 = vmatprep.subr.mxu0 0.0
    %1229 = vmatpush1.msra.mxu0 0.0
    %1230 = vmatprep.subr.mxu0 0.0
    %1231 = vmatpush1.msra.mxu0 0.0
    %1232 = vmatprep.subr.mxu0 0.0
    %1233 = vmatpush1.msra.mxu0 0.0
    %1234 = vmatprep.subr.mxu0 0.0
    %1235 = vmatpush1.msra.mxu0 0.0
    %1236 = vmatprep.subr.mxu0 0.0
    %1237 = vmatpush1.msra.mxu0 0.0
    %1238 = vmatprep.subr.mxu0 0.0
    %1239 = vmatpush1.msra.mxu0 0.0
    %1240 = vmatprep.subr.mxu0 0.0
    %1241 = vmatpush1.msra.mxu0 0.0
    %1242 = vmatprep.subr.mxu0 0.0
    %1243 = vmatpush1.msra.mxu0 0.0
    %1244 = vmatprep.subr.mxu0 0.0
    %1245 = vmatpush1.msra.mxu0 0.0
    %1246 = vmatprep.subr.mxu0 0.0
    %1247 = vmatpush1.msra.mxu0 0.0
    %1248 = vmatprep.subr.mxu0 0.0
    %1249 = vmatpush1.msra.mxu0 0.0
    %1250 = vmatprep.subr.mxu0 0.0
    %1251 = vmatpush1.msra.mxu0 0.0
    %1252 = vmatprep.mubr.f32.mxu0 0.0
    %1253 = vmatmul.mubr.f32.gmra.mrb[0].mxu0 %v1186
    %v1254 = vpop.f32.mrb[0].mxu0
    %v1255 = vadd.f32 0.0, %v1254
    %v1256 = vpop.f32.mrb[0].mxu0
    %1257 = vdwg.mxu0
    %1258 = vrot.lane.b32.xlu0 %v176, 64
    %v1259 = vpop.permute.xlu0 %1258
    %v1262 = vsel %vm183, %v873, 0
    %1264 = vmatprep.subr.mxu0 0.0
    %1265 = vmatpush1.msra.mxu0 %v1259
    %1266 = vmatprep.subr.mxu0 0.0
    %1267 = vmatpush1.msra.mxu0 0.0
    %1268 = vmatprep.subr.mxu0 0.0
    %1269 = vmatpush1.msra.mxu0 0.0
    %1270 = vmatprep.subr.mxu0 0.0
    %1271 = vmatpush1.msra.mxu0 0.0
    %1272 = vmatprep.subr.mxu0 0.0
    %1273 = vmatpush1.msra.mxu0 0.0
    %1274 = vmatprep.subr.mxu0 0.0
    %1275 = vmatpush1.msra.mxu0 0.0
    %1276 = vmatprep.subr.mxu0 0.0
    %1277 = vmatpush1.msra.mxu0 0.0
    %1278 = vmatprep.subr.mxu0 0.0
    %1279 = vmatpush1.msra.mxu0 0.0
    %1280 = vmatprep.subr.mxu0 0.0
    %1281 = vmatpush1.msra.mxu0 0.0
    %1282 = vmatprep.subr.mxu0 0.0
    %1283 = vmatpush1.msra.mxu0 0.0
    %1284 = vmatprep.subr.mxu0 0.0
    %1285 = vmatpush1.msra.mxu0 0.0
    %1286 = vmatprep.subr.mxu0 0.0
    %1287 = vmatpush1.msra.mxu0 0.0
    %1288 = vmatprep.subr.mxu0 0.0
    %1289 = vmatpush1.msra.mxu0 0.0
    %1290 = vmatprep.subr.mxu0 0.0
    %1291 = vmatpush1.msra.mxu0 0.0
    %1292 = vmatprep.subr.mxu0 0.0
    %1293 = vmatpush1.msra.mxu0 0.0
    %1294 = vmatprep.subr.mxu0 0.0
    %1295 = vmatpush1.msra.mxu0 0.0
    %1296 = vmatprep.subr.mxu0 0.0
    %1297 = vmatpush1.msra.mxu0 0.0
    %1298 = vmatprep.subr.mxu0 0.0
    %1299 = vmatpush1.msra.mxu0 0.0
    %1300 = vmatprep.subr.mxu0 0.0
    %1301 = vmatpush1.msra.mxu0 0.0
    %1302 = vmatprep.subr.mxu0 0.0
    %1303 = vmatpush1.msra.mxu0 0.0
    %1304 = vmatprep.subr.mxu0 0.0
    %1305 = vmatpush1.msra.mxu0 0.0
    %1306 = vmatprep.subr.mxu0 0.0
    %1307 = vmatpush1.msra.mxu0 0.0
    %1308 = vmatprep.subr.mxu0 0.0
    %1309 = vmatpush1.msra.mxu0 0.0
    %1310 = vmatprep.subr.mxu0 0.0
    %1311 = vmatpush1.msra.mxu0 0.0
    %1312 = vmatprep.subr.mxu0 0.0
    %1313 = vmatpush1.msra.mxu0 0.0
    %1314 = vmatprep.subr.mxu0 0.0
    %1315 = vmatpush1.msra.mxu0 0.0
    %1316 = vmatprep.subr.mxu0 0.0
    %1317 = vmatpush1.msra.mxu0 0.0
    %1318 = vmatprep.subr.mxu0 0.0
    %1319 = vmatpush1.msra.mxu0 0.0
    %1320 = vmatprep.subr.mxu0 0.0
    %1321 = vmatpush1.msra.mxu0 0.0
    %1322 = vmatprep.subr.mxu0 0.0
    %1323 = vmatpush1.msra.mxu0 0.0
    %1324 = vmatprep.subr.mxu0 0.0
    %1325 = vmatpush1.msra.mxu0 0.0
    %1326 = vmatprep.subr.mxu0 0.0
    %1327 = vmatpush1.msra.mxu0 0.0
    %1328 = vmatprep.mubr.f32.mxu0 0.0
    %1329 = vmatmul.mubr.f32.gmra.mrb[0].mxu0 %v1262
    %v1330 = vpop.f32.mrb[0].mxu0
    %v1331 = vadd.f32 0.0, %v1330
    %v1332 = vpop.f32.mrb[0].mxu0
    %1333 = vdwg.mxu0
    %1334 = vrot.lane.b32.xlu0 %v178, 64
    %v1335 = vpop.permute.xlu0 %1334
    %v1338 = vsel %vm183, %v875, 0
    %1340 = vmatprep.subr.mxu0 0.0
    %1341 = vmatpush1.msra.mxu0 %v1335
    %1342 = vmatprep.subr.mxu0 0.0
    %1343 = vmatpush1.msra.mxu0 0.0
    %1344 = vmatprep.subr.mxu0 0.0
    %1345 = vmatpush1.msra.mxu0 0.0
    %1346 = vmatprep.subr.mxu0 0.0
    %1347 = vmatpush1.msra.mxu0 0.0
    %1348 = vmatprep.subr.mxu0 0.0
    %1349 = vmatpush1.msra.mxu0 0.0
    %1350 = vmatprep.subr.mxu0 0.0
    %1351 = vmatpush1.msra.mxu0 0.0
    %1352 = vmatprep.subr.mxu0 0.0
    %1353 = vmatpush1.msra.mxu0 0.0
    %1354 = vmatprep.subr.mxu0 0.0
    %1355 = vmatpush1.msra.mxu0 0.0
    %1356 = vmatprep.subr.mxu0 0.0
    %1357 = vmatpush1.msra.mxu0 0.0
    %1358 = vmatprep.subr.mxu0 0.0
    %1359 = vmatpush1.msra.mxu0 0.0
    %1360 = vmatprep.subr.mxu0 0.0
    %1361 = vmatpush1.msra.mxu0 0.0
    %1362 = vmatprep.subr.mxu0 0.0
    %1363 = vmatpush1.msra.mxu0 0.0
    %1364 = vmatprep.subr.mxu0 0.0
    %1365 = vmatpush1.msra.mxu0 0.0
    %1366 = vmatprep.subr.mxu0 0.0
    %1367 = vmatpush1.msra.mxu0 0.0
    %1368 = vmatprep.subr.mxu0 0.0
    %1369 = vmatpush1.msra.mxu0 0.0
    %1370 = vmatprep.subr.mxu0 0.0
    %1371 = vmatpush1.msra.mxu0 0.0
    %1372 = vmatprep.subr.mxu0 0.0
    %1373 = vmatpush1.msra.mxu0 0.0
    %1374 = vmatprep.subr.mxu0 0.0
    %1375 = vmatpush1.msra.mxu0 0.0
    %1376 = vmatprep.subr.mxu0 0.0
    %1377 = vmatpush1.msra.mxu0 0.0
    %1378 = vmatprep.subr.mxu0 0.0
    %1379 = vmatpush1.msra.mxu0 0.0
    %1380 = vmatprep.subr.mxu0 0.0
    %1381 = vmatpush1.msra.mxu0 0.0
    %1382 = vmatprep.subr.mxu0 0.0
    %1383 = vmatpush1.msra.mxu0 0.0
    %1384 = vmatprep.subr.mxu0 0.0
    %1385 = vmatpush1.msra.mxu0 0.0
    %1386 = vmatprep.subr.mxu0 0.0
    %1387 = vmatpush1.msra.mxu0 0.0
    %1388 = vmatprep.subr.mxu0 0.0
    %1389 = vmatpush1.msra.mxu0 0.0
    %1390 = vmatprep.subr.mxu0 0.0
    %1391 = vmatpush1.msra.mxu0 0.0
    %1392 = vmatprep.subr.mxu0 0.0
    %1393 = vmatpush1.msra.mxu0 0.0
    %1394 = vmatprep.subr.mxu0 0.0
    %1395 = vmatpush1.msra.mxu0 0.0
    %1396 = vmatprep.subr.mxu0 0.0
    %1397 = vmatpush1.msra.mxu0 0.0
    %1398 = vmatprep.subr.mxu0 0.0
    %1399 = vmatpush1.msra.mxu0 0.0
    %1400 = vmatprep.subr.mxu0 0.0
    %1401 = vmatpush1.msra.mxu0 0.0
    %1402 = vmatprep.subr.mxu0 0.0
    %1403 = vmatpush1.msra.mxu0 0.0
    %1404 = vmatprep.mubr.f32.mxu0 0.0
    %1405 = vmatmul.mubr.f32.gmra.mrb[0].mxu0 %v1338
    %v1406 = vpop.f32.mrb[0].mxu0
    %v1407 = vadd.f32 0.0, %v1406
    %v1408 = vpop.f32.mrb[0].mxu0
    %1409 = vdwg.mxu0
    %1410 = vrot.lane.b32.xlu0 %v180, 64
    %v1411 = vpop.permute.xlu0 %1410
    %v1414 = vsel %vm183, %v877, 0
    %1416 = vmatprep.subr.mxu0 0.0
    %1417 = vmatpush1.msra.mxu0 %v1411
    %1418 = vmatprep.subr.mxu0 0.0
    %1419 = vmatpush1.msra.mxu0 0.0
    %1420 = vmatprep.subr.mxu0 0.0
    %1421 = vmatpush1.msra.mxu0 0.0
    %1422 = vmatprep.subr.mxu0 0.0
    %1423 = vmatpush1.msra.mxu0 0.0
    %1424 = vmatprep.subr.mxu0 0.0
    %1425 = vmatpush1.msra.mxu0 0.0
    %1426 = vmatprep.subr.mxu0 0.0
    %1427 = vmatpush1.msra.mxu0 0.0
    %1428 = vmatprep.subr.mxu0 0.0
    %1429 = vmatpush1.msra.mxu0 0.0
    %1430 = vmatprep.subr.mxu0 0.0
    %1431 = vmatpush1.msra.mxu0 0.0
    %1432 = vmatprep.subr.mxu0 0.0
    %1433 = vmatpush1.msra.mxu0 0.0
    %1434 = vmatprep.subr.mxu0 0.0
    %1435 = vmatpush1.msra.mxu0 0.0
    %1436 = vmatprep.subr.mxu0 0.0
    %1437 = vmatpush1.msra.mxu0 0.0
    %1438 = vmatprep.subr.mxu0 0.0
    %1439 = vmatpush1.msra.mxu0 0.0
    %1440 = vmatprep.subr.mxu0 0.0
    %1441 = vmatpush1.msra.mxu0 0.0
    %1442 = vmatprep.subr.mxu0 0.0
    %1443 = vmatpush1.msra.mxu0 0.0
    %1444 = vmatprep.subr.mxu0 0.0
    %1445 = vmatpush1.msra.mxu0 0.0
    %1446 = vmatprep.subr.mxu0 0.0
    %1447 = vmatpush1.msra.mxu0 0.0
    %1448 = vmatprep.subr.mxu0 0.0
    %1449 = vmatpush1.msra.mxu0 0.0
    %1450 = vmatprep.subr.mxu0 0.0
    %1451 = vmatpush1.msra.mxu0 0.0
    %1452 = vmatprep.subr.mxu0 0.0
    %1453 = vmatpush1.msra.mxu0 0.0
    %1454 = vmatprep.subr.mxu0 0.0
    %1455 = vmatpush1.msra.mxu0 0.0
    %1456 = vmatprep.subr.mxu0 0.0
    %1457 = vmatpush1.msra.mxu0 0.0
    %1458 = vmatprep.subr.mxu0 0.0
    %1459 = vmatpush1.msra.mxu0 0.0
    %1460 = vmatprep.subr.mxu0 0.0
    %1461 = vmatpush1.msra.mxu0 0.0
    %1462 = vmatprep.subr.mxu0 0.0
    %1463 = vmatpush1.msra.mxu0 0.0
    %1464 = vmatprep.subr.mxu0 0.0
    %1465 = vmatpush1.msra.mxu0 0.0
    %1466 = vmatprep.subr.mxu0 0.0
    %1467 = vmatpush1.msra.mxu0 0.0
    %1468 = vmatprep.subr.mxu0 0.0
    %1469 = vmatpush1.msra.mxu0 0.0
    %1470 = vmatprep.subr.mxu0 0.0
    %1471 = vmatpush1.msra.mxu0 0.0
    %1472 = vmatprep.subr.mxu0 0.0
    %1473 = vmatpush1.msra.mxu0 0.0
    %1474 = vmatprep.subr.mxu0 0.0
    %1475 = vmatpush1.msra.mxu0 0.0
    %1476 = vmatprep.subr.mxu0 0.0
    %1477 = vmatpush1.msra.mxu0 0.0
    %1478 = vmatprep.subr.mxu0 0.0
    %1479 = vmatpush1.msra.mxu0 0.0
    %1480 = vmatprep.mubr.f32.mxu0 0.0
    %1481 = vmatmul.mubr.f32.gmra.mrb[0].mxu0 %v1414
    %v1482 = vpop.f32.mrb[0].mxu0
    %v1483 = vadd.f32 0.0, %v1482
    %v1484 = vpop.f32.mrb[0].mxu0
    %1485 = vdwg.mxu0
    %1488 = vrot.lane.b32.xlu0 %v1103, 8
    %v1489 = vpop.permute.xlu0 %1488
    %1490 = vrot.lane.b32.xlu0 %v1179, 8
    %v1491 = vpop.permute.xlu0 %1490
    %1496 = vrot.lane.b32.xlu0 %v1255, 16
    %v1497 = vpop.permute.xlu0 %1496
    %1498 = vrot.lane.b32.xlu0 %v1331, 16
    %v1499 = vpop.permute.xlu0 %1498
    %1504 = vrot.lane.b32.xlu0 %v1407, 24
    %v1505 = vpop.permute.xlu0 %1504
    %1506 = vrot.lane.b32.xlu0 %v1483, 24
    %v1507 = vpop.permute.xlu0 %1506
    %v1510 = vsel %vm183, %v951, %v1489
    %v1511 = vsel %vm183, %v1027, %v1491
    %vm1512 = vcmask 130048
    %v1513 = vsel %vm1512, %v1510, %v1497
    %v1514 = vsel %vm1512, %v1511, %v1499
    %vm1515 = vcmask 195584
    %v1516 = vsel %vm1515, %v1513, %v1505
    %v1517 = vsel %vm1515, %v1514, %v1507
    %v1518 = vlaneseq
    %v1519 = vshrl.u32 %v1518, 7
    %v1520 = vsub.s32 1, %v1519
    %v1521 = vrot.slane %v58, %v1520
    %v1523 = vsel %vm85, %v1516, 0
    %v1526 = vsel %vm85, %v1517, 0
    %1528 = vmatprep.subr.mxu0 0.0
    %1529 = vmatpush1.msra.mxu0 %v65
    %1530 = vmatprep.subr.mxu0 0.0
    %1531 = vmatpush1.msra.mxu0 %v66
    %1532 = vmatprep.subr.mxu0 0.0
    %1533 = vmatpush1.msra.mxu0 %v67
    %1534 = vmatprep.subr.mxu0 0.0
    %1535 = vmatpush1.msra.mxu0 %v68
    %1536 = vmatprep.subr.mxu0 0.0
    %1537 = vmatpush1.msra.mxu0 0.0
    %1538 = vmatprep.subr.mxu0 0.0
    %1539 = vmatpush1.msra.mxu0 0.0
    %1540 = vmatprep.subr.mxu0 0.0
    %1541 = vmatpush1.msra.mxu0 0.0
    %1542 = vmatprep.subr.mxu0 0.0
    %1543 = vmatpush1.msra.mxu0 0.0
    %1544 = vmatprep.subr.mxu0 0.0
    %1545 = vmatpush1.msra.mxu0 0.0
    %1546 = vmatprep.subr.mxu0 0.0
    %1547 = vmatpush1.msra.mxu0 0.0
    %1548 = vmatprep.subr.mxu0 0.0
    %1549 = vmatpush1.msra.mxu0 0.0
    %1550 = vmatprep.subr.mxu0 0.0
    %1551 = vmatpush1.msra.mxu0 0.0
    %1552 = vmatprep.subr.mxu0 0.0
    %1553 = vmatpush1.msra.mxu0 0.0
    %1554 = vmatprep.subr.mxu0 0.0
    %1555 = vmatpush1.msra.mxu0 0.0
    %1556 = vmatprep.subr.mxu0 0.0
    %1557 = vmatpush1.msra.mxu0 0.0
    %1558 = vmatprep.subr.mxu0 0.0
    %1559 = vmatpush1.msra.mxu0 0.0
    %1560 = vmatprep.subr.mxu0 0.0
    %1561 = vmatpush1.msra.mxu0 0.0
    %1562 = vmatprep.subr.mxu0 0.0
    %1563 = vmatpush1.msra.mxu0 0.0
    %1564 = vmatprep.subr.mxu0 0.0
    %1565 = vmatpush1.msra.mxu0 0.0
    %1566 = vmatprep.subr.mxu0 0.0
    %1567 = vmatpush1.msra.mxu0 0.0
    %1568 = vmatprep.subr.mxu0 0.0
    %1569 = vmatpush1.msra.mxu0 0.0
    %1570 = vmatprep.subr.mxu0 0.0
    %1571 = vmatpush1.msra.mxu0 0.0
    %1572 = vmatprep.subr.mxu0 0.0
    %1573 = vmatpush1.msra.mxu0 0.0
    %1574 = vmatprep.subr.mxu0 0.0
    %1575 = vmatpush1.msra.mxu0 0.0
    %1576 = vmatprep.subr.mxu0 0.0
    %1577 = vmatpush1.msra.mxu0 0.0
    %1578 = vmatprep.subr.mxu0 0.0
    %1579 = vmatpush1.msra.mxu0 0.0
    %1580 = vmatprep.subr.mxu0 0.0
    %1581 = vmatpush1.msra.mxu0 0.0
    %1582 = vmatprep.subr.mxu0 0.0
    %1583 = vmatpush1.msra.mxu0 0.0
    %1584 = vmatprep.subr.mxu0 0.0
    %1585 = vmatpush1.msra.mxu0 0.0
    %1586 = vmatprep.subr.mxu0 0.0
    %1587 = vmatpush1.msra.mxu0 0.0
    %1588 = vmatprep.subr.mxu0 0.0
    %1589 = vmatpush1.msra.mxu0 0.0
    %1590 = vmatprep.subr.mxu0 0.0
    %1591 = vmatpush1.msra.mxu0 0.0
    %1592 = vmatprep.mubr.f32.mxu0 0.0
    %1593 = vmatmul.mubr.f32.gmra.mrb[0].mxu0 %v1523
    %v1594 = vpop.f32.mrb[0].mxu0
    %v1595 = vadd.f32 %v1521, %v1594
    %v1596 = vpop.f32.mrb[0].mxu0
    %1597 = vmatprep.mubr.f32.mxu0 0.0
    %1598 = vmatmul.mubr.f32.gmra.mrb[0].mxu0 %v1526
    %v1599 = vpop.f32.mrb[0].mxu0
    %v1600 = vadd.f32 %v1521, %v1599
    %v1601 = vpop.f32.mrb[0].mxu0
    %1602 = vdwg.mxu0
    %v1603 = vadd.f32 %v56, %v1595
    %v1604 = vadd.f32 %v57, %v1600
    %v1605 = vsel %vm85, %v1603, 0.0
    %1606 = vadd.xlane.f32.xlu0 %v1605
    %v1607 = vpop.xlane.xlu0 %1606
    %v1608 = vsel %vm85, %v1604, 0.0
    %1609 = vadd.xlane.f32.xlu0 %v1608
    %v1610 = vpop.xlane.xlu0 %1609
    %v1611 = vrcp.pop 32.0
    %v1612 = vmul.f32 %v1607, %v1611
    %v1613 = vmul.f32 %v1610, %v1611
    %v1614 = vsub.f32 %v1603, %v1612
    %v1615 = vsub.f32 %v1604, %v1613
    %v1616 = vmul.f32 %v1614, %v1614
    %v1617 = vmul.f32 %v1615, %v1615
    %v1618 = vsel %vm85, %v1616, 0.0
    %1619 = vadd.xlane.f32.xlu0 %v1618
    %v1620 = vpop.xlane.xlu0 %1619
    %v1621 = vsel %vm85, %v1617, 0.0
    %1622 = vadd.xlane.f32.xlu0 %v1621
    %v1623 = vpop.xlane.xlu0 %1622
    %v1624 = vmul.f32 %v1620, %v1611
    %v1625 = vmul.f32 %v1623, %v1611
    %v1626 = vadd.f32 %v1624, 1e-05
    %v1627 = vadd.f32 %v1625, 1e-05
    %v1628 = vrsqrt.pop %v1626
    %v1629 = vrsqrt.pop %v1627
    %v1630 = vmul.f32 %v1614, %v1628
    %v1631 = vmul.f32 %v1615, %v1629
    %v1632 = vlaneseq
    %v1633 = vshrl.u32 %v1632, 7
    %v1634 = vsub.s32 2, %v1633
    %v1635 = vrot.slane %v58, %v1634
    %v1636 = vmul.f32 %v1630, %v1635
    %v1637 = vmul.f32 %v1631, %v1635
    %v1638 = vlaneseq
    %v1639 = vshrl.u32 %v1638, 7
    %v1640 = vsub.s32 3, %v1639
    %v1641 = vrot.slane %v58, %v1640
    %v1642 = vadd.f32 %v1636, %v1641
    %v1643 = vadd.f32 %v1637, %v1641
    %v1644 = vlaneseq
    %v1645 = vshrl.u32 %v1644, 7
    %v1646 = vsub.s32 4, %v1645
    %v1647 = vrot.slane %v58, %v1646
    %v1649 = vsel %vm85, %v1642, 0
    %v1652 = vsel %vm85, %v1643, 0
    %1654 = vmatprep.subr.mxu0 0.0
    %1655 = vmatpush1.msra.mxu0 %v69
    %1656 = vmatprep.subr.mxu0 0.0
    %1657 = vmatpush1.msra.mxu0 %v70
    %1658 = vmatprep.subr.mxu0 0.0
    %1659 = vmatpush1.msra.mxu0 %v71
    %1660 = vmatprep.subr.mxu0 0.0
    %1661 = vmatpush1.msra.mxu0 %v72
    %1662 = vmatprep.subr.mxu0 0.0
    %1663 = vmatpush1.msra.mxu0 0.0
    %1664 = vmatprep.subr.mxu0 0.0
    %1665 = vmatpush1.msra.mxu0 0.0
    %1666 = vmatprep.subr.mxu0 0.0
    %1667 = vmatpush1.msra.mxu0 0.0
    %1668 = vmatprep.subr.mxu0 0.0
    %1669 = vmatpush1.msra.mxu0 0.0
    %1670 = vmatprep.subr.mxu0 0.0
    %1671 = vmatpush1.msra.mxu0 0.0
    %1672 = vmatprep.subr.mxu0 0.0
    %1673 = vmatpush1.msra.mxu0 0.0
    %1674 = vmatprep.subr.mxu0 0.0
    %1675 = vmatpush1.msra.mxu0 0.0
    %1676 = vmatprep.subr.mxu0 0.0
    %1677 = vmatpush1.msra.mxu0 0.0
    %1678 = vmatprep.subr.mxu0 0.0
    %1679 = vmatpush1.msra.mxu0 0.0
    %1680 = vmatprep.subr.mxu0 0.0
    %1681 = vmatpush1.msra.mxu0 0.0
    %1682 = vmatprep.subr.mxu0 0.0
    %1683 = vmatpush1.msra.mxu0 0.0
    %1684 = vmatprep.subr.mxu0 0.0
    %1685 = vmatpush1.msra.mxu0 0.0
    %1686 = vmatprep.subr.mxu0 0.0
    %1687 = vmatpush1.msra.mxu0 0.0
    %1688 = vmatprep.subr.mxu0 0.0
    %1689 = vmatpush1.msra.mxu0 0.0
    %1690 = vmatprep.subr.mxu0 0.0
    %1691 = vmatpush1.msra.mxu0 0.0
    %1692 = vmatprep.subr.mxu0 0.0
    %1693 = vmatpush1.msra.mxu0 0.0
    %1694 = vmatprep.subr.mxu0 0.0
    %1695 = vmatpush1.msra.mxu0 0.0
    %1696 = vmatprep.subr.mxu0 0.0
    %1697 = vmatpush1.msra.mxu0 0.0
    %1698 = vmatprep.subr.mxu0 0.0
    %1699 = vmatpush1.msra.mxu0 0.0
    %1700 = vmatprep.subr.mxu0 0.0
    %1701 = vmatpush1.msra.mxu0 0.0
    %1702 = vmatprep.subr.mxu0 0.0
    %1703 = vmatpush1.msra.mxu0 0.0
    %1704 = vmatprep.subr.mxu0 0.0
    %1705 = vmatpush1.msra.mxu0 0.0
    %1706 = vmatprep.subr.mxu0 0.0
    %1707 = vmatpush1.msra.mxu0 0.0
    %1708 = vmatprep.subr.mxu0 0.0
    %1709 = vmatpush1.msra.mxu0 0.0
    %1710 = vmatprep.subr.mxu0 0.0
    %1711 = vmatpush1.msra.mxu0 0.0
    %1712 = vmatprep.subr.mxu0 0.0
    %1713 = vmatpush1.msra.mxu0 0.0
    %1714 = vmatprep.subr.mxu0 0.0
    %1715 = vmatpush1.msra.mxu0 0.0
    %1716 = vmatprep.subr.mxu0 0.0
    %1717 = vmatpush1.msra.mxu0 0.0
    %1718 = vmatprep.mubr.f32.mxu0 0.0
    %1719 = vmatmul.mubr.f32.gmra.mrb[0].mxu0 %v1649
    %v1720 = vpop.f32.mrb[0].mxu0
    %v1721 = vadd.f32 %v1647, %v1720
    %v1722 = vpop.f32.mrb[0].mxu0
    %1723 = vmatprep.mubr.f32.mxu0 0.0
    %1724 = vmatmul.mubr.f32.gmra.mrb[0].mxu0 %v1652
    %v1725 = vpop.f32.mrb[0].mxu0
    %v1726 = vadd.f32 %v1647, %v1725
    %v1727 = vpop.f32.mrb[0].mxu0
    %1728 = vdwg.mxu0
    %v1729 = vmax.f32 %v1721, 0.0
    %v1730 = vmax.f32 %v1726, 0.0
    %v1731 = vlaneseq
    %v1732 = vshrl.u32 %v1731, 7
    %v1733 = vsub.s32 5, %v1732
    %v1734 = vrot.slane %v58, %v1733
    %vm1735 = vcmask 523264
    %v1737 = vsel %vm1735, %v1729, 0
    %v1740 = vsel %vm1735, %v1730, 0
    %1742 = vmatprep.subr.mxu0 0.0
    %1743 = vmatpush1.msra.mxu0 %v73
    %1744 = vmatprep.subr.mxu0 0.0
    %1745 = vmatpush1.msra.mxu0 %v74
    %1746 = vmatprep.subr.mxu0 0.0
    %1747 = vmatpush1.msra.mxu0 %v75
    %1748 = vmatprep.subr.mxu0 0.0
    %1749 = vmatpush1.msra.mxu0 %v76
    %1750 = vmatprep.subr.mxu0 0.0
    %1751 = vmatpush1.msra.mxu0 %v77
    %1752 = vmatprep.subr.mxu0 0.0
    %1753 = vmatpush1.msra.mxu0 %v78
    %1754 = vmatprep.subr.mxu0 0.0
    %1755 = vmatpush1.msra.mxu0 %v79
    %1756 = vmatprep.subr.mxu0 0.0
    %1757 = vmatpush1.msra.mxu0 %v80
    %1758 = vmatprep.subr.mxu0 0.0
    %1759 = vmatpush1.msra.mxu0 0.0
    %1760 = vmatprep.subr.mxu0 0.0
    %1761 = vmatpush1.msra.mxu0 0.0
    %1762 = vmatprep.subr.mxu0 0.0
    %1763 = vmatpush1.msra.mxu0 0.0
    %1764 = vmatprep.subr.mxu0 0.0
    %1765 = vmatpush1.msra.mxu0 0.0
    %1766 = vmatprep.subr.mxu0 0.0
    %1767 = vmatpush1.msra.mxu0 0.0
    %1768 = vmatprep.subr.mxu0 0.0
    %1769 = vmatpush1.msra.mxu0 0.0
    %1770 = vmatprep.subr.mxu0 0.0
    %1771 = vmatpush1.msra.mxu0 0.0
    %1772 = vmatprep.subr.mxu0 0.0
    %1773 = vmatpush1.msra.mxu0 0.0
    %1774 = vmatprep.subr.mxu0 0.0
    %1775 = vmatpush1.msra.mxu0 0.0
    %1776 = vmatprep.subr.mxu0 0.0
    %1777 = vmatpush1.msra.mxu0 0.0
    %1778 = vmatprep.subr.mxu0 0.0
    %1779 = vmatpush1.msra.mxu0 0.0
    %1780 = vmatprep.subr.mxu0 0.0
    %1781 = vmatpush1.msra.mxu0 0.0
    %1782 = vmatprep.subr.mxu0 0.0
    %1783 = vmatpush1.msra.mxu0 0.0
    %1784 = vmatprep.subr.mxu0 0.0
    %1785 = vmatpush1.msra.mxu0 0.0
    %1786 = vmatprep.subr.mxu0 0.0
    %1787 = vmatpush1.msra.mxu0 0.0
    %1788 = vmatprep.subr.mxu0 0.0
    %1789 = vmatpush1.msra.mxu0 0.0
    %1790 = vmatprep.subr.mxu0 0.0
    %1791 = vmatpush1.msra.mxu0 0.0
    %1792 = vmatprep.subr.mxu0 0.0
    %1793 = vmatpush1.msra.mxu0 0.0
    %1794 = vmatprep.subr.mxu0 0.0
    %1795 = vmatpush1.msra.mxu0 0.0
    %1796 = vmatprep.subr.mxu0 0.0
    %1797 = vmatpush1.msra.mxu0 0.0
    %1798 = vmatprep.subr.mxu0 0.0
    %1799 = vmatpush1.msra.mxu0 0.0
    %1800 = vmatprep.subr.mxu0 0.0
    %1801 = vmatpush1.msra.mxu0 0.0
    %1802 = vmatprep.subr.mxu0 0.0
    %1803 = vmatpush1.msra.mxu0 0.0
    %1804 = vmatprep.subr.mxu0 0.0
    %1805 = vmatpush1.msra.mxu0 0.0
    %1806 = vmatprep.mubr.f32.mxu0 0.0
    %1807 = vmatmul.mubr.f32.gmra.mrb[0].mxu0 %v1737
    %v1808 = vpop.f32.mrb[0].mxu0
    %v1809 = vadd.f32 %v1734, %v1808
    %v1810 = vpop.f32.mrb[0].mxu0
    %1811 = vmatprep.mubr.f32.mxu0 0.0
    %1812 = vmatmul.mubr.f32.gmra.mrb[0].mxu0 %v1740
    %v1813 = vpop.f32.mrb[0].mxu0
    %v1814 = vadd.f32 %v1734, %v1813
    %v1815 = vpop.f32.mrb[0].mxu0
    %1816 = vdwg.mxu0
    %v1817 = vadd.f32 %v1642, %v1809
    %v1818 = vadd.f32 %v1643, %v1814
    %v1819 = vsel %vm85, %v1817, 0.0
    %1820 = vadd.xlane.f32.xlu0 %v1819
    %v1821 = vpop.xlane.xlu0 %1820
    %v1822 = vsel %vm85, %v1818, 0.0
    %1823 = vadd.xlane.f32.xlu0 %v1822
    %v1824 = vpop.xlane.xlu0 %1823
    %v1825 = vmul.f32 %v1821, %v1611
    %v1826 = vmul.f32 %v1824, %v1611
    %v1827 = vsub.f32 %v1817, %v1825
    %v1828 = vsub.f32 %v1818, %v1826
    %v1829 = vmul.f32 %v1827, %v1827
    %v1830 = vmul.f32 %v1828, %v1828
    %v1831 = vsel %vm85, %v1829, 0.0
    %1832 = vadd.xlane.f32.xlu0 %v1831
    %v1833 = vpop.xlane.xlu0 %1832
    %v1834 = vsel %vm85, %v1830, 0.0
    %1835 = vadd.xlane.f32.xlu0 %v1834
    %v1836 = vpop.xlane.xlu0 %1835
    %v1837 = vmul.f32 %v1833, %v1611
    %v1838 = vmul.f32 %v1836, %v1611
    %v1839 = vadd.f32 %v1837, 1e-05
    %v1840 = vadd.f32 %v1838, 1e-05
    %v1841 = vrsqrt.pop %v1839
    %v1842 = vrsqrt.pop %v1840
    %v1843 = vmul.f32 %v1827, %v1841
    %v1844 = vmul.f32 %v1828, %v1842
    %v1845 = vlaneseq
    %v1846 = vshrl.u32 %v1845, 7
    %v1847 = vsub.s32 6, %v1846
    %v1848 = vrot.slane %v58, %v1847
    %v1849 = vmul.f32 %v1843, %v1848
    %v1850 = vmul.f32 %v1844, %v1848
    %v1851 = vlaneseq
    %v1852 = vshrl.u32 %v1851, 7
    %v1853 = vsub.s32 7, %v1852
    %v1854 = vrot.slane %v58, %v1853
    %v1855 = vadd.f32 %v1849, %v1854
    %v1856 = vadd.f32 %v1850, %v1854
    %s1857 = scalar_lea.vmem [#allocation5], 160
    %v1858 = vld [vmem:[%s1857] sm:$0xff]
    %v1859 = vld [vmem:[%s1857 + $0x8] sm:$0xff]
    %v1860 = vld [vmem:[%s1857 + $0x10] sm:$0xff]
    %v1861 = vld [vmem:[%s1857 + $0x18] sm:$0xff]
    %v1862 = vld [vmem:[%s1857 + $0x20] sm:$0xff]
    %v1863 = vld [vmem:[%s1857 + $0x28] sm:$0xff]
    %v1864 = vld [vmem:[%s1857 + $0x30] sm:$0xff]
    %v1865 = vld [vmem:[%s1857 + $0x38] sm:$0xff]
    %v1866 = vld [vmem:[%s1857 + $0x40] sm:$0xff]
    %v1867 = vld [vmem:[%s1857 + $0x48] sm:$0xff]
    %v1868 = vld [vmem:[%s1857 + $0x50] sm:$0xff]
    %v1869 = vld [vmem:[%s1857 + $0x58] sm:$0xff]
    %v1870 = vld [vmem:[%s1857 + $0x60] sm:$0xff]
    %v1871 = vld [vmem:[%s1857 + $0x68] sm:$0xff]
    %v1872 = vld [vmem:[%s1857 + $0x70] sm:$0xff]
    %v1873 = vld [vmem:[%s1857 + $0x78] sm:$0xff]
    %v1874 = vld [vmem:[%s1857 + $0x80] sm:$0xff]
    %v1875 = vld [vmem:[%s1857 + $0x88] sm:$0xff]
    %v1876 = vld [vmem:[%s1857 + $0x90] sm:$0xff]
    %v1877 = vld [vmem:[%s1857 + $0x98] sm:$0xff]
    %v1878 = vlaneseq
    %v1879 = vshrl.u32 %v1878, 7
    %v1880 = vsub.s32 0, %v1879
    %v1881 = vrot.slane %v59, %v1880
    %v1883 = vsel %vm85, %v1855, 0
    %v1886 = vsel %vm85, %v1856, 0
    %1888 = vmatprep.subr.mxu0 0.0
    %1889 = vmatpush1.msra.mxu0 %v1858
    %1890 = vmatprep.subr.mxu0 0.0
    %1891 = vmatpush1.msra.mxu0 %v1859
    %1892 = vmatprep.subr.mxu0 0.0
    %1893 = vmatpush1.msra.mxu0 %v1860
    %1894 = vmatprep.subr.mxu0 0.0
    %1895 = vmatpush1.msra.mxu0 %v1861
    %1896 = vmatprep.subr.mxu0 0.0
    %1897 = vmatpush1.msra.mxu0 0.0
    %1898 = vmatprep.subr.mxu0 0.0
    %1899 = vmatpush1.msra.mxu0 0.0
    %1900 = vmatprep.subr.mxu0 0.0
    %1901 = vmatpush1.msra.mxu0 0.0
    %1902 = vmatprep.subr.mxu0 0.0
    %1903 = vmatpush1.msra.mxu0 0.0
    %1904 = vmatprep.subr.mxu0 0.0
    %1905 = vmatpush1.msra.mxu0 0.0
    %1906 = vmatprep.subr.mxu0 0.0
    %1907 = vmatpush1.msra.mxu0 0.0
    %1908 = vmatprep.subr.mxu0 0.0
    %1909 = vmatpush1.msra.mxu0 0.0
    %1910 = vmatprep.subr.mxu0 0.0
    %1911 = vmatpush1.msra.mxu0 0.0
    %1912 = vmatprep.subr.mxu0 0.0
    %1913 = vmatpush1.msra.mxu0 0.0
    %1914 = vmatprep.subr.mxu0 0.0
    %1915 = vmatpush1.msra.mxu0 0.0
    %1916 = vmatprep.subr.mxu0 0.0
    %1917 = vmatpush1.msra.mxu0 0.0
    %1918 = vmatprep.subr.mxu0 0.0
    %1919 = vmatpush1.msra.mxu0 0.0
    %1920 = vmatprep.subr.mxu0 0.0
    %1921 = vmatpush1.msra.mxu0 0.0
    %1922 = vmatprep.subr.mxu0 0.0
    %1923 = vmatpush1.msra.mxu0 0.0
    %1924 = vmatprep.subr.mxu0 0.0
    %1925 = vmatpush1.msra.mxu0 0.0
    %1926 = vmatprep.subr.mxu0 0.0
    %1927 = vmatpush1.msra.mxu0 0.0
    %1928 = vmatprep.subr.mxu0 0.0
    %1929 = vmatpush1.msra.mxu0 0.0
    %1930 = vmatprep.subr.mxu0 0.0
    %1931 = vmatpush1.msra.mxu0 0.0
    %1932 = vmatprep.subr.mxu0 0.0
    %1933 = vmatpush1.msra.mxu0 0.0
    %1934 = vmatprep.subr.mxu0 0.0
    %1935 = vmatpush1.msra.mxu0 0.0
    %1936 = vmatprep.subr.mxu0 0.0
    %1937 = vmatpush1.msra.mxu0 0.0
    %1938 = vmatprep.subr.mxu0 0.0
    %1939 = vmatpush1.msra.mxu0 0.0
    %1940 = vmatprep.subr.mxu0 0.0
    %1941 = vmatpush1.msra.mxu0 0.0
    %1942 = vmatprep.subr.mxu0 0.0
    %1943 = vmatpush1.msra.mxu0 0.0
    %1944 = vmatprep.subr.mxu0 0.0
    %1945 = vmatpush1.msra.mxu0 0.0
    %1946 = vmatprep.subr.mxu0 0.0
    %1947 = vmatpush1.msra.mxu0 0.0
    %1948 = vmatprep.subr.mxu0 0.0
    %1949 = vmatpush1.msra.mxu0 0.0
    %1950 = vmatprep.subr.mxu0 0.0
    %1951 = vmatpush1.msra.mxu0 0.0
    %1952 = vmatprep.mubr.f32.mxu0 0.0
    %1953 = vmatmul.mubr.f32.gmra.mrb[0].mxu0 %v1883
    %v1954 = vpop.f32.mrb[0].mxu0
    %v1955 = vadd.f32 %v1881, %v1954
    %v1956 = vpop.f32.mrb[0].mxu0
    %1957 = vmatprep.mubr.f32.mxu0 0.0
    %1958 = vmatmul.mubr.f32.gmra.mrb[0].mxu0 %v1886
    %v1959 = vpop.f32.mrb[0].mxu0
    %v1960 = vadd.f32 %v1881, %v1959
    %v1961 = vpop.f32.mrb[0].mxu0
    %1962 = vdwg.mxu0
    %1965 = vrot.lane.b32.xlu0 %v1955, 120
    %v1966 = vpop.permute.xlu0 %1965
    %1967 = vrot.lane.b32.xlu0 %v1960, 120
    %v1968 = vpop.permute.xlu0 %1967
    %1969 = vrot.lane.b32.xlu0 %v1955, 112
    %v1970 = vpop.permute.xlu0 %1969
    %1971 = vrot.lane.b32.xlu0 %v1960, 112
    %v1972 = vpop.permute.xlu0 %1971
    %1973 = vrot.lane.b32.xlu0 %v1955, 104
    %v1974 = vpop.permute.xlu0 %1973
    %1975 = vrot.lane.b32.xlu0 %v1960, 104
    %v1976 = vpop.permute.xlu0 %1975
    %1977 = vrot.lane.b32.xlu0 %v1955, 96
    %v1978 = vpop.permute.xlu0 %1977
    %v1979 = vsel %vm183, %v1955, 0
    %v1981 = vsel %vm183, %v1978, 0
    %1983 = vmatprep.subr.mxu0 0.0
    %1984 = vmatpush1.xpose.msra.mxu0 %v1981
    %1985 = vmatprep.subr.mxu0 0.0
    %1986 = vmatpush1.xpose.msra.mxu0 0.0
    %1987 = vmatprep.subr.mxu0 0.0
    %1988 = vmatpush1.xpose.msra.mxu0 0.0
    %1989 = vmatprep.subr.mxu0 0.0
    %1990 = vmatpush1.xpose.msra.mxu0 0.0
    %1991 = vmatprep.subr.mxu0 0.0
    %1992 = vmatpush1.xpose.msra.mxu0 0.0
    %1993 = vmatprep.subr.mxu0 0.0
    %1994 = vmatpush1.xpose.msra.mxu0 0.0
    %1995 = vmatprep.subr.mxu0 0.0
    %1996 = vmatpush1.xpose.msra.mxu0 0.0
    %1997 = vmatprep.subr.mxu0 0.0
    %1998 = vmatpush1.xpose.msra.mxu0 0.0
    %1999 = vmatprep.subr.mxu0 0.0
    %2000 = vmatpush1.xpose.msra.mxu0 0.0
    %2001 = vmatprep.subr.mxu0 0.0
    %2002 = vmatpush1.xpose.msra.mxu0 0.0
    %2003 = vmatprep.subr.mxu0 0.0
    %2004 = vmatpush1.xpose.msra.mxu0 0.0
    %2005 = vmatprep.subr.mxu0 0.0
    %2006 = vmatpush1.xpose.msra.mxu0 0.0
    %2007 = vmatprep.subr.mxu0 0.0
    %2008 = vmatpush1.xpose.msra.mxu0 0.0
    %2009 = vmatprep.subr.mxu0 0.0
    %2010 = vmatpush1.xpose.msra.mxu0 0.0
    %2011 = vmatprep.subr.mxu0 0.0
    %2012 = vmatpush1.xpose.msra.mxu0 0.0
    %2013 = vmatprep.subr.mxu0 0.0
    %2014 = vmatpush1.xpose.msra.mxu0 0.0
    %2015 = vmatprep.subr.mxu0 0.0
    %2016 = vmatpush1.xpose.msra.mxu0 0.0
    %2017 = vmatprep.subr.mxu0 0.0
    %2018 = vmatpush1.xpose.msra.mxu0 0.0
    %2019 = vmatprep.subr.mxu0 0.0
    %2020 = vmatpush1.xpose.msra.mxu0 0.0
    %2021 = vmatprep.subr.mxu0 0.0
    %2022 = vmatpush1.xpose.msra.mxu0 0.0
    %2023 = vmatprep.subr.mxu0 0.0
    %2024 = vmatpush1.xpose.msra.mxu0 0.0
    %2025 = vmatprep.subr.mxu0 0.0
    %2026 = vmatpush1.xpose.msra.mxu0 0.0
    %2027 = vmatprep.subr.mxu0 0.0
    %2028 = vmatpush1.xpose.msra.mxu0 0.0
    %2029 = vmatprep.subr.mxu0 0.0
    %2030 = vmatpush1.xpose.msra.mxu0 0.0
    %2031 = vmatprep.subr.mxu0 0.0
    %2032 = vmatpush1.xpose.msra.mxu0 0.0
    %2033 = vmatprep.subr.mxu0 0.0
    %2034 = vmatpush1.xpose.msra.mxu0 0.0
    %2035 = vmatprep.subr.mxu0 0.0
    %2036 = vmatpush1.xpose.msra.mxu0 0.0
    %2037 = vmatprep.subr.mxu0 0.0
    %2038 = vmatpush1.xpose.msra.mxu0 0.0
    %2039 = vmatprep.subr.mxu0 0.0
    %2040 = vmatpush1.xpose.msra.mxu0 0.0
    %2041 = vmatprep.subr.mxu0 0.0
    %2042 = vmatpush1.xpose.msra.mxu0 0.0
    %2043 = vmatprep.subr.mxu0 0.0
    %2044 = vmatpush1.xpose.msra.mxu0 0.0
    %2045 = vmatprep.subr.mxu0 0.0
    %2046 = vmatpush1.xpose.msra.mxu0 0.0
    %2047 = vmatprep.mubr.f32.mxu0 0.0
    %2048 = vmatmul.mubr.f32.gmra.mrb[0].mxu0 %v1979
    %v2049 = vpop.f32.mrb[0].mxu0
    %v2050 = vadd.f32 0.0, %v2049
    %v2051 = vpop.f32.mrb[0].mxu0
    %2052 = vdwg.mxu0
    %2053 = vrot.lane.b32.xlu0 %v1960, 96
    %v2054 = vpop.permute.xlu0 %2053
    %v2055 = vsel %vm183, %v1960, 0
    %v2057 = vsel %vm183, %v2054, 0
    %2059 = vmatprep.subr.mxu0 0.0
    %2060 = vmatpush1.xpose.msra.mxu0 %v2057
    %2061 = vmatprep.subr.mxu0 0.0
    %2062 = vmatpush1.xpose.msra.mxu0 0.0
    %2063 = vmatprep.subr.mxu0 0.0
    %2064 = vmatpush1.xpose.msra.mxu0 0.0
    %2065 = vmatprep.subr.mxu0 0.0
    %2066 = vmatpush1.xpose.msra.mxu0 0.0
    %2067 = vmatprep.subr.mxu0 0.0
    %2068 = vmatpush1.xpose.msra.mxu0 0.0
    %2069 = vmatprep.subr.mxu0 0.0
    %2070 = vmatpush1.xpose.msra.mxu0 0.0
    %2071 = vmatprep.subr.mxu0 0.0
    %2072 = vmatpush1.xpose.msra.mxu0 0.0
    %2073 = vmatprep.subr.mxu0 0.0
    %2074 = vmatpush1.xpose.msra.mxu0 0.0
    %2075 = vmatprep.subr.mxu0 0.0
    %2076 = vmatpush1.xpose.msra.mxu0 0.0
    %2077 = vmatprep.subr.mxu0 0.0
    %2078 = vmatpush1.xpose.msra.mxu0 0.0
    %2079 = vmatprep.subr.mxu0 0.0
    %2080 = vmatpush1.xpose.msra.mxu0 0.0
    %2081 = vmatprep.subr.mxu0 0.0
    %2082 = vmatpush1.xpose.msra.mxu0 0.0
    %2083 = vmatprep.subr.mxu0 0.0
    %2084 = vmatpush1.xpose.msra.mxu0 0.0
    %2085 = vmatprep.subr.mxu0 0.0
    %2086 = vmatpush1.xpose.msra.mxu0 0.0
    %2087 = vmatprep.subr.mxu0 0.0
    %2088 = vmatpush1.xpose.msra.mxu0 0.0
    %2089 = vmatprep.subr.mxu0 0.0
    %2090 = vmatpush1.xpose.msra.mxu0 0.0
    %2091 = vmatprep.subr.mxu0 0.0
    %2092 = vmatpush1.xpose.msra.mxu0 0.0
    %2093 = vmatprep.subr.mxu0 0.0
    %2094 = vmatpush1.xpose.msra.mxu0 0.0
    %2095 = vmatprep.subr.mxu0 0.0
    %2096 = vmatpush1.xpose.msra.mxu0 0.0
    %2097 = vmatprep.subr.mxu0 0.0
    %2098 = vmatpush1.xpose.msra.mxu0 0.0
    %2099 = vmatprep.subr.mxu0 0.0
    %2100 = vmatpush1.xpose.msra.mxu0 0.0
    %2101 = vmatprep.subr.mxu0 0.0
    %2102 = vmatpush1.xpose.msra.mxu0 0.0
    %2103 = vmatprep.subr.mxu0 0.0
    %2104 = vmatpush1.xpose.msra.mxu0 0.0
    %2105 = vmatprep.subr.mxu0 0.0
    %2106 = vmatpush1.xpose.msra.mxu0 0.0
    %2107 = vmatprep.subr.mxu0 0.0
    %2108 = vmatpush1.xpose.msra.mxu0 0.0
    %2109 = vmatprep.subr.mxu0 0.0
    %2110 = vmatpush1.xpose.msra.mxu0 0.0
    %2111 = vmatprep.subr.mxu0 0.0
    %2112 = vmatpush1.xpose.msra.mxu0 0.0
    %2113 = vmatprep.subr.mxu0 0.0
    %2114 = vmatpush1.xpose.msra.mxu0 0.0
    %2115 = vmatprep.subr.mxu0 0.0
    %2116 = vmatpush1.xpose.msra.mxu0 0.0
    %2117 = vmatprep.subr.mxu0 0.0
    %2118 = vmatpush1.xpose.msra.mxu0 0.0
    %2119 = vmatprep.subr.mxu0 0.0
    %2120 = vmatpush1.xpose.msra.mxu0 0.0
    %2121 = vmatprep.subr.mxu0 0.0
    %2122 = vmatpush1.xpose.msra.mxu0 0.0
    %2123 = vmatprep.mubr.f32.mxu0 0.0
    %2124 = vmatmul.mubr.f32.gmra.mrb[0].mxu0 %v2055
    %v2125 = vpop.f32.mrb[0].mxu0
    %v2126 = vadd.f32 0.0, %v2125
    %v2127 = vpop.f32.mrb[0].mxu0
    %2128 = vdwg.mxu0
    %2129 = vrot.lane.b32.xlu0 %v1966, 96
    %v2130 = vpop.permute.xlu0 %2129
    %v2131 = vsel %vm183, %v1966, 0
    %v2133 = vsel %vm183, %v2130, 0
    %2135 = vmatprep.subr.mxu0 0.0
    %2136 = vmatpush1.xpose.msra.mxu0 %v2133
    %2137 = vmatprep.subr.mxu0 0.0
    %2138 = vmatpush1.xpose.msra.mxu0 0.0
    %2139 = vmatprep.subr.mxu0 0.0
    %2140 = vmatpush1.xpose.msra.mxu0 0.0
    %2141 = vmatprep.subr.mxu0 0.0
    %2142 = vmatpush1.xpose.msra.mxu0 0.0
    %2143 = vmatprep.subr.mxu0 0.0
    %2144 = vmatpush1.xpose.msra.mxu0 0.0
    %2145 = vmatprep.subr.mxu0 0.0
    %2146 = vmatpush1.xpose.msra.mxu0 0.0
    %2147 = vmatprep.subr.mxu0 0.0
    %2148 = vmatpush1.xpose.msra.mxu0 0.0
    %2149 = vmatprep.subr.mxu0 0.0
    %2150 = vmatpush1.xpose.msra.mxu0 0.0
    %2151 = vmatprep.subr.mxu0 0.0
    %2152 = vmatpush1.xpose.msra.mxu0 0.0
    %2153 = vmatprep.subr.mxu0 0.0
    %2154 = vmatpush1.xpose.msra.mxu0 0.0
    %2155 = vmatprep.subr.mxu0 0.0
    %2156 = vmatpush1.xpose.msra.mxu0 0.0
    %2157 = vmatprep.subr.mxu0 0.0
    %2158 = vmatpush1.xpose.msra.mxu0 0.0
    %2159 = vmatprep.subr.mxu0 0.0
    %2160 = vmatpush1.xpose.msra.mxu0 0.0
    %2161 = vmatprep.subr.mxu0 0.0
    %2162 = vmatpush1.xpose.msra.mxu0 0.0
    %2163 = vmatprep.subr.mxu0 0.0
    %2164 = vmatpush1.xpose.msra.mxu0 0.0
    %2165 = vmatprep.subr.mxu0 0.0
    %2166 = vmatpush1.xpose.msra.mxu0 0.0
    %2167 = vmatprep.subr.mxu0 0.0
    %2168 = vmatpush1.xpose.msra.mxu0 0.0
    %2169 = vmatprep.subr.mxu0 0.0
    %2170 = vmatpush1.xpose.msra.mxu0 0.0
    %2171 = vmatprep.subr.mxu0 0.0
    %2172 = vmatpush1.xpose.msra.mxu0 0.0
    %2173 = vmatprep.subr.mxu0 0.0
    %2174 = vmatpush1.xpose.msra.mxu0 0.0
    %2175 = vmatprep.subr.mxu0 0.0
    %2176 = vmatpush1.xpose.msra.mxu0 0.0
    %2177 = vmatprep.subr.mxu0 0.0
    %2178 = vmatpush1.xpose.msra.mxu0 0.0
    %2179 = vmatprep.subr.mxu0 0.0
    %2180 = vmatpush1.xpose.msra.mxu0 0.0
    %2181 = vmatprep.subr.mxu0 0.0
    %2182 = vmatpush1.xpose.msra.mxu0 0.0
    %2183 = vmatprep.subr.mxu0 0.0
    %2184 = vmatpush1.xpose.msra.mxu0 0.0
    %2185 = vmatprep.subr.mxu0 0.0
    %2186 = vmatpush1.xpose.msra.mxu0 0.0
    %2187 = vmatprep.subr.mxu0 0.0
    %2188 = vmatpush1.xpose.msra.mxu0 0.0
    %2189 = vmatprep.subr.mxu0 0.0
    %2190 = vmatpush1.xpose.msra.mxu0 0.0
    %2191 = vmatprep.subr.mxu0 0.0
    %2192 = vmatpush1.xpose.msra.mxu0 0.0
    %2193 = vmatprep.subr.mxu0 0.0
    %2194 = vmatpush1.xpose.msra.mxu0 0.0
    %2195 = vmatprep.subr.mxu0 0.0
    %2196 = vmatpush1.xpose.msra.mxu0 0.0
    %2197 = vmatprep.subr.mxu0 0.0
    %2198 = vmatpush1.xpose.msra.mxu0 0.0
    %2199 = vmatprep.mubr.f32.mxu0 0.0
    %2200 = vmatmul.mubr.f32.gmra.mrb[0].mxu0 %v2131
    %v2201 = vpop.f32.mrb[0].mxu0
    %v2202 = vadd.f32 0.0, %v2201
    %v2203 = vpop.f32.mrb[0].mxu0
    %2204 = vdwg.mxu0
    %2205 = vrot.lane.b32.xlu0 %v1968, 96
    %v2206 = vpop.permute.xlu0 %2205
    %v2207 = vsel %vm183, %v1968, 0
    %v2209 = vsel %vm183, %v2206, 0
    %2211 = vmatprep.subr.mxu0 0.0
    %2212 = vmatpush1.xpose.msra.mxu0 %v2209
    %2213 = vmatprep.subr.mxu0 0.0
    %2214 = vmatpush1.xpose.msra.mxu0 0.0
    %2215 = vmatprep.subr.mxu0 0.0
    %2216 = vmatpush1.xpose.msra.mxu0 0.0
    %2217 = vmatprep.subr.mxu0 0.0
    %2218 = vmatpush1.xpose.msra.mxu0 0.0
    %2219 = vmatprep.subr.mxu0 0.0
    %2220 = vmatpush1.xpose.msra.mxu0 0.0
    %2221 = vmatprep.subr.mxu0 0.0
    %2222 = vmatpush1.xpose.msra.mxu0 0.0
    %2223 = vmatprep.subr.mxu0 0.0
    %2224 = vmatpush1.xpose.msra.mxu0 0.0
    %2225 = vmatprep.subr.mxu0 0.0
    %2226 = vmatpush1.xpose.msra.mxu0 0.0
    %2227 = vmatprep.subr.mxu0 0.0
    %2228 = vmatpush1.xpose.msra.mxu0 0.0
    %2229 = vmatprep.subr.mxu0 0.0
    %2230 = vmatpush1.xpose.msra.mxu0 0.0
    %2231 = vmatprep.subr.mxu0 0.0
    %2232 = vmatpush1.xpose.msra.mxu0 0.0
    %2233 = vmatprep.subr.mxu0 0.0
    %2234 = vmatpush1.xpose.msra.mxu0 0.0
    %2235 = vmatprep.subr.mxu0 0.0
    %2236 = vmatpush1.xpose.msra.mxu0 0.0
    %2237 = vmatprep.subr.mxu0 0.0
    %2238 = vmatpush1.xpose.msra.mxu0 0.0
    %2239 = vmatprep.subr.mxu0 0.0
    %2240 = vmatpush1.xpose.msra.mxu0 0.0
    %2241 = vmatprep.subr.mxu0 0.0
    %2242 = vmatpush1.xpose.msra.mxu0 0.0
    %2243 = vmatprep.subr.mxu0 0.0
    %2244 = vmatpush1.xpose.msra.mxu0 0.0
    %2245 = vmatprep.subr.mxu0 0.0
    %2246 = vmatpush1.xpose.msra.mxu0 0.0
    %2247 = vmatprep.subr.mxu0 0.0
    %2248 = vmatpush1.xpose.msra.mxu0 0.0
    %2249 = vmatprep.subr.mxu0 0.0
    %2250 = vmatpush1.xpose.msra.mxu0 0.0
    %2251 = vmatprep.subr.mxu0 0.0
    %2252 = vmatpush1.xpose.msra.mxu0 0.0
    %2253 = vmatprep.subr.mxu0 0.0
    %2254 = vmatpush1.xpose.msra.mxu0 0.0
    %2255 = vmatprep.subr.mxu0 0.0
    %2256 = vmatpush1.xpose.msra.mxu0 0.0
    %2257 = vmatprep.subr.mxu0 0.0
    %2258 = vmatpush1.xpose.msra.mxu0 0.0
    %2259 = vmatprep.subr.mxu0 0.0
    %2260 = vmatpush1.xpose.msra.mxu0 0.0
    %2261 = vmatprep.subr.mxu0 0.0
    %2262 = vmatpush1.xpose.msra.mxu0 0.0
    %2263 = vmatprep.subr.mxu0 0.0
    %2264 = vmatpush1.xpose.msra.mxu0 0.0
    %2265 = vmatprep.subr.mxu0 0.0
    %2266 = vmatpush1.xpose.msra.mxu0 0.0
    %2267 = vmatprep.subr.mxu0 0.0
    %2268 = vmatpush1.xpose.msra.mxu0 0.0
    %2269 = vmatprep.subr.mxu0 0.0
    %2270 = vmatpush1.xpose.msra.mxu0 0.0
    %2271 = vmatprep.subr.mxu0 0.0
    %2272 = vmatpush1.xpose.msra.mxu0 0.0
    %2273 = vmatprep.subr.mxu0 0.0
    %2274 = vmatpush1.xpose.msra.mxu0 0.0
    %2275 = vmatprep.mubr.f32.mxu0 0.0
    %2276 = vmatmul.mubr.f32.gmra.mrb[0].mxu0 %v2207
    %v2277 = vpop.f32.mrb[0].mxu0
    %v2278 = vadd.f32 0.0, %v2277
    %v2279 = vpop.f32.mrb[0].mxu0
    %2280 = vdwg.mxu0
    %2281 = vrot.lane.b32.xlu0 %v1970, 96
    %v2282 = vpop.permute.xlu0 %2281
    %v2283 = vsel %vm183, %v1970, 0
    %v2285 = vsel %vm183, %v2282, 0
    %2287 = vmatprep.subr.mxu0 0.0
    %2288 = vmatpush1.xpose.msra.mxu0 %v2285
    %2289 = vmatprep.subr.mxu0 0.0
    %2290 = vmatpush1.xpose.msra.mxu0 0.0
    %2291 = vmatprep.subr.mxu0 0.0
    %2292 = vmatpush1.xpose.msra.mxu0 0.0
    %2293 = vmatprep.subr.mxu0 0.0
    %2294 = vmatpush1.xpose.msra.mxu0 0.0
    %2295 = vmatprep.subr.mxu0 0.0
    %2296 = vmatpush1.xpose.msra.mxu0 0.0
    %2297 = vmatprep.subr.mxu0 0.0
    %2298 = vmatpush1.xpose.msra.mxu0 0.0
    %2299 = vmatprep.subr.mxu0 0.0
    %2300 = vmatpush1.xpose.msra.mxu0 0.0
    %2301 = vmatprep.subr.mxu0 0.0
    %2302 = vmatpush1.xpose.msra.mxu0 0.0
    %2303 = vmatprep.subr.mxu0 0.0
    %2304 = vmatpush1.xpose.msra.mxu0 0.0
    %2305 = vmatprep.subr.mxu0 0.0
    %2306 = vmatpush1.xpose.msra.mxu0 0.0
    %2307 = vmatprep.subr.mxu0 0.0
    %2308 = vmatpush1.xpose.msra.mxu0 0.0
    %2309 = vmatprep.subr.mxu0 0.0
    %2310 = vmatpush1.xpose.msra.mxu0 0.0
    %2311 = vmatprep.subr.mxu0 0.0
    %2312 = vmatpush1.xpose.msra.mxu0 0.0
    %2313 = vmatprep.subr.mxu0 0.0
    %2314 = vmatpush1.xpose.msra.mxu0 0.0
    %2315 = vmatprep.subr.mxu0 0.0
    %2316 = vmatpush1.xpose.msra.mxu0 0.0
    %2317 = vmatprep.subr.mxu0 0.0
    %2318 = vmatpush1.xpose.msra.mxu0 0.0
    %2319 = vmatprep.subr.mxu0 0.0
    %2320 = vmatpush1.xpose.msra.mxu0 0.0
    %2321 = vmatprep.subr.mxu0 0.0
    %2322 = vmatpush1.xpose.msra.mxu0 0.0
    %2323 = vmatprep.subr.mxu0 0.0
    %2324 = vmatpush1.xpose.msra.mxu0 0.0
    %2325 = vmatprep.subr.mxu0 0.0
    %2326 = vmatpush1.xpose.msra.mxu0 0.0
    %2327 = vmatprep.subr.mxu0 0.0
    %2328 = vmatpush1.xpose.msra.mxu0 0.0
    %2329 = vmatprep.subr.mxu0 0.0
    %2330 = vmatpush1.xpose.msra.mxu0 0.0
    %2331 = vmatprep.subr.mxu0 0.0
    %2332 = vmatpush1.xpose.msra.mxu0 0.0
    %2333 = vmatprep.subr.mxu0 0.0
    %2334 = vmatpush1.xpose.msra.mxu0 0.0
    %2335 = vmatprep.subr.mxu0 0.0
    %2336 = vmatpush1.xpose.msra.mxu0 0.0
    %2337 = vmatprep.subr.mxu0 0.0
    %2338 = vmatpush1.xpose.msra.mxu0 0.0
    %2339 = vmatprep.subr.mxu0 0.0
    %2340 = vmatpush1.xpose.msra.mxu0 0.0
    %2341 = vmatprep.subr.mxu0 0.0
    %2342 = vmatpush1.xpose.msra.mxu0 0.0
    %2343 = vmatprep.subr.mxu0 0.0
    %2344 = vmatpush1.xpose.msra.mxu0 0.0
    %2345 = vmatprep.subr.mxu0 0.0
    %2346 = vmatpush1.xpose.msra.mxu0 0.0
    %2347 = vmatprep.subr.mxu0 0.0
    %2348 = vmatpush1.xpose.msra.mxu0 0.0
    %2349 = vmatprep.subr.mxu0 0.0
    %2350 = vmatpush1.xpose.msra.mxu0 0.0
    %2351 = vmatprep.mubr.f32.mxu0 0.0
    %2352 = vmatmul.mubr.f32.gmra.mrb[0].mxu0 %v2283
    %v2353 = vpop.f32.mrb[0].mxu0
    %v2354 = vadd.f32 0.0, %v2353
    %v2355 = vpop.f32.mrb[0].mxu0
    %2356 = vdwg.mxu0
    %2357 = vrot.lane.b32.xlu0 %v1972, 96
    %v2358 = vpop.permute.xlu0 %2357
    %v2359 = vsel %vm183, %v1972, 0
    %v2361 = vsel %vm183, %v2358, 0
    %2363 = vmatprep.subr.mxu0 0.0
    %2364 = vmatpush1.xpose.msra.mxu0 %v2361
    %2365 = vmatprep.subr.mxu0 0.0
    %2366 = vmatpush1.xpose.msra.mxu0 0.0
    %2367 = vmatprep.subr.mxu0 0.0
    %2368 = vmatpush1.xpose.msra.mxu0 0.0
    %2369 = vmatprep.subr.mxu0 0.0
    %2370 = vmatpush1.xpose.msra.mxu0 0.0
    %2371 = vmatprep.subr.mxu0 0.0
    %2372 = vmatpush1.xpose.msra.mxu0 0.0
    %2373 = vmatprep.subr.mxu0 0.0
    %2374 = vmatpush1.xpose.msra.mxu0 0.0
    %2375 = vmatprep.subr.mxu0 0.0
    %2376 = vmatpush1.xpose.msra.mxu0 0.0
    %2377 = vmatprep.subr.mxu0 0.0
    %2378 = vmatpush1.xpose.msra.mxu0 0.0
    %2379 = vmatprep.subr.mxu0 0.0
    %2380 = vmatpush1.xpose.msra.mxu0 0.0
    %2381 = vmatprep.subr.mxu0 0.0
    %2382 = vmatpush1.xpose.msra.mxu0 0.0
    %2383 = vmatprep.subr.mxu0 0.0
    %2384 = vmatpush1.xpose.msra.mxu0 0.0
    %2385 = vmatprep.subr.mxu0 0.0
    %2386 = vmatpush1.xpose.msra.mxu0 0.0
    %2387 = vmatprep.subr.mxu0 0.0
    %2388 = vmatpush1.xpose.msra.mxu0 0.0
    %2389 = vmatprep.subr.mxu0 0.0
    %2390 = vmatpush1.xpose.msra.mxu0 0.0
    %2391 = vmatprep.subr.mxu0 0.0
    %2392 = vmatpush1.xpose.msra.mxu0 0.0
    %2393 = vmatprep.subr.mxu0 0.0
    %2394 = vmatpush1.xpose.msra.mxu0 0.0
    %2395 = vmatprep.subr.mxu0 0.0
    %2396 = vmatpush1.xpose.msra.mxu0 0.0
    %2397 = vmatprep.subr.mxu0 0.0
    %2398 = vmatpush1.xpose.msra.mxu0 0.0
    %2399 = vmatprep.subr.mxu0 0.0
    %2400 = vmatpush1.xpose.msra.mxu0 0.0
    %2401 = vmatprep.subr.mxu0 0.0
    %2402 = vmatpush1.xpose.msra.mxu0 0.0
    %2403 = vmatprep.subr.mxu0 0.0
    %2404 = vmatpush1.xpose.msra.mxu0 0.0
    %2405 = vmatprep.subr.mxu0 0.0
    %2406 = vmatpush1.xpose.msra.mxu0 0.0
    %2407 = vmatprep.subr.mxu0 0.0
    %2408 = vmatpush1.xpose.msra.mxu0 0.0
    %2409 = vmatprep.subr.mxu0 0.0
    %2410 = vmatpush1.xpose.msra.mxu0 0.0
    %2411 = vmatprep.subr.mxu0 0.0
    %2412 = vmatpush1.xpose.msra.mxu0 0.0
    %2413 = vmatprep.subr.mxu0 0.0
    %2414 = vmatpush1.xpose.msra.mxu0 0.0
    %2415 = vmatprep.subr.mxu0 0.0
    %2416 = vmatpush1.xpose.msra.mxu0 0.0
    %2417 = vmatprep.subr.mxu0 0.0
    %2418 = vmatpush1.xpose.msra.mxu0 0.0
    %2419 = vmatprep.subr.mxu0 0.0
    %2420 = vmatpush1.xpose.msra.mxu0 0.0
    %2421 = vmatprep.subr.mxu0 0.0
    %2422 = vmatpush1.xpose.msra.mxu0 0.0
    %2423 = vmatprep.subr.mxu0 0.0
    %2424 = vmatpush1.xpose.msra.mxu0 0.0
    %2425 = vmatprep.subr.mxu0 0.0
    %2426 = vmatpush1.xpose.msra.mxu0 0.0
    %2427 = vmatprep.mubr.f32.mxu0 0.0
    %2428 = vmatmul.mubr.f32.gmra.mrb[0].mxu0 %v2359
    %v2429 = vpop.f32.mrb[0].mxu0
    %v2430 = vadd.f32 0.0, %v2429
    %v2431 = vpop.f32.mrb[0].mxu0
    %2432 = vdwg.mxu0
    %2433 = vrot.lane.b32.xlu0 %v1974, 96
    %v2434 = vpop.permute.xlu0 %2433
    %v2435 = vsel %vm183, %v1974, 0
    %v2437 = vsel %vm183, %v2434, 0
    %2439 = vmatprep.subr.mxu0 0.0
    %2440 = vmatpush1.xpose.msra.mxu0 %v2437
    %2441 = vmatprep.subr.mxu0 0.0
    %2442 = vmatpush1.xpose.msra.mxu0 0.0
    %2443 = vmatprep.subr.mxu0 0.0
    %2444 = vmatpush1.xpose.msra.mxu0 0.0
    %2445 = vmatprep.subr.mxu0 0.0
    %2446 = vmatpush1.xpose.msra.mxu0 0.0
    %2447 = vmatprep.subr.mxu0 0.0
    %2448 = vmatpush1.xpose.msra.mxu0 0.0
    %2449 = vmatprep.subr.mxu0 0.0
    %2450 = vmatpush1.xpose.msra.mxu0 0.0
    %2451 = vmatprep.subr.mxu0 0.0
    %2452 = vmatpush1.xpose.msra.mxu0 0.0
    %2453 = vmatprep.subr.mxu0 0.0
    %2454 = vmatpush1.xpose.msra.mxu0 0.0
    %2455 = vmatprep.subr.mxu0 0.0
    %2456 = vmatpush1.xpose.msra.mxu0 0.0
    %2457 = vmatprep.subr.mxu0 0.0
    %2458 = vmatpush1.xpose.msra.mxu0 0.0
    %2459 = vmatprep.subr.mxu0 0.0
    %2460 = vmatpush1.xpose.msra.mxu0 0.0
    %2461 = vmatprep.subr.mxu0 0.0
    %2462 = vmatpush1.xpose.msra.mxu0 0.0
    %2463 = vmatprep.subr.mxu0 0.0
    %2464 = vmatpush1.xpose.msra.mxu0 0.0
    %2465 = vmatprep.subr.mxu0 0.0
    %2466 = vmatpush1.xpose.msra.mxu0 0.0
    %2467 = vmatprep.subr.mxu0 0.0
    %2468 = vmatpush1.xpose.msra.mxu0 0.0
    %2469 = vmatprep.subr.mxu0 0.0
    %2470 = vmatpush1.xpose.msra.mxu0 0.0
    %2471 = vmatprep.subr.mxu0 0.0
    %2472 = vmatpush1.xpose.msra.mxu0 0.0
    %2473 = vmatprep.subr.mxu0 0.0
    %2474 = vmatpush1.xpose.msra.mxu0 0.0
    %2475 = vmatprep.subr.mxu0 0.0
    %2476 = vmatpush1.xpose.msra.mxu0 0.0
    %2477 = vmatprep.subr.mxu0 0.0
    %2478 = vmatpush1.xpose.msra.mxu0 0.0
    %2479 = vmatprep.subr.mxu0 0.0
    %2480 = vmatpush1.xpose.msra.mxu0 0.0
    %2481 = vmatprep.subr.mxu0 0.0
    %2482 = vmatpush1.xpose.msra.mxu0 0.0
    %2483 = vmatprep.subr.mxu0 0.0
    %2484 = vmatpush1.xpose.msra.mxu0 0.0
    %2485 = vmatprep.subr.mxu0 0.0
    %2486 = vmatpush1.xpose.msra.mxu0 0.0
    %2487 = vmatprep.subr.mxu0 0.0
    %2488 = vmatpush1.xpose.msra.mxu0 0.0
    %2489 = vmatprep.subr.mxu0 0.0
    %2490 = vmatpush1.xpose.msra.mxu0 0.0
    %2491 = vmatprep.subr.mxu0 0.0
    %2492 = vmatpush1.xpose.msra.mxu0 0.0
    %2493 = vmatprep.subr.mxu0 0.0
    %2494 = vmatpush1.xpose.msra.mxu0 0.0
    %2495 = vmatprep.subr.mxu0 0.0
    %2496 = vmatpush1.xpose.msra.mxu0 0.0
    %2497 = vmatprep.subr.mxu0 0.0
    %2498 = vmatpush1.xpose.msra.mxu0 0.0
    %2499 = vmatprep.subr.mxu0 0.0
    %2500 = vmatpush1.xpose.msra.mxu0 0.0
    %2501 = vmatprep.subr.mxu0 0.0
    %2502 = vmatpush1.xpose.msra.mxu0 0.0
    %2503 = vmatprep.mubr.f32.mxu0 0.0
    %2504 = vmatmul.mubr.f32.gmra.mrb[0].mxu0 %v2435
    %v2505 = vpop.f32.mrb[0].mxu0
    %v2506 = vadd.f32 0.0, %v2505
    %v2507 = vpop.f32.mrb[0].mxu0
    %2508 = vdwg.mxu0
    %2509 = vrot.lane.b32.xlu0 %v1976, 96
    %v2510 = vpop.permute.xlu0 %2509
    %v2511 = vsel %vm183, %v1976, 0
    %v2513 = vsel %vm183, %v2510, 0
    %2515 = vmatprep.subr.mxu0 0.0
    %2516 = vmatpush1.xpose.msra.mxu0 %v2513
    %2517 = vmatprep.subr.mxu0 0.0
    %2518 = vmatpush1.xpose.msra.mxu0 0.0
    %2519 = vmatprep.subr.mxu0 0.0
    %2520 = vmatpush1.xpose.msra.mxu0 0.0
    %2521 = vmatprep.subr.mxu0 0.0
    %2522 = vmatpush1.xpose.msra.mxu0 0.0
    %2523 = vmatprep.subr.mxu0 0.0
    %2524 = vmatpush1.xpose.msra.mxu0 0.0
    %2525 = vmatprep.subr.mxu0 0.0
    %2526 = vmatpush1.xpose.msra.mxu0 0.0
    %2527 = vmatprep.subr.mxu0 0.0
    %2528 = vmatpush1.xpose.msra.mxu0 0.0
    %2529 = vmatprep.subr.mxu0 0.0
    %2530 = vmatpush1.xpose.msra.mxu0 0.0
    %2531 = vmatprep.subr.mxu0 0.0
    %2532 = vmatpush1.xpose.msra.mxu0 0.0
    %2533 = vmatprep.subr.mxu0 0.0
    %2534 = vmatpush1.xpose.msra.mxu0 0.0
    %2535 = vmatprep.subr.mxu0 0.0
    %2536 = vmatpush1.xpose.msra.mxu0 0.0
    %2537 = vmatprep.subr.mxu0 0.0
    %2538 = vmatpush1.xpose.msra.mxu0 0.0
    %2539 = vmatprep.subr.mxu0 0.0
    %2540 = vmatpush1.xpose.msra.mxu0 0.0
    %2541 = vmatprep.subr.mxu0 0.0
    %2542 = vmatpush1.xpose.msra.mxu0 0.0
    %2543 = vmatprep.subr.mxu0 0.0
    %2544 = vmatpush1.xpose.msra.mxu0 0.0
    %2545 = vmatprep.subr.mxu0 0.0
    %2546 = vmatpush1.xpose.msra.mxu0 0.0
    %2547 = vmatprep.subr.mxu0 0.0
    %2548 = vmatpush1.xpose.msra.mxu0 0.0
    %2549 = vmatprep.subr.mxu0 0.0
    %2550 = vmatpush1.xpose.msra.mxu0 0.0
    %2551 = vmatprep.subr.mxu0 0.0
    %2552 = vmatpush1.xpose.msra.mxu0 0.0
    %2553 = vmatprep.subr.mxu0 0.0
    %2554 = vmatpush1.xpose.msra.mxu0 0.0
    %2555 = vmatprep.subr.mxu0 0.0
    %2556 = vmatpush1.xpose.msra.mxu0 0.0
    %2557 = vmatprep.subr.mxu0 0.0
    %2558 = vmatpush1.xpose.msra.mxu0 0.0
    %2559 = vmatprep.subr.mxu0 0.0
    %2560 = vmatpush1.xpose.msra.mxu0 0.0
    %2561 = vmatprep.subr.mxu0 0.0
    %2562 = vmatpush1.xpose.msra.mxu0 0.0
    %2563 = vmatprep.subr.mxu0 0.0
    %2564 = vmatpush1.xpose.msra.mxu0 0.0
    %2565 = vmatprep.subr.mxu0 0.0
    %2566 = vmatpush1.xpose.msra.mxu0 0.0
    %2567 = vmatprep.subr.mxu0 0.0
    %2568 = vmatpush1.xpose.msra.mxu0 0.0
    %2569 = vmatprep.subr.mxu0 0.0
    %2570 = vmatpush1.xpose.msra.mxu0 0.0
    %2571 = vmatprep.subr.mxu0 0.0
    %2572 = vmatpush1.xpose.msra.mxu0 0.0
    %2573 = vmatprep.subr.mxu0 0.0
    %2574 = vmatpush1.xpose.msra.mxu0 0.0
    %2575 = vmatprep.subr.mxu0 0.0
    %2576 = vmatpush1.xpose.msra.mxu0 0.0
    %2577 = vmatprep.subr.mxu0 0.0
    %2578 = vmatpush1.xpose.msra.mxu0 0.0
    %2579 = vmatprep.mubr.f32.mxu0 0.0
    %2580 = vmatmul.mubr.f32.gmra.mrb[0].mxu0 %v2511
    %v2581 = vpop.f32.mrb[0].mxu0
    %v2582 = vadd.f32 0.0, %v2581
    %v2583 = vpop.f32.mrb[0].mxu0
    %2584 = vdwg.mxu0
    %v2585 = vsel %vm183, %v2050, -inf
    %2586 = vmax.xlane.f32.xlu0 %v2585
    %v2587 = vpop.xlane.xlu0 %2586
    %v2588 = vsel %vm183, %v2126, -inf
    %2589 = vmax.xlane.f32.xlu0 %v2588
    %v2590 = vpop.xlane.xlu0 %2589
    %v2591 = vsel %vm183, %v2202, -inf
    %2592 = vmax.xlane.f32.xlu0 %v2591
    %v2593 = vpop.xlane.xlu0 %2592
    %v2594 = vsel %vm183, %v2278, -inf
    %2595 = vmax.xlane.f32.xlu0 %v2594
    %v2596 = vpop.xlane.xlu0 %2595
    %v2597 = vsel %vm183, %v2354, -inf
    %2598 = vmax.xlane.f32.xlu0 %v2597
    %v2599 = vpop.xlane.xlu0 %2598
    %v2600 = vsel %vm183, %v2430, -inf
    %2601 = vmax.xlane.f32.xlu0 %v2600
    %v2602 = vpop.xlane.xlu0 %2601
    %v2603 = vsel %vm183, %v2506, -inf
    %2604 = vmax.xlane.f32.xlu0 %v2603
    %v2605 = vpop.xlane.xlu0 %2604
    %v2606 = vsel %vm183, %v2582, -inf
    %2607 = vmax.xlane.f32.xlu0 %v2606
    %v2608 = vpop.xlane.xlu0 %2607
    %v2609 = vsub.f32 %v2050, %v2587
    %v2610 = vsub.f32 %v2126, %v2590
    %v2611 = vsub.f32 %v2202, %v2593
    %v2612 = vsub.f32 %v2278, %v2596
    %v2613 = vsub.f32 %v2354, %v2599
    %v2614 = vsub.f32 %v2430, %v2602
    %v2615 = vsub.f32 %v2506, %v2605
    %v2616 = vsub.f32 %v2582, %v2608
    %v2617 = vmul.f32 %v2609, 1.442695
    %v2618 = vpow.pop %v2617
    %v2619 = vmul.f32 %v2610, 1.442695
    %v2620 = vpow.pop %v2619
    %v2621 = vmul.f32 %v2611, 1.442695
    %v2622 = vpow.pop %v2621
    %v2623 = vmul.f32 %v2612, 1.442695
    %v2624 = vpow.pop %v2623
    %v2625 = vmul.f32 %v2613, 1.442695
    %v2626 = vpow.pop %v2625
    %v2627 = vmul.f32 %v2614, 1.442695
    %v2628 = vpow.pop %v2627
    %v2629 = vmul.f32 %v2615, 1.442695
    %v2630 = vpow.pop %v2629
    %v2631 = vmul.f32 %v2616, 1.442695
    %v2632 = vpow.pop %v2631
    %v2633 = vsel %vm183, %v2618, 0.0
    %2634 = vadd.xlane.f32.xlu0 %v2633
    %v2635 = vpop.xlane.xlu0 %2634
    %v2636 = vsel %vm183, %v2620, 0.0
    %2637 = vadd.xlane.f32.xlu0 %v2636
    %v2638 = vpop.xlane.xlu0 %2637
    %v2639 = vsel %vm183, %v2622, 0.0
    %2640 = vadd.xlane.f32.xlu0 %v2639
    %v2641 = vpop.xlane.xlu0 %2640
    %v2642 = vsel %vm183, %v2624, 0.0
    %2643 = vadd.xlane.f32.xlu0 %v2642
    %v2644 = vpop.xlane.xlu0 %2643
    %v2645 = vsel %vm183, %v2626, 0.0
    %2646 = vadd.xlane.f32.xlu0 %v2645
    %v2647 = vpop.xlane.xlu0 %2646
    %v2648 = vsel %vm183, %v2628, 0.0
    %2649 = vadd.xlane.f32.xlu0 %v2648
    %v2650 = vpop.xlane.xlu0 %2649
    %v2651 = vsel %vm183, %v2630, 0.0
    %2652 = vadd.xlane.f32.xlu0 %v2651
    %v2653 = vpop.xlane.xlu0 %2652
    %v2654 = vsel %vm183, %v2632, 0.0
    %2655 = vadd.xlane.f32.xlu0 %v2654
    %v2656 = vpop.xlane.xlu0 %2655
    %v2657 = vrcp.pop %v2635
    %v2658 = vmul.f32 %v2618, %v2657
    %v2659 = vrcp.pop %v2638
    %v2660 = vmul.f32 %v2620, %v2659
    %v2661 = vrcp.pop %v2641
    %v2662 = vmul.f32 %v2622, %v2661
    %v2663 = vrcp.pop %v2644
    %v2664 = vmul.f32 %v2624, %v2663
    %v2665 = vrcp.pop %v2647
    %v2666 = vmul.f32 %v2626, %v2665
    %v2667 = vrcp.pop %v2650
    %v2668 = vmul.f32 %v2628, %v2667
    %v2669 = vrcp.pop %v2653
    %v2670 = vmul.f32 %v2630, %v2669
    %v2671 = vrcp.pop %v2656
    %v2672 = vmul.f32 %v2632, %v2671
    %2673 = vrot.lane.b32.xlu0 %v1955, 64
    %v2674 = vpop.permute.xlu0 %2673
    %v2677 = vsel %vm183, %v2658, 0
    %2679 = vmatprep.subr.mxu0 0.0
    %2680 = vmatpush1.msra.mxu0 %v2674
    %2681 = vmatprep.subr.mxu0 0.0
    %2682 = vmatpush1.msra.mxu0 0.0
    %2683 = vmatprep.subr.mxu0 0.0
    %2684 = vmatpush1.msra.mxu0 0.0
    %2685 = vmatprep.subr.mxu0 0.0
    %2686 = vmatpush1.msra.mxu0 0.0
    %2687 = vmatprep.subr.mxu0 0.0
    %2688 = vmatpush1.msra.mxu0 0.0
    %2689 = vmatprep.subr.mxu0 0.0
    %2690 = vmatpush1.msra.mxu0 0.0
    %2691 = vmatprep.subr.mxu0 0.0
    %2692 = vmatpush1.msra.mxu0 0.0
    %2693 = vmatprep.subr.mxu0 0.0
    %2694 = vmatpush1.msra.mxu0 0.0
    %2695 = vmatprep.subr.mxu0 0.0
    %2696 = vmatpush1.msra.mxu0 0.0
    %2697 = vmatprep.subr.mxu0 0.0
    %2698 = vmatpush1.msra.mxu0 0.0
    %2699 = vmatprep.subr.mxu0 0.0
    %2700 = vmatpush1.msra.mxu0 0.0
    %2701 = vmatprep.subr.mxu0 0.0
    %2702 = vmatpush1.msra.mxu0 0.0
    %2703 = vmatprep.subr.mxu0 0.0
    %2704 = vmatpush1.msra.mxu0 0.0
    %2705 = vmatprep.subr.mxu0 0.0
    %2706 = vmatpush1.msra.mxu0 0.0
    %2707 = vmatprep.subr.mxu0 0.0
    %2708 = vmatpush1.msra.mxu0 0.0
    %2709 = vmatprep.subr.mxu0 0.0
    %2710 = vmatpush1.msra.mxu0 0.0
    %2711 = vmatprep.subr.mxu0 0.0
    %2712 = vmatpush1.msra.mxu0 0.0
    %2713 = vmatprep.subr.mxu0 0.0
    %2714 = vmatpush1.msra.mxu0 0.0
    %2715 = vmatprep.subr.mxu0 0.0
    %2716 = vmatpush1.msra.mxu0 0.0
    %2717 = vmatprep.subr.mxu0 0.0
    %2718 = vmatpush1.msra.mxu0 0.0
    %2719 = vmatprep.subr.mxu0 0.0
    %2720 = vmatpush1.msra.mxu0 0.0
    %2721 = vmatprep.subr.mxu0 0.0
    %2722 = vmatpush1.msra.mxu0 0.0
    %2723 = vmatprep.subr.mxu0 0.0
    %2724 = vmatpush1.msra.mxu0 0.0
    %2725 = vmatprep.subr.mxu0 0.0
    %2726 = vmatpush1.msra.mxu0 0.0
    %2727 = vmatprep.subr.mxu0 0.0
    %2728 = vmatpush1.msra.mxu0 0.0
    %2729 = vmatprep.subr.mxu0 0.0
    %2730 = vmatpush1.msra.mxu0 0.0
    %2731 = vmatprep.subr.mxu0 0.0
    %2732 = vmatpush1.msra.mxu0 0.0
    %2733 = vmatprep.subr.mxu0 0.0
    %2734 = vmatpush1.msra.mxu0 0.0
    %2735 = vmatprep.subr.mxu0 0.0
    %2736 = vmatpush1.msra.mxu0 0.0
    %2737 = vmatprep.subr.mxu0 0.0
    %2738 = vmatpush1.msra.mxu0 0.0
    %2739 = vmatprep.subr.mxu0 0.0
    %2740 = vmatpush1.msra.mxu0 0.0
    %2741 = vmatprep.subr.mxu0 0.0
    %2742 = vmatpush1.msra.mxu0 0.0
    %2743 = vmatprep.mubr.f32.mxu0 0.0
    %2744 = vmatmul.mubr.f32.gmra.mrb[0].mxu0 %v2677
    %v2745 = vpop.f32.mrb[0].mxu0
    %v2746 = vadd.f32 0.0, %v2745
    %v2747 = vpop.f32.mrb[0].mxu0
    %2748 = vdwg.mxu0
    %2749 = vrot.lane.b32.xlu0 %v1960, 64
    %v2750 = vpop.permute.xlu0 %2749
    %v2753 = vsel %vm183, %v2660, 0
    %2755 = vmatprep.subr.mxu0 0.0
    %2756 = vmatpush1.msra.mxu0 %v2750
    %2757 = vmatprep.subr.mxu0 0.0
    %2758 = vmatpush1.msra.mxu0 0.0
    %2759 = vmatprep.subr.mxu0 0.0
    %2760 = vmatpush1.msra.mxu0 0.0
    %2761 = vmatprep.subr.mxu0 0.0
    %2762 = vmatpush1.msra.mxu0 0.0
    %2763 = vmatprep.subr.mxu0 0.0
    %2764 = vmatpush1.msra.mxu0 0.0
    %2765 = vmatprep.subr.mxu0 0.0
    %2766 = vmatpush1.msra.mxu0 0.0
    %2767 = vmatprep.subr.mxu0 0.0
    %2768 = vmatpush1.msra.mxu0 0.0
    %2769 = vmatprep.subr.mxu0 0.0
    %2770 = vmatpush1.msra.mxu0 0.0
    %2771 = vmatprep.subr.mxu0 0.0
    %2772 = vmatpush1.msra.mxu0 0.0
    %2773 = vmatprep.subr.mxu0 0.0
    %2774 = vmatpush1.msra.mxu0 0.0
    %2775 = vmatprep.subr.mxu0 0.0
    %2776 = vmatpush1.msra.mxu0 0.0
    %2777 = vmatprep.subr.mxu0 0.0
    %2778 = vmatpush1.msra.mxu0 0.0
    %2779 = vmatprep.subr.mxu0 0.0
    %2780 = vmatpush1.msra.mxu0 0.0
    %2781 = vmatprep.subr.mxu0 0.0
    %2782 = vmatpush1.msra.mxu0 0.0
    %2783 = vmatprep.subr.mxu0 0.0
    %2784 = vmatpush1.msra.mxu0 0.0
    %2785 = vmatprep.subr.mxu0 0.0
    %2786 = vmatpush1.msra.mxu0 0.0
    %2787 = vmatprep.subr.mxu0 0.0
    %2788 = vmatpush1.msra.mxu0 0.0
    %2789 = vmatprep.subr.mxu0 0.0
    %2790 = vmatpush1.msra.mxu0 0.0
    %2791 = vmatprep.subr.mxu0 0.0
    %2792 = vmatpush1.msra.mxu0 0.0
    %2793 = vmatprep.subr.mxu0 0.0
    %2794 = vmatpush1.msra.mxu0 0.0
    %2795 = vmatprep.subr.mxu0 0.0
    %2796 = vmatpush1.msra.mxu0 0.0
    %2797 = vmatprep.subr.mxu0 0.0
    %2798 = vmatpush1.msra.mxu0 0.0
    %2799 = vmatprep.subr.mxu0 0.0
    %2800 = vmatpush1.msra.mxu0 0.0
    %2801 = vmatprep.subr.mxu0 0.0
    %2802 = vmatpush1.msra.mxu0 0.0
    %2803 = vmatprep.subr.mxu0 0.0
    %2804 = vmatpush1.msra.mxu0 0.0
    %2805 = vmatprep.subr.mxu0 0.0
    %2806 = vmatpush1.msra.mxu0 0.0
    %2807 = vmatprep.subr.mxu0 0.0
    %2808 = vmatpush1.msra.mxu0 0.0
    %2809 = vmatprep.subr.mxu0 0.0
    %2810 = vmatpush1.msra.mxu0 0.0
    %2811 = vmatprep.subr.mxu0 0.0
    %2812 = vmatpush1.msra.mxu0 0.0
    %2813 = vmatprep.subr.mxu0 0.0
    %2814 = vmatpush1.msra.mxu0 0.0
    %2815 = vmatprep.subr.mxu0 0.0
    %2816 = vmatpush1.msra.mxu0 0.0
    %2817 = vmatprep.subr.mxu0 0.0
    %2818 = vmatpush1.msra.mxu0 0.0
    %2819 = vmatprep.mubr.f32.mxu0 0.0
    %2820 = vmatmul.mubr.f32.gmra.mrb[0].mxu0 %v2753
    %v2821 = vpop.f32.mrb[0].mxu0
    %v2822 = vadd.f32 0.0, %v2821
    %v2823 = vpop.f32.mrb[0].mxu0
    %2824 = vdwg.mxu0
    %2825 = vrot.lane.b32.xlu0 %v1966, 64
    %v2826 = vpop.permute.xlu0 %2825
    %v2829 = vsel %vm183, %v2662, 0
    %2831 = vmatprep.subr.mxu0 0.0
    %2832 = vmatpush1.msra.mxu0 %v2826
    %2833 = vmatprep.subr.mxu0 0.0
    %2834 = vmatpush1.msra.mxu0 0.0
    %2835 = vmatprep.subr.mxu0 0.0
    %2836 = vmatpush1.msra.mxu0 0.0
    %2837 = vmatprep.subr.mxu0 0.0
    %2838 = vmatpush1.msra.mxu0 0.0
    %2839 = vmatprep.subr.mxu0 0.0
    %2840 = vmatpush1.msra.mxu0 0.0
    %2841 = vmatprep.subr.mxu0 0.0
    %2842 = vmatpush1.msra.mxu0 0.0
    %2843 = vmatprep.subr.mxu0 0.0
    %2844 = vmatpush1.msra.mxu0 0.0
    %2845 = vmatprep.subr.mxu0 0.0
    %2846 = vmatpush1.msra.mxu0 0.0
    %2847 = vmatprep.subr.mxu0 0.0
    %2848 = vmatpush1.msra.mxu0 0.0
    %2849 = vmatprep.subr.mxu0 0.0
    %2850 = vmatpush1.msra.mxu0 0.0
    %2851 = vmatprep.subr.mxu0 0.0
    %2852 = vmatpush1.msra.mxu0 0.0
    %2853 = vmatprep.subr.mxu0 0.0
    %2854 = vmatpush1.msra.mxu0 0.0
    %2855 = vmatprep.subr.mxu0 0.0
    %2856 = vmatpush1.msra.mxu0 0.0
    %2857 = vmatprep.subr.mxu0 0.0
    %2858 = vmatpush1.msra.mxu0 0.0
    %2859 = vmatprep.subr.mxu0 0.0
    %2860 = vmatpush1.msra.mxu0 0.0
    %2861 = vmatprep.subr.mxu0 0.0
    %2862 = vmatpush1.msra.mxu0 0.0
    %2863 = vmatprep.subr.mxu0 0.0
    %2864 = vmatpush1.msra.mxu0 0.0
    %2865 = vmatprep.subr.mxu0 0.0
    %2866 = vmatpush1.msra.mxu0 0.0
    %2867 = vmatprep.subr.mxu0 0.0
    %2868 = vmatpush1.msra.mxu0 0.0
    %2869 = vmatprep.subr.mxu0 0.0
    %2870 = vmatpush1.msra.mxu0 0.0
    %2871 = vmatprep.subr.mxu0 0.0
    %2872 = vmatpush1.msra.mxu0 0.0
    %2873 = vmatprep.subr.mxu0 0.0
    %2874 = vmatpush1.msra.mxu0 0.0
    %2875 = vmatprep.subr.mxu0 0.0
    %2876 = vmatpush1.msra.mxu0 0.0
    %2877 = vmatprep.subr.mxu0 0.0
    %2878 = vmatpush1.msra.mxu0 0.0
    %2879 = vmatprep.subr.mxu0 0.0
    %2880 = vmatpush1.msra.mxu0 0.0
    %2881 = vmatprep.subr.mxu0 0.0
    %2882 = vmatpush1.msra.mxu0 0.0
    %2883 = vmatprep.subr.mxu0 0.0
    %2884 = vmatpush1.msra.mxu0 0.0
    %2885 = vmatprep.subr.mxu0 0.0
    %2886 = vmatpush1.msra.mxu0 0.0
    %2887 = vmatprep.subr.mxu0 0.0
    %2888 = vmatpush1.msra.mxu0 0.0
    %2889 = vmatprep.subr.mxu0 0.0
    %2890 = vmatpush1.msra.mxu0 0.0
    %2891 = vmatprep.subr.mxu0 0.0
    %2892 = vmatpush1.msra.mxu0 0.0
    %2893 = vmatprep.subr.mxu0 0.0
    %2894 = vmatpush1.msra.mxu0 0.0
    %2895 = vmatprep.mubr.f32.mxu0 0.0
    %2896 = vmatmul.mubr.f32.gmra.mrb[0].mxu0 %v2829
    %v2897 = vpop.f32.mrb[0].mxu0
    %v2898 = vadd.f32 0.0, %v2897
    %v2899 = vpop.f32.mrb[0].mxu0
    %2900 = vdwg.mxu0
    %2901 = vrot.lane.b32.xlu0 %v1968, 64
    %v2902 = vpop.permute.xlu0 %2901
    %v2905 = vsel %vm183, %v2664, 0
    %2907 = vmatprep.subr.mxu0 0.0
    %2908 = vmatpush1.msra.mxu0 %v2902
    %2909 = vmatprep.subr.mxu0 0.0
    %2910 = vmatpush1.msra.mxu0 0.0
    %2911 = vmatprep.subr.mxu0 0.0
    %2912 = vmatpush1.msra.mxu0 0.0
    %2913 = vmatprep.subr.mxu0 0.0
    %2914 = vmatpush1.msra.mxu0 0.0
    %2915 = vmatprep.subr.mxu0 0.0
    %2916 = vmatpush1.msra.mxu0 0.0
    %2917 = vmatprep.subr.mxu0 0.0
    %2918 = vmatpush1.msra.mxu0 0.0
    %2919 = vmatprep.subr.mxu0 0.0
    %2920 = vmatpush1.msra.mxu0 0.0
    %2921 = vmatprep.subr.mxu0 0.0
    %2922 = vmatpush1.msra.mxu0 0.0
    %2923 = vmatprep.subr.mxu0 0.0
    %2924 = vmatpush1.msra.mxu0 0.0
    %2925 = vmatprep.subr.mxu0 0.0
    %2926 = vmatpush1.msra.mxu0 0.0
    %2927 = vmatprep.subr.mxu0 0.0
    %2928 = vmatpush1.msra.mxu0 0.0
    %2929 = vmatprep.subr.mxu0 0.0
    %2930 = vmatpush1.msra.mxu0 0.0
    %2931 = vmatprep.subr.mxu0 0.0
    %2932 = vmatpush1.msra.mxu0 0.0
    %2933 = vmatprep.subr.mxu0 0.0
    %2934 = vmatpush1.msra.mxu0 0.0
    %2935 = vmatprep.subr.mxu0 0.0
    %2936 = vmatpush1.msra.mxu0 0.0
    %2937 = vmatprep.subr.mxu0 0.0
    %2938 = vmatpush1.msra.mxu0 0.0
    %2939 = vmatprep.subr.mxu0 0.0
    %2940 = vmatpush1.msra.mxu0 0.0
    %2941 = vmatprep.subr.mxu0 0.0
    %2942 = vmatpush1.msra.mxu0 0.0
    %2943 = vmatprep.subr.mxu0 0.0
    %2944 = vmatpush1.msra.mxu0 0.0
    %2945 = vmatprep.subr.mxu0 0.0
    %2946 = vmatpush1.msra.mxu0 0.0
    %2947 = vmatprep.subr.mxu0 0.0
    %2948 = vmatpush1.msra.mxu0 0.0
    %2949 = vmatprep.subr.mxu0 0.0
    %2950 = vmatpush1.msra.mxu0 0.0
    %2951 = vmatprep.subr.mxu0 0.0
    %2952 = vmatpush1.msra.mxu0 0.0
    %2953 = vmatprep.subr.mxu0 0.0
    %2954 = vmatpush1.msra.mxu0 0.0
    %2955 = vmatprep.subr.mxu0 0.0
    %2956 = vmatpush1.msra.mxu0 0.0
    %2957 = vmatprep.subr.mxu0 0.0
    %2958 = vmatpush1.msra.mxu0 0.0
    %2959 = vmatprep.subr.mxu0 0.0
    %2960 = vmatpush1.msra.mxu0 0.0
    %2961 = vmatprep.subr.mxu0 0.0
    %2962 = vmatpush1.msra.mxu0 0.0
    %2963 = vmatprep.subr.mxu0 0.0
    %2964 = vmatpush1.msra.mxu0 0.0
    %2965 = vmatprep.subr.mxu0 0.0
    %2966 = vmatpush1.msra.mxu0 0.0
    %2967 = vmatprep.subr.mxu0 0.0
    %2968 = vmatpush1.msra.mxu0 0.0
    %2969 = vmatprep.subr.mxu0 0.0
    %2970 = vmatpush1.msra.mxu0 0.0
    %2971 = vmatprep.mubr.f32.mxu0 0.0
    %2972 = vmatmul.mubr.f32.gmra.mrb[0].mxu0 %v2905
    %v2973 = vpop.f32.mrb[0].mxu0
    %v2974 = vadd.f32 0.0, %v2973
    %v2975 = vpop.f32.mrb[0].mxu0
    %2976 = vdwg.mxu0
    %2977 = vrot.lane.b32.xlu0 %v1970, 64
    %v2978 = vpop.permute.xlu0 %2977
    %v2981 = vsel %vm183, %v2666, 0
    %2983 = vmatprep.subr.mxu0 0.0
    %2984 = vmatpush1.msra.mxu0 %v2978
    %2985 = vmatprep.subr.mxu0 0.0
    %2986 = vmatpush1.msra.mxu0 0.0
    %2987 = vmatprep.subr.mxu0 0.0
    %2988 = vmatpush1.msra.mxu0 0.0
    %2989 = vmatprep.subr.mxu0 0.0
    %2990 = vmatpush1.msra.mxu0 0.0
    %2991 = vmatprep.subr.mxu0 0.0
    %2992 = vmatpush1.msra.mxu0 0.0
    %2993 = vmatprep.subr.mxu0 0.0
    %2994 = vmatpush1.msra.mxu0 0.0
    %2995 = vmatprep.subr.mxu0 0.0
    %2996 = vmatpush1.msra.mxu0 0.0
    %2997 = vmatprep.subr.mxu0 0.0
    %2998 = vmatpush1.msra.mxu0 0.0
    %2999 = vmatprep.subr.mxu0 0.0
    %3000 = vmatpush1.msra.mxu0 0.0
    %3001 = vmatprep.subr.mxu0 0.0
    %3002 = vmatpush1.msra.mxu0 0.0
    %3003 = vmatprep.subr.mxu0 0.0
    %3004 = vmatpush1.msra.mxu0 0.0
    %3005 = vmatprep.subr.mxu0 0.0
    %3006 = vmatpush1.msra.mxu0 0.0
    %3007 = vmatprep.subr.mxu0 0.0
    %3008 = vmatpush1.msra.mxu0 0.0
    %3009 = vmatprep.subr.mxu0 0.0
    %3010 = vmatpush1.msra.mxu0 0.0
    %3011 = vmatprep.subr.mxu0 0.0
    %3012 = vmatpush1.msra.mxu0 0.0
    %3013 = vmatprep.subr.mxu0 0.0
    %3014 = vmatpush1.msra.mxu0 0.0
    %3015 = vmatprep.subr.mxu0 0.0
    %3016 = vmatpush1.msra.mxu0 0.0
    %3017 = vmatprep.subr.mxu0 0.0
    %3018 = vmatpush1.msra.mxu0 0.0
    %3019 = vmatprep.subr.mxu0 0.0
    %3020 = vmatpush1.msra.mxu0 0.0
    %3021 = vmatprep.subr.mxu0 0.0
    %3022 = vmatpush1.msra.mxu0 0.0
    %3023 = vmatprep.subr.mxu0 0.0
    %3024 = vmatpush1.msra.mxu0 0.0
    %3025 = vmatprep.subr.mxu0 0.0
    %3026 = vmatpush1.msra.mxu0 0.0
    %3027 = vmatprep.subr.mxu0 0.0
    %3028 = vmatpush1.msra.mxu0 0.0
    %3029 = vmatprep.subr.mxu0 0.0
    %3030 = vmatpush1.msra.mxu0 0.0
    %3031 = vmatprep.subr.mxu0 0.0
    %3032 = vmatpush1.msra.mxu0 0.0
    %3033 = vmatprep.subr.mxu0 0.0
    %3034 = vmatpush1.msra.mxu0 0.0
    %3035 = vmatprep.subr.mxu0 0.0
    %3036 = vmatpush1.msra.mxu0 0.0
    %3037 = vmatprep.subr.mxu0 0.0
    %3038 = vmatpush1.msra.mxu0 0.0
    %3039 = vmatprep.subr.mxu0 0.0
    %3040 = vmatpush1.msra.mxu0 0.0
    %3041 = vmatprep.subr.mxu0 0.0
    %3042 = vmatpush1.msra.mxu0 0.0
    %3043 = vmatprep.subr.mxu0 0.0
    %3044 = vmatpush1.msra.mxu0 0.0
    %3045 = vmatprep.subr.mxu0 0.0
    %3046 = vmatpush1.msra.mxu0 0.0
    %3047 = vmatprep.mubr.f32.mxu0 0.0
    %3048 = vmatmul.mubr.f32.gmra.mrb[0].mxu0 %v2981
    %v3049 = vpop.f32.mrb[0].mxu0
    %v3050 = vadd.f32 0.0, %v3049
    %v3051 = vpop.f32.mrb[0].mxu0
    %3052 = vdwg.mxu0
    %3053 = vrot.lane.b32.xlu0 %v1972, 64
    %v3054 = vpop.permute.xlu0 %3053
    %v3057 = vsel %vm183, %v2668, 0
    %3059 = vmatprep.subr.mxu0 0.0
    %3060 = vmatpush1.msra.mxu0 %v3054
    %3061 = vmatprep.subr.mxu0 0.0
    %3062 = vmatpush1.msra.mxu0 0.0
    %3063 = vmatprep.subr.mxu0 0.0
    %3064 = vmatpush1.msra.mxu0 0.0
    %3065 = vmatprep.subr.mxu0 0.0
    %3066 = vmatpush1.msra.mxu0 0.0
    %3067 = vmatprep.subr.mxu0 0.0
    %3068 = vmatpush1.msra.mxu0 0.0
    %3069 = vmatprep.subr.mxu0 0.0
    %3070 = vmatpush1.msra.mxu0 0.0
    %3071 = vmatprep.subr.mxu0 0.0
    %3072 = vmatpush1.msra.mxu0 0.0
    %3073 = vmatprep.subr.mxu0 0.0
    %3074 = vmatpush1.msra.mxu0 0.0
    %3075 = vmatprep.subr.mxu0 0.0
    %3076 = vmatpush1.msra.mxu0 0.0
    %3077 = vmatprep.subr.mxu0 0.0
    %3078 = vmatpush1.msra.mxu0 0.0
    %3079 = vmatprep.subr.mxu0 0.0
    %3080 = vmatpush1.msra.mxu0 0.0
    %3081 = vmatprep.subr.mxu0 0.0
    %3082 = vmatpush1.msra.mxu0 0.0
    %3083 = vmatprep.subr.mxu0 0.0
    %3084 = vmatpush1.msra.mxu0 0.0
    %3085 = vmatprep.subr.mxu0 0.0
    %3086 = vmatpush1.msra.mxu0 0.0
    %3087 = vmatprep.subr.mxu0 0.0
    %3088 = vmatpush1.msra.mxu0 0.0
    %3089 = vmatprep.subr.mxu0 0.0
    %3090 = vmatpush1.msra.mxu0 0.0
    %3091 = vmatprep.subr.mxu0 0.0
    %3092 = vmatpush1.msra.mxu0 0.0
    %3093 = vmatprep.subr.mxu0 0.0
    %3094 = vmatpush1.msra.mxu0 0.0
    %3095 = vmatprep.subr.mxu0 0.0
    %3096 = vmatpush1.msra.mxu0 0.0
    %3097 = vmatprep.subr.mxu0 0.0
    %3098 = vmatpush1.msra.mxu0 0.0
    %3099 = vmatprep.subr.mxu0 0.0
    %3100 = vmatpush1.msra.mxu0 0.0
    %3101 = vmatprep.subr.mxu0 0.0
    %3102 = vmatpush1.msra.mxu0 0.0
    %3103 = vmatprep.subr.mxu0 0.0
    %3104 = vmatpush1.msra.mxu0 0.0
    %3105 = vmatprep.subr.mxu0 0.0
    %3106 = vmatpush1.msra.mxu0 0.0
    %3107 = vmatprep.subr.mxu0 0.0
    %3108 = vmatpush1.msra.mxu0 0.0
    %3109 = vmatprep.subr.mxu0 0.0
    %3110 = vmatpush1.msra.mxu0 0.0
    %3111 = vmatprep.subr.mxu0 0.0
    %3112 = vmatpush1.msra.mxu0 0.0
    %3113 = vmatprep.subr.mxu0 0.0
    %3114 = vmatpush1.msra.mxu0 0.0
    %3115 = vmatprep.subr.mxu0 0.0
    %3116 = vmatpush1.msra.mxu0 0.0
    %3117 = vmatprep.subr.mxu0 0.0
    %3118 = vmatpush1.msra.mxu0 0.0
    %3119 = vmatprep.subr.mxu0 0.0
    %3120 = vmatpush1.msra.mxu0 0.0
    %3121 = vmatprep.subr.mxu0 0.0
    %3122 = vmatpush1.msra.mxu0 0.0
    %3123 = vmatprep.mubr.f32.mxu0 0.0
    %3124 = vmatmul.mubr.f32.gmra.mrb[0].mxu0 %v3057
    %v3125 = vpop.f32.mrb[0].mxu0
    %v3126 = vadd.f32 0.0, %v3125
    %v3127 = vpop.f32.mrb[0].mxu0
    %3128 = vdwg.mxu0
    %3129 = vrot.lane.b32.xlu0 %v1974, 64
    %v3130 = vpop.permute.xlu0 %3129
    %v3133 = vsel %vm183, %v2670, 0
    %3135 = vmatprep.subr.mxu0 0.0
    %3136 = vmatpush1.msra.mxu0 %v3130
    %3137 = vmatprep.subr.mxu0 0.0
    %3138 = vmatpush1.msra.mxu0 0.0
    %3139 = vmatprep.subr.mxu0 0.0
    %3140 = vmatpush1.msra.mxu0 0.0
    %3141 = vmatprep.subr.mxu0 0.0
    %3142 = vmatpush1.msra.mxu0 0.0
    %3143 = vmatprep.subr.mxu0 0.0
    %3144 = vmatpush1.msra.mxu0 0.0
    %3145 = vmatprep.subr.mxu0 0.0
    %3146 = vmatpush1.msra.mxu0 0.0
    %3147 = vmatprep.subr.mxu0 0.0
    %3148 = vmatpush1.msra.mxu0 0.0
    %3149 = vmatprep.subr.mxu0 0.0
    %3150 = vmatpush1.msra.mxu0 0.0
    %3151 = vmatprep.subr.mxu0 0.0
    %3152 = vmatpush1.msra.mxu0 0.0
    %3153 = vmatprep.subr.mxu0 0.0
    %3154 = vmatpush1.msra.mxu0 0.0
    %3155 = vmatprep.subr.mxu0 0.0
    %3156 = vmatpush1.msra.mxu0 0.0
    %3157 = vmatprep.subr.mxu0 0.0
    %3158 = vmatpush1.msra.mxu0 0.0
    %3159 = vmatprep.subr.mxu0 0.0
    %3160 = vmatpush1.msra.mxu0 0.0
    %3161 = vmatprep.subr.mxu0 0.0
    %3162 = vmatpush1.msra.mxu0 0.0
    %3163 = vmatprep.subr.mxu0 0.0
    %3164 = vmatpush1.msra.mxu0 0.0
    %3165 = vmatprep.subr.mxu0 0.0
    %3166 = vmatpush1.msra.mxu0 0.0
    %3167 = vmatprep.subr.mxu0 0.0
    %3168 = vmatpush1.msra.mxu0 0.0
    %3169 = vmatprep.subr.mxu0 0.0
    %3170 = vmatpush1.msra.mxu0 0.0
    %3171 = vmatprep.subr.mxu0 0.0
    %3172 = vmatpush1.msra.mxu0 0.0
    %3173 = vmatprep.subr.mxu0 0.0
    %3174 = vmatpush1.msra.mxu0 0.0
    %3175 = vmatprep.subr.mxu0 0.0
    %3176 = vmatpush1.msra.mxu0 0.0
    %3177 = vmatprep.subr.mxu0 0.0
    %3178 = vmatpush1.msra.mxu0 0.0
    %3179 = vmatprep.subr.mxu0 0.0
    %3180 = vmatpush1.msra.mxu0 0.0
    %3181 = vmatprep.subr.mxu0 0.0
    %3182 = vmatpush1.msra.mxu0 0.0
    %3183 = vmatprep.subr.mxu0 0.0
    %3184 = vmatpush1.msra.mxu0 0.0
    %3185 = vmatprep.subr.mxu0 0.0
    %3186 = vmatpush1.msra.mxu0 0.0
    %3187 = vmatprep.subr.mxu0 0.0
    %3188 = vmatpush1.msra.mxu0 0.0
    %3189 = vmatprep.subr.mxu0 0.0
    %3190 = vmatpush1.msra.mxu0 0.0
    %3191 = vmatprep.subr.mxu0 0.0
    %3192 = vmatpush1.msra.mxu0 0.0
    %3193 = vmatprep.subr.mxu0 0.0
    %3194 = vmatpush1.msra.mxu0 0.0
    %3195 = vmatprep.subr.mxu0 0.0
    %3196 = vmatpush1.msra.mxu0 0.0
    %3197 = vmatprep.subr.mxu0 0.0
    %3198 = vmatpush1.msra.mxu0 0.0
    %3199 = vmatprep.mubr.f32.mxu0 0.0
    %3200 = vmatmul.mubr.f32.gmra.mrb[0].mxu0 %v3133
    %v3201 = vpop.f32.mrb[0].mxu0
    %v3202 = vadd.f32 0.0, %v3201
    %v3203 = vpop.f32.mrb[0].mxu0
    %3204 = vdwg.mxu0
    %3205 = vrot.lane.b32.xlu0 %v1976, 64
    %v3206 = vpop.permute.xlu0 %3205
    %v3209 = vsel %vm183, %v2672, 0
    %3211 = vmatprep.subr.mxu0 0.0
    %3212 = vmatpush1.msra.mxu0 %v3206
    %3213 = vmatprep.subr.mxu0 0.0
    %3214 = vmatpush1.msra.mxu0 0.0
    %3215 = vmatprep.subr.mxu0 0.0
    %3216 = vmatpush1.msra.mxu0 0.0
    %3217 = vmatprep.subr.mxu0 0.0
    %3218 = vmatpush1.msra.mxu0 0.0
    %3219 = vmatprep.subr.mxu0 0.0
    %3220 = vmatpush1.msra.mxu0 0.0
    %3221 = vmatprep.subr.mxu0 0.0
    %3222 = vmatpush1.msra.mxu0 0.0
    %3223 = vmatprep.subr.mxu0 0.0
    %3224 = vmatpush1.msra.mxu0 0.0
    %3225 = vmatprep.subr.mxu0 0.0
    %3226 = vmatpush1.msra.mxu0 0.0
    %3227 = vmatprep.subr.mxu0 0.0
    %3228 = vmatpush1.msra.mxu0 0.0
    %3229 = vmatprep.subr.mxu0 0.0
    %3230 = vmatpush1.msra.mxu0 0.0
    %3231 = vmatprep.subr.mxu0 0.0
    %3232 = vmatpush1.msra.mxu0 0.0
    %3233 = vmatprep.subr.mxu0 0.0
    %3234 = vmatpush1.msra.mxu0 0.0
    %3235 = vmatprep.subr.mxu0 0.0
    %3236 = vmatpush1.msra.mxu0 0.0
    %3237 = vmatprep.subr.mxu0 0.0
    %3238 = vmatpush1.msra.mxu0 0.0
    %3239 = vmatprep.subr.mxu0 0.0
    %3240 = vmatpush1.msra.mxu0 0.0
    %3241 = vmatprep.subr.mxu0 0.0
    %3242 = vmatpush1.msra.mxu0 0.0
    %3243 = vmatprep.subr.mxu0 0.0
    %3244 = vmatpush1.msra.mxu0 0.0
    %3245 = vmatprep.subr.mxu0 0.0
    %3246 = vmatpush1.msra.mxu0 0.0
    %3247 = vmatprep.subr.mxu0 0.0
    %3248 = vmatpush1.msra.mxu0 0.0
    %3249 = vmatprep.subr.mxu0 0.0
    %3250 = vmatpush1.msra.mxu0 0.0
    %3251 = vmatprep.subr.mxu0 0.0
    %3252 = vmatpush1.msra.mxu0 0.0
    %3253 = vmatprep.subr.mxu0 0.0
    %3254 = vmatpush1.msra.mxu0 0.0
    %3255 = vmatprep.subr.mxu0 0.0
    %3256 = vmatpush1.msra.mxu0 0.0
    %3257 = vmatprep.subr.mxu0 0.0
    %3258 = vmatpush1.msra.mxu0 0.0
    %3259 = vmatprep.subr.mxu0 0.0
    %3260 = vmatpush1.msra.mxu0 0.0
    %3261 = vmatprep.subr.mxu0 0.0
    %3262 = vmatpush1.msra.mxu0 0.0
    %3263 = vmatprep.subr.mxu0 0.0
    %3264 = vmatpush1.msra.mxu0 0.0
    %3265 = vmatprep.subr.mxu0 0.0
    %3266 = vmatpush1.msra.mxu0 0.0
    %3267 = vmatprep.subr.mxu0 0.0
    %3268 = vmatpush1.msra.mxu0 0.0
    %3269 = vmatprep.subr.mxu0 0.0
    %3270 = vmatpush1.msra.mxu0 0.0
    %3271 = vmatprep.subr.mxu0 0.0
    %3272 = vmatpush1.msra.mxu0 0.0
    %3273 = vmatprep.subr.mxu0 0.0
    %3274 = vmatpush1.msra.mxu0 0.0
    %3275 = vmatprep.mubr.f32.mxu0 0.0
    %3276 = vmatmul.mubr.f32.gmra.mrb[0].mxu0 %v3209
    %v3277 = vpop.f32.mrb[0].mxu0
    %v3278 = vadd.f32 0.0, %v3277
    %v3279 = vpop.f32.mrb[0].mxu0
    %3280 = vdwg.mxu0
    %3283 = vrot.lane.b32.xlu0 %v2898, 8
    %v3284 = vpop.permute.xlu0 %3283
    %3285 = vrot.lane.b32.xlu0 %v2974, 8
    %v3286 = vpop.permute.xlu0 %3285
    %3291 = vrot.lane.b32.xlu0 %v3050, 16
    %v3292 = vpop.permute.xlu0 %3291
    %3293 = vrot.lane.b32.xlu0 %v3126, 16
    %v3294 = vpop.permute.xlu0 %3293
    %3299 = vrot.lane.b32.xlu0 %v3202, 24
    %v3300 = vpop.permute.xlu0 %3299
    %3301 = vrot.lane.b32.xlu0 %v3278, 24
    %v3302 = vpop.permute.xlu0 %3301
    %v3305 = vsel %vm183, %v2746, %v3284
    %v3306 = vsel %vm183, %v2822, %v3286
    %v3307 = vsel %vm1512, %v3305, %v3292
    %v3308 = vsel %vm1512, %v3306, %v3294
    %v3309 = vsel %vm1515, %v3307, %v3300
    %v3310 = vsel %vm1515, %v3308, %v3302
    %v3311 = vlaneseq
    %v3312 = vshrl.u32 %v3311, 7
    %v3313 = vsub.s32 1, %v3312
    %v3314 = vrot.slane %v59, %v3313
    %v3316 = vsel %vm85, %v3309, 0
    %v3319 = vsel %vm85, %v3310, 0
    %3321 = vmatprep.subr.mxu0 0.0
    %3322 = vmatpush1.msra.mxu0 %v1862
    %3323 = vmatprep.subr.mxu0 0.0
    %3324 = vmatpush1.msra.mxu0 %v1863
    %3325 = vmatprep.subr.mxu0 0.0
    %3326 = vmatpush1.msra.mxu0 %v1864
    %3327 = vmatprep.subr.mxu0 0.0
    %3328 = vmatpush1.msra.mxu0 %v1865
    %3329 = vmatprep.subr.mxu0 0.0
    %3330 = vmatpush1.msra.mxu0 0.0
    %3331 = vmatprep.subr.mxu0 0.0
    %3332 = vmatpush1.msra.mxu0 0.0
    %3333 = vmatprep.subr.mxu0 0.0
    %3334 = vmatpush1.msra.mxu0 0.0
    %3335 = vmatprep.subr.mxu0 0.0
    %3336 = vmatpush1.msra.mxu0 0.0
    %3337 = vmatprep.subr.mxu0 0.0
    %3338 = vmatpush1.msra.mxu0 0.0
    %3339 = vmatprep.subr.mxu0 0.0
    %3340 = vmatpush1.msra.mxu0 0.0
    %3341 = vmatprep.subr.mxu0 0.0
    %3342 = vmatpush1.msra.mxu0 0.0
    %3343 = vmatprep.subr.mxu0 0.0
    %3344 = vmatpush1.msra.mxu0 0.0
    %3345 = vmatprep.subr.mxu0 0.0
    %3346 = vmatpush1.msra.mxu0 0.0
    %3347 = vmatprep.subr.mxu0 0.0
    %3348 = vmatpush1.msra.mxu0 0.0
    %3349 = vmatprep.subr.mxu0 0.0
    %3350 = vmatpush1.msra.mxu0 0.0
    %3351 = vmatprep.subr.mxu0 0.0
    %3352 = vmatpush1.msra.mxu0 0.0
    %3353 = vmatprep.subr.mxu0 0.0
    %3354 = vmatpush1.msra.mxu0 0.0
    %3355 = vmatprep.subr.mxu0 0.0
    %3356 = vmatpush1.msra.mxu0 0.0
    %3357 = vmatprep.subr.mxu0 0.0
    %3358 = vmatpush1.msra.mxu0 0.0
    %3359 = vmatprep.subr.mxu0 0.0
    %3360 = vmatpush1.msra.mxu0 0.0
    %3361 = vmatprep.subr.mxu0 0.0
    %3362 = vmatpush1.msra.mxu0 0.0
    %3363 = vmatprep.subr.mxu0 0.0
    %3364 = vmatpush1.msra.mxu0 0.0
    %3365 = vmatprep.subr.mxu0 0.0
    %3366 = vmatpush1.msra.mxu0 0.0
    %3367 = vmatprep.subr.mxu0 0.0
    %3368 = vmatpush1.msra.mxu0 0.0
    %3369 = vmatprep.subr.mxu0 0.0
    %3370 = vmatpush1.msra.mxu0 0.0
    %3371 = vmatprep.subr.mxu0 0.0
    %3372 = vmatpush1.msra.mxu0 0.0
    %3373 = vmatprep.subr.mxu0 0.0
    %3374 = vmatpush1.msra.mxu0 0.0
    %3375 = vmatprep.subr.mxu0 0.0
    %3376 = vmatpush1.msra.mxu0 0.0
    %3377 = vmatprep.subr.mxu0 0.0
    %3378 = vmatpush1.msra.mxu0 0.0
    %3379 = vmatprep.subr.mxu0 0.0
    %3380 = vmatpush1.msra.mxu0 0.0
    %3381 = vmatprep.subr.mxu0 0.0
    %3382 = vmatpush1.msra.mxu0 0.0
    %3383 = vmatprep.subr.mxu0 0.0
    %3384 = vmatpush1.msra.mxu0 0.0
    %3385 = vmatprep.mubr.f32.mxu0 0.0
    %3386 = vmatmul.mubr.f32.gmra.mrb[0].mxu0 %v3316
    %v3387 = vpop.f32.mrb[0].mxu0
    %v3388 = vadd.f32 %v3314, %v3387
    %v3389 = vpop.f32.mrb[0].mxu0
    %3390 = vmatprep.mubr.f32.mxu0 0.0
    %3391 = vmatmul.mubr.f32.gmra.mrb[0].mxu0 %v3319
    %v3392 = vpop.f32.mrb[0].mxu0
    %v3393 = vadd.f32 %v3314, %v3392
    %v3394 = vpop.f32.mrb[0].mxu0
    %3395 = vdwg.mxu0
    %v3396 = vadd.f32 %v1855, %v3388
    %v3397 = vadd.f32 %v1856, %v3393
    %v3398 = vsel %vm85, %v3396, 0.0
    %3399 = vadd.xlane.f32.xlu0 %v3398
    %v3400 = vpop.xlane.xlu0 %3399
    %v3401 = vsel %vm85, %v3397, 0.0
    %3402 = vadd.xlane.f32.xlu0 %v3401
    %v3403 = vpop.xlane.xlu0 %3402
    %v3404 = vmul.f32 %v3400, %v1611
    %v3405 = vmul.f32 %v3403, %v1611
    %v3406 = vsub.f32 %v3396, %v3404
    %v3407 = vsub.f32 %v3397, %v3405
    %v3408 = vmul.f32 %v3406, %v3406
    %v3409 = vmul.f32 %v3407, %v3407
    %v3410 = vsel %vm85, %v3408, 0.0
    %3411 = vadd.xlane.f32.xlu0 %v3410
    %v3412 = vpop.xlane.xlu0 %3411
    %v3413 = vsel %vm85, %v3409, 0.0
    %3414 = vadd.xlane.f32.xlu0 %v3413
    %v3415 = vpop.xlane.xlu0 %3414
    %v3416 = vmul.f32 %v3412, %v1611
    %v3417 = vmul.f32 %v3415, %v1611
    %v3418 = vadd.f32 %v3416, 1e-05
    %v3419 = vadd.f32 %v3417, 1e-05
    %v3420 = vrsqrt.pop %v3418
    %v3421 = vrsqrt.pop %v3419
    %v3422 = vmul.f32 %v3406, %v3420
    %v3423 = vmul.f32 %v3407, %v3421
    %v3424 = vlaneseq
    %v3425 = vshrl.u32 %v3424, 7
    %v3426 = vsub.s32 2, %v3425
    %v3427 = vrot.slane %v59, %v3426
    %v3428 = vmul.f32 %v3422, %v3427
    %v3429 = vmul.f32 %v3423, %v3427
    %v3430 = vlaneseq
    %v3431 = vshrl.u32 %v3430, 7
    %v3432 = vsub.s32 3, %v3431
    %v3433 = vrot.slane %v59, %v3432
    %v3434 = vadd.f32 %v3428, %v3433
    %v3435 = vadd.f32 %v3429, %v3433
    %v3436 = vlaneseq
    %v3437 = vshrl.u32 %v3436, 7
    %v3438 = vsub.s32 4, %v3437
    %v3439 = vrot.slane %v59, %v3438
    %v3441 = vsel %vm85, %v3434, 0
    %v3444 = vsel %vm85, %v3435, 0
    %3446 = vmatprep.subr.mxu0 0.0
    %3447 = vmatpush1.msra.mxu0 %v1866
    %3448 = vmatprep.subr.mxu0 0.0
    %3449 = vmatpush1.msra.mxu0 %v1867
    %3450 = vmatprep.subr.mxu0 0.0
    %3451 = vmatpush1.msra.mxu0 %v1868
    %3452 = vmatprep.subr.mxu0 0.0
    %3453 = vmatpush1.msra.mxu0 %v1869
    %3454 = vmatprep.subr.mxu0 0.0
    %3455 = vmatpush1.msra.mxu0 0.0
    %3456 = vmatprep.subr.mxu0 0.0
    %3457 = vmatpush1.msra.mxu0 0.0
    %3458 = vmatprep.subr.mxu0 0.0
    %3459 = vmatpush1.msra.mxu0 0.0
    %3460 = vmatprep.subr.mxu0 0.0
    %3461 = vmatpush1.msra.mxu0 0.0
    %3462 = vmatprep.subr.mxu0 0.0
    %3463 = vmatpush1.msra.mxu0 0.0
    %3464 = vmatprep.subr.mxu0 0.0
    %3465 = vmatpush1.msra.mxu0 0.0
    %3466 = vmatprep.subr.mxu0 0.0
    %3467 = vmatpush1.msra.mxu0 0.0
    %3468 = vmatprep.subr.mxu0 0.0
    %3469 = vmatpush1.msra.mxu0 0.0
    %3470 = vmatprep.subr.mxu0 0.0
    %3471 = vmatpush1.msra.mxu0 0.0
    %3472 = vmatprep.subr.mxu0 0.0
    %3473 = vmatpush1.msra.mxu0 0.0
    %3474 = vmatprep.subr.mxu0 0.0
    %3475 = vmatpush1.msra.mxu0 0.0
    %3476 = vmatprep.subr.mxu0 0.0
    %3477 = vmatpush1.msra.mxu0 0.0
    %3478 = vmatprep.subr.mxu0 0.0
    %3479 = vmatpush1.msra.mxu0 0.0
    %3480 = vmatprep.subr.mxu0 0.0
    %3481 = vmatpush1.msra.mxu0 0.0
    %3482 = vmatprep.subr.mxu0 0.0
    %3483 = vmatpush1.msra.mxu0 0.0
    %3484 = vmatprep.subr.mxu0 0.0
    %3485 = vmatpush1.msra.mxu0 0.0
    %3486 = vmatprep.subr.mxu0 0.0
    %3487 = vmatpush1.msra.mxu0 0.0
    %3488 = vmatprep.subr.mxu0 0.0
    %3489 = vmatpush1.msra.mxu0 0.0
    %3490 = vmatprep.subr.mxu0 0.0
    %3491 = vmatpush1.msra.mxu0 0.0
    %3492 = vmatprep.subr.mxu0 0.0
    %3493 = vmatpush1.msra.mxu0 0.0
    %3494 = vmatprep.subr.mxu0 0.0
    %3495 = vmatpush1.msra.mxu0 0.0
    %3496 = vmatprep.subr.mxu0 0.0
    %3497 = vmatpush1.msra.mxu0 0.0
    %3498 = vmatprep.subr.mxu0 0.0
    %3499 = vmatpush1.msra.mxu0 0.0
    %3500 = vmatprep.subr.mxu0 0.0
    %3501 = vmatpush1.msra.mxu0 0.0
    %3502 = vmatprep.subr.mxu0 0.0
    %3503 = vmatpush1.msra.mxu0 0.0
    %3504 = vmatprep.subr.mxu0 0.0
    %3505 = vmatpush1.msra.mxu0 0.0
    %3506 = vmatprep.subr.mxu0 0.0
    %3507 = vmatpush1.msra.mxu0 0.0
    %3508 = vmatprep.subr.mxu0 0.0
    %3509 = vmatpush1.msra.mxu0 0.0
    %3510 = vmatprep.mubr.f32.mxu0 0.0
    %3511 = vmatmul.mubr.f32.gmra.mrb[0].mxu0 %v3441
    %v3512 = vpop.f32.mrb[0].mxu0
    %v3513 = vadd.f32 %v3439, %v3512
    %v3514 = vpop.f32.mrb[0].mxu0
    %3515 = vmatprep.mubr.f32.mxu0 0.0
    %3516 = vmatmul.mubr.f32.gmra.mrb[0].mxu0 %v3444
    %v3517 = vpop.f32.mrb[0].mxu0
    %v3518 = vadd.f32 %v3439, %v3517
    %v3519 = vpop.f32.mrb[0].mxu0
    %3520 = vdwg.mxu0
    %v3521 = vmax.f32 %v3513, 0.0
    %v3522 = vmax.f32 %v3518, 0.0
    %v3523 = vlaneseq
    %v3524 = vshrl.u32 %v3523, 7
    %v3525 = vsub.s32 5, %v3524
    %v3526 = vrot.slane %v59, %v3525
    %v3528 = vsel %vm1735, %v3521, 0
    %v3531 = vsel %vm1735, %v3522, 0
    %3533 = vmatprep.subr.mxu0 0.0
    %3534 = vmatpush1.msra.mxu0 %v1870
    %3535 = vmatprep.subr.mxu0 0.0
    %3536 = vmatpush1.msra.mxu0 %v1871
    %3537 = vmatprep.subr.mxu0 0.0
    %3538 = vmatpush1.msra.mxu0 %v1872
    %3539 = vmatprep.subr.mxu0 0.0
    %3540 = vmatpush1.msra.mxu0 %v1873
    %3541 = vmatprep.subr.mxu0 0.0
    %3542 = vmatpush1.msra.mxu0 %v1874
    %3543 = vmatprep.subr.mxu0 0.0
    %3544 = vmatpush1.msra.mxu0 %v1875
    %3545 = vmatprep.subr.mxu0 0.0
    %3546 = vmatpush1.msra.mxu0 %v1876
    %3547 = vmatprep.subr.mxu0 0.0
    %3548 = vmatpush1.msra.mxu0 %v1877
    %3549 = vmatprep.subr.mxu0 0.0
    %3550 = vmatpush1.msra.mxu0 0.0
    %3551 = vmatprep.subr.mxu0 0.0
    %3552 = vmatpush1.msra.mxu0 0.0
    %3553 = vmatprep.subr.mxu0 0.0
    %3554 = vmatpush1.msra.mxu0 0.0
    %3555 = vmatprep.subr.mxu0 0.0
    %3556 = vmatpush1.msra.mxu0 0.0
    %3557 = vmatprep.subr.mxu0 0.0
    %3558 = vmatpush1.msra.mxu0 0.0
    %3559 = vmatprep.subr.mxu0 0.0
    %3560 = vmatpush1.msra.mxu0 0.0
    %3561 = vmatprep.subr.mxu0 0.0
    %3562 = vmatpush1.msra.mxu0 0.0
    %3563 = vmatprep.subr.mxu0 0.0
    %3564 = vmatpush1.msra.mxu0 0.0
    %3565 = vmatprep.subr.mxu0 0.0
    %3566 = vmatpush1.msra.mxu0 0.0
    %3567 = vmatprep.subr.mxu0 0.0
    %3568 = vmatpush1.msra.mxu0 0.0
    %3569 = vmatprep.subr.mxu0 0.0
    %3570 = vmatpush1.msra.mxu0 0.0
    %3571 = vmatprep.subr.mxu0 0.0
    %3572 = vmatpush1.msra.mxu0 0.0
    %3573 = vmatprep.subr.mxu0 0.0
    %3574 = vmatpush1.msra.mxu0 0.0
    %3575 = vmatprep.subr.mxu0 0.0
    %3576 = vmatpush1.msra.mxu0 0.0
    %3577 = vmatprep.subr.mxu0 0.0
    %3578 = vmatpush1.msra.mxu0 0.0
    %3579 = vmatprep.subr.mxu0 0.0
    %3580 = vmatpush1.msra.mxu0 0.0
    %3581 = vmatprep.subr.mxu0 0.0
    %3582 = vmatpush1.msra.mxu0 0.0
    %3583 = vmatprep.subr.mxu0 0.0
    %3584 = vmatpush1.msra.mxu0 0.0
    %3585 = vmatprep.subr.mxu0 0.0
    %3586 = vmatpush1.msra.mxu0 0.0
    %3587 = vmatprep.subr.mxu0 0.0
    %3588 = vmatpush1.msra.mxu0 0.0
    %3589 = vmatprep.subr.mxu0 0.0
    %3590 = vmatpush1.msra.mxu0 0.0
    %3591 = vmatprep.subr.mxu0 0.0
    %3592 = vmatpush1.msra.mxu0 0.0
    %3593 = vmatprep.subr.mxu0 0.0
    %3594 = vmatpush1.msra.mxu0 0.0
    %3595 = vmatprep.subr.mxu0 0.0
    %3596 = vmatpush1.msra.mxu0 0.0
    %3597 = vmatprep.mubr.f32.mxu0 0.0
    %3598 = vmatmul.mubr.f32.gmra.mrb[0].mxu0 %v3528
    %v3599 = vpop.f32.mrb[0].mxu0
    %v3600 = vadd.f32 %v3526, %v3599
    %v3601 = vpop.f32.mrb[0].mxu0
    %3602 = vmatprep.mubr.f32.mxu0 0.0
    %3603 = vmatmul.mubr.f32.gmra.mrb[0].mxu0 %v3531
    %v3604 = vpop.f32.mrb[0].mxu0
    %v3605 = vadd.f32 %v3526, %v3604
    %v3606 = vpop.f32.mrb[0].mxu0
    %3607 = vdwg.mxu0
    %v3608 = vadd.f32 %v3434, %v3600
    %v3609 = vadd.f32 %v3435, %v3605
    %v3610 = vsel %vm85, %v3608, 0.0
    %3611 = vadd.xlane.f32.xlu0 %v3610
    %v3612 = vpop.xlane.xlu0 %3611
    %v3613 = vsel %vm85, %v3609, 0.0
    %3614 = vadd.xlane.f32.xlu0 %v3613
    %v3615 = vpop.xlane.xlu0 %3614
    %v3616 = vmul.f32 %v3612, %v1611
    %v3617 = vmul.f32 %v3615, %v1611
    %v3618 = vsub.f32 %v3608, %v3616
    %v3619 = vsub.f32 %v3609, %v3617
    %v3620 = vmul.f32 %v3618, %v3618
    %v3621 = vmul.f32 %v3619, %v3619
    %v3622 = vsel %vm85, %v3620, 0.0
    %3623 = vadd.xlane.f32.xlu0 %v3622
    %v3624 = vpop.xlane.xlu0 %3623
    %v3625 = vsel %vm85, %v3621, 0.0
    %3626 = vadd.xlane.f32.xlu0 %v3625
    %v3627 = vpop.xlane.xlu0 %3626
    %v3628 = vmul.f32 %v3624, %v1611
    %v3629 = vmul.f32 %v3627, %v1611
    %v3630 = vadd.f32 %v3628, 1e-05
    %v3631 = vadd.f32 %v3629, 1e-05
    %v3632 = vrsqrt.pop %v3630
    %v3633 = vrsqrt.pop %v3631
    %v3634 = vmul.f32 %v3618, %v3632
    %v3635 = vmul.f32 %v3619, %v3633
    %v3636 = vlaneseq
    %v3637 = vshrl.u32 %v3636, 7
    %v3638 = vsub.s32 6, %v3637
    %v3639 = vrot.slane %v59, %v3638
    %v3640 = vmul.f32 %v3634, %v3639
    %v3641 = vmul.f32 %v3635, %v3639
    %v3642 = vlaneseq
    %v3643 = vshrl.u32 %v3642, 7
    %v3644 = vsub.s32 7, %v3643
    %v3645 = vrot.slane %v59, %v3644
    %v3646 = vadd.f32 %v3640, %v3645
    %v3647 = vadd.f32 %v3641, %v3645
    %v3648 = vsel %vm85, %v3646, 0.0
    %3649 = vadd.xlane.f32.xlu0 %v3648
    %v3650 = vpop.xlane.xlu0 %3649
    %v3651 = vsel %vm85, %v3647, 0.0
    %3652 = vadd.xlane.f32.xlu0 %v3651
    %v3653 = vpop.xlane.xlu0 %3652
    %v3654 = vmul.f32 %v3650, %v1611
    %v3655 = vmul.f32 %v3653, %v1611
    %v3656 = vsub.f32 %v3646, %v3654
    %v3657 = vsub.f32 %v3647, %v3655
    %v3658 = vmul.f32 %v3656, %v3656
    %v3659 = vmul.f32 %v3657, %v3657
    %v3660 = vsel %vm85, %v3658, 0.0
    %3661 = vadd.xlane.f32.xlu0 %v3660
    %v3662 = vpop.xlane.xlu0 %3661
    %v3663 = vsel %vm85, %v3659, 0.0
    %3664 = vadd.xlane.f32.xlu0 %v3663
    %v3665 = vpop.xlane.xlu0 %3664
    %v3666 = vmul.f32 %v3662, %v1611
    %v3667 = vmul.f32 %v3665, %v1611
    %v3668 = vadd.f32 %v3666, 1e-05
    %v3669 = vadd.f32 %v3667, 1e-05
    %v3670 = vrsqrt.pop %v3668
    %v3671 = vrsqrt.pop %v3669
    %v3672 = vmul.f32 %v3656, %v3670
    %v3673 = vmul.f32 %v3657, %v3671
    %v3674 = vlaneseq
    %v3675 = vshrl.u32 %v3674, 7
    %v3676 = vsub.s32 0, %v3675
    %v3677 = vrot.slane %v60, %v3676
    %v3678 = vmul.f32 %v3672, %v3677
    %v3679 = vmul.f32 %v3673, %v3677
    %v3680 = vlaneseq
    %v3681 = vshrl.u32 %v3680, 7
    %v3682 = vsub.s32 1, %v3681
    %v3683 = vrot.slane %v60, %v3682
    %v3684 = vadd.f32 %v3678, %v3683
    %v3685 = vadd.f32 %v3679, %v3683
    %3686 = vst.msk [vmem:[#allocation8] sm:$0xff] %vm85, %v3684
    %3687 = vst.msk [vmem:[#allocation8 + $0x8] sm:$0xff] %vm85, %v3685
    // Predicated region
    $region26: #{tpu_custom_call.1} parent=1 // pred_check
      _
    $region27: #{tpu_custom_call.1} parent=1 // pred_check_branch
      %3689 = sbr.rel (0) target = $region29
    $region28: #{tpu_custom_call.1} parent=1 // pred_region
      %s3691 = ssub.s32 256, 256
      %3692 = vsyncadd [#allocation4], %s3691
      %s3693 = sshll.u32 [#allocation8], 4
      %s3694 = int_to_ptr.vmem [resolvable:$true] %s3693
      %3699 = dma.vmem_to_hbm [thread:$0]  %s3694, 256, %s3, [#allocation4], 128, 128, 8
    $region29: #{tpu_custom_call.1} parent=1 // pred_fallthru
      _
    // Predicated region
    $region30: #{tpu_custom_call.1} parent=1 // pred_check
      _
    $region31: #{tpu_custom_call.1} parent=1 // pred_check_branch
      %3701 = sbr.rel (0) target = $region33
    $region32: #{tpu_custom_call.1} parent=1 // pred_region
      %3702 = dma.done [#allocation4], 256
    $region33: #{tpu_custom_call.1} parent=1 // pred_fallthru
      _
    %3703 = vsyncpa [#allocation3], 1
    %3704 = vsyncpa [#allocation6], 1
    %3705 = vsyncpa [#allocation4], 1

</llo_original>
